<compile_context>
chip_gen: v7x
topology: tpu7x:2x2x1
jax: 0.10.0
libtpu: 0.0.40
codegen_flags: <defaults>
</compile_context>

<pallas_src>
import jax
import jax.numpy as jnp
from jax.experimental import pallas as pl
from jax.experimental.pallas import tpu as pltpu

# ------------------------- model hyper-parameters (small) -------------------------
B = 2          # batch
S = 8          # sequence length
H = 32         # hidden size
NH = 2         # attention heads
HD = H // NH   # head dim
F = 64         # FFN intermediate size
VOCAB = 64     # vocab size
LAYERS = 2     # transformer layers
NL = 2         # num_labels of the classification head
PAD_ID = 1     # RoBERTa pad token id -> attention_mask = input_ids != 1


def _layer_norm(x, g, b, eps=1e-12):
    mu = jnp.mean(x, axis=-1, keepdims=True)
    var = jnp.mean((x - mu) ** 2, axis=-1, keepdims=True)
    return (x - mu) * jax.lax.rsqrt(var + eps) * g + b


# ------------------------------- fused Pallas kernel -------------------------------
def fused_bert_kernel(ids_col_ref, ids_row_ref,
                      word_ref, pos_ref, type_ref, emb_g_ref, emb_b_ref,
                      wqkv_ref, bqkv_ref, wo_ref, bo_ref, ln1g_ref, ln1b_ref,
                      wi_ref, bi_ref, wo2_ref, bo2_ref, ln2g_ref, ln2b_ref,
                      dw_ref, db_ref, ow_ref, ob_ref, labels_ref,
                      prob_ref, loss_ref):
    # One grid step == one sequence (batch axis is "parallel": both sequences run
    # on the two TensorCores of v7x; plain sequential grid on v5e/v6e).

    # ---- fused embedding lookup: one-hot @ table on the MXU (no XLA gather) ----
    ids_col = ids_col_ref[0]                                    # (S, 1) int32
    vocab_iota = jax.lax.broadcasted_iota(jnp.int32, (S, VOCAB), 1)
    onehot = jnp.where(ids_col == vocab_iota, 1.0, 0.0).astype(jnp.bfloat16)
    x = jnp.dot(onehot, word_ref[...], preferred_element_type=jnp.float32)
    x = x + pos_ref[...] + type_ref[...]                        # (S, H) f32
    x = _layer_norm(x, emb_g_ref[...], emb_b_ref[...])

    # ---- additive attention mask from ids, computed ONCE (layer-invariant) ----
    ids_row = ids_row_ref[0]                                    # (1, S) int32
    attn_bias = jnp.where(ids_row == PAD_ID, -1e9, 0.0).reshape(1, 1, S)

    def layer_body(l, x2d):
        # fused QKV: one (S,H)@(H,3H) MXU push, bf16 operands, f32 accumulate.
        # The 1/sqrt(HD) attention scale is pre-folded into the Q columns at init.
        qkv = (jnp.dot(x2d.astype(jnp.bfloat16), wqkv_ref[l],
                       preferred_element_type=jnp.float32) + bqkv_ref[l])
        qkv = qkv.astype(jnp.bfloat16)                          # (S, 3H)

        # head-major (NH, S, HD) operands -> ONE batched contraction for scores
        # and ONE for context (replaces the per-head python loop).
        q = jnp.stack([qkv[:, h * HD:(h + 1) * HD] for h in range(NH)], 0)
        k = jnp.stack([qkv[:, H + h * HD:H + (h + 1) * HD] for h in range(NH)], 0)
        v = jnp.stack([qkv[:, 2 * H + h * HD:2 * H + (h + 1) * HD]
                       for h in range(NH)], 0)

        scores = jnp.einsum('hqd,hkd->hqk', q, k,
                            preferred_element_type=jnp.float32) + attn_bias
        m = jnp.max(scores, axis=-1, keepdims=True)             # f32 softmax stats
        p = jnp.exp(scores - m)
        attn = p * pl.reciprocal(jnp.sum(p, axis=-1, keepdims=True), approx=True)
        ctx = jnp.einsum('hqk,hkd->hqd', attn.astype(jnp.bfloat16), v,
                         preferred_element_type=jnp.float32)    # (NH, S, HD)

        # heads are lane-contiguous after the concat (2*HD = 32 lanes) -> single
        # output projection; no zeros accumulator, no per-head Wo row slices.
        ctx_cat = jnp.concatenate([ctx[h] for h in range(NH)], axis=-1)  # (S, H)
        attn_out = jnp.dot(ctx_cat.astype(jnp.bfloat16), wo_ref[l],
                           preferred_element_type=jnp.float32) + bo_ref[l]
        h1 = _layer_norm(x2d + attn_out, ln1g_ref[l], ln1b_ref[l])

        # --- feed-forward ---
        ff = jnp.dot(h1.astype(jnp.bfloat16), wi_ref[l],
                     preferred_element_type=jnp.float32) + bi_ref[l]
        ff = jax.nn.gelu(ff, approximate=True)  # TODO(synk): HF default is exact erf GELU
        ff = jnp.dot(ff.astype(jnp.bfloat16), wo2_ref[l],
                     preferred_element_type=jnp.float32) + bo2_ref[l]
        return _layer_norm(h1 + ff, ln2g_ref[l], ln2b_ref[l])

    x = jax.lax.fori_loop(0, LAYERS, layer_body, x, unroll=True)

    # ---- RoBERTa classification head on the <s>/CLS token of this sequence ----
    cls = x[0:1, :]                                             # (1, H)
    hdn = jnp.tanh(jnp.dot(cls.astype(jnp.bfloat16), dw_ref[...],
                           preferred_element_type=jnp.float32) + db_ref[...])
    logits = jnp.dot(hdn.astype(jnp.bfloat16), ow_ref[...],
                     preferred_element_type=jnp.float32) + ob_ref[...]
    prob = jax.nn.sigmoid(logits)                               # (1, NL)
    prob_ref[0] = prob

    # per-example BCE term; the batch mean is a tiny reduce in the wrapper because
    # the batch grid axis is "parallel" (no cross-core scalar accumulation).
    y = labels_ref[0]                                           # (1, 1) f32
    p0 = prob[:, 0:1]
    loss_ref[0] = (jnp.log(p0 + 1e-10) * y
                   + jnp.log(1.0 - p0 + 1e-10) * (1.0 - y))


# ------------------------------- wrapper --------------------------------------------
def _full_spec(shape):
    # whole-array block, identical for every grid step (weights / tables)
    return pl.BlockSpec(tuple(shape), lambda b, _z=(0,) * len(shape): _z)


def _batch_spec(tail):
    # block (1, *tail) of an array shaped (B, *tail), indexed by the batch grid axis
    return pl.BlockSpec((1,) + tuple(tail),
                        lambda b, _n=len(tail): (b,) + (0,) * _n)


def _fused_forward(input_ids, labels_b11, params):
    # wrapper-side layout plumbing only (free): ids in column/row form, CLS-type row
    ids_col = input_ids.reshape(B, S, 1)
    ids_row = input_ids.reshape(B, 1, S)
    type_row = params['type_emb'][0:1]                          # (1, H)

    args = (ids_col, ids_row,
            params['word_emb'], params['pos_emb'], type_row,
            params['emb_ln_g'], params['emb_ln_b'],
            params['wqkv'], params['bqkv'], params['wo'], params['bo'],
            params['ln1_g'], params['ln1_b'],
            params['w_in'], params['b_in'], params['w_out'], params['b_out'],
            params['ln2_g'], params['ln2_b'],
            params['cls_dense_w'], params['cls_dense_b'],
            params['cls_out_w'], params['cls_out_b'],
            labels_b11)

    in_specs = [
        _batch_spec((S, 1)), _batch_spec((1, S)),               # ids (col / row)
        _full_spec((VOCAB, H)), _full_spec((S, H)), _full_spec((1, H)),
        _full_spec((1, H)), _full_spec((1, H)),                 # emb LN g, b
        _full_spec((LAYERS, H, 3 * H)), _full_spec((LAYERS, 1, 3 * H)),
        _full_spec((LAYERS, H, H)), _full_spec((LAYERS, 1, H)),
        _full_spec((LAYERS, 1, H)), _full_spec((LAYERS, 1, H)),
        _full_spec((LAYERS, H, F)), _full_spec((LAYERS, 1, F)),
        _full_spec((LAYERS, F, H)), _full_spec((LAYERS, 1, H)),
        _full_spec((LAYERS, 1, H)), _full_spec((LAYERS, 1, H)),
        _full_spec((H, H)), _full_spec((1, H)),                 # cls dense
        _full_spec((H, NL)), _full_spec((1, NL)),               # cls out proj
        _batch_spec((1, 1)),                                    # labels
    ]

    prob3, loss3 = pl.pallas_call(
        fused_bert_kernel,
        out_shape=(jax.ShapeDtypeStruct((B, 1, NL), jnp.float32),
                   jax.ShapeDtypeStruct((B, 1, 1), jnp.float32)),
        grid=(B,),
        in_specs=in_specs,
        out_specs=(_batch_spec((1, NL)), _batch_spec((1, 1))),
        compiler_params=pltpu.CompilerParams(
            dimension_semantics=("parallel",)),                 # 2 TCs on v7x
    )(*args)
    return prob3.reshape(B, NL), loss3


def bert_defect_forward(params, input_ids, labels=None):
    """Mirrors BertModel.forward: returns (loss, prob) if labels given else prob."""
    if labels is None:
        dummy = jnp.zeros((B, 1, 1), jnp.float32)
        prob, _ = _fused_forward(input_ids, dummy, params)
        return prob
    lbl = labels.reshape(B, 1, 1).astype(jnp.float32)
    prob, loss_terms = _fused_forward(input_ids, lbl, params)
    loss = -jnp.sum(loss_terms) / jnp.float32(B)                # batch mean
    return loss, prob


# ------------------------------- parameters ----------------------------------------
def init_params(key):
    keys = iter(jax.random.split(key, 16))

    def w(shape, scale=0.02):
        return scale * jax.random.normal(next(keys), shape, jnp.float32)

    bf16 = jnp.bfloat16
    wqkv = w((LAYERS, H, 3 * H))
    # fold the 1/sqrt(HD) attention scale into the Q columns (exact + free)
    wqkv = wqkv.at[:, :, :H].multiply(1.0 / (HD ** 0.5))

    return dict(
        # matmul weights stored in bf16 (f32 accumulation in-kernel)
        word_emb=w((VOCAB, H)).astype(bf16),
        pos_emb=w((S, H)),   # TODO(synk): RoBERTa pad-aware position ids not modeled
        type_emb=w((2, H)),
        emb_ln_g=jnp.ones((1, H), jnp.float32),
        emb_ln_b=jnp.zeros((1, H), jnp.float32),
        wqkv=wqkv.astype(bf16),
        bqkv=jnp.zeros((LAYERS, 1, 3 * H), jnp.float32),  # Q part would need the same scale if nonzero
        wo=w((LAYERS, H, H)).astype(bf16),
        bo=jnp.zeros((LAYERS, 1, H), jnp.float32),
        ln1_g=jnp.ones((LAYERS, 1, H), jnp.float32),
        ln1_b=jnp.zeros((LAYERS, 1, H), jnp.float32),
        w_in=w((LAYERS, H, F)).astype(bf16),
        b_in=jnp.zeros((LAYERS, 1, F), jnp.float32),
        w_out=w((LAYERS, F, H)).astype(bf16),
        b_out=jnp.zeros((LAYERS, 1, H), jnp.float32),
        ln2_g=jnp.ones((LAYERS, 1, H), jnp.float32),
        ln2_b=jnp.zeros((LAYERS, 1, H), jnp.float32),
        cls_dense_w=w((H, H)).astype(bf16),
        cls_dense_b=jnp.zeros((1, H), jnp.float32),
        cls_out_w=w((H, NL)).astype(bf16),
        cls_out_b=jnp.zeros((1, NL), jnp.float32),
    )


# ------------------------------- main -----------------------------------------------
if __name__ == "__main__":
    key = jax.random.PRNGKey(0)
    pkey, ikey = jax.random.split(key)
    params = init_params(pkey)

    input_ids = jax.random.randint(ikey, (B, S), 2, VOCAB, dtype=jnp.int32)
    input_ids = input_ids.at[0, 6:].set(PAD_ID)       # some padding to exercise the mask
    labels = jnp.array([0.0, 1.0], jnp.float32)       # (B,)

    fwd = jax.jit(lambda p, ids, lbl: bert_defect_forward(p, ids, lbl))
    loss, prob = fwd(params, input_ids, labels)
    jax.block_until_ready((loss, prob))

    prob_only = jax.jit(lambda p, ids: bert_defect_forward(p, ids, None))(params, input_ids)
    jax.block_until_ready(prob_only)

    assert prob.shape == (B, NL) and loss.shape == ()
    assert prob_only.shape == (B, NL)
    assert bool(jnp.isfinite(loss)) and bool(jnp.all(jnp.isfinite(prob)))
    print("KERNEL_OK")
</pallas_src>

<mosaic_0001>
module attributes {stable_mosaic.version = 11 : i64} {
  func.func @fused_bert_kernel(%arg0: i32, %arg1: memref<1x8x1xi32, #tpu.memory_space<vmem>>, %arg2: memref<1x1x8xi32, #tpu.memory_space<vmem>>, %arg3: memref<64x32xbf16, #tpu.memory_space<vmem>>, %arg4: memref<8x32xf32, #tpu.memory_space<vmem>>, %arg5: memref<1x32xf32, #tpu.memory_space<vmem>>, %arg6: memref<1x32xf32, #tpu.memory_space<vmem>>, %arg7: memref<1x32xf32, #tpu.memory_space<vmem>>, %arg8: memref<2x32x96xbf16, #tpu.memory_space<vmem>>, %arg9: memref<2x1x96xf32, #tpu.memory_space<vmem>>, %arg10: memref<2x32x32xbf16, #tpu.memory_space<vmem>>, %arg11: memref<2x1x32xf32, #tpu.memory_space<vmem>>, %arg12: memref<2x1x32xf32, #tpu.memory_space<vmem>>, %arg13: memref<2x1x32xf32, #tpu.memory_space<vmem>>, %arg14: memref<2x32x64xbf16, #tpu.memory_space<vmem>>, %arg15: memref<2x1x64xf32, #tpu.memory_space<vmem>>, %arg16: memref<2x64x32xbf16, #tpu.memory_space<vmem>>, %arg17: memref<2x1x32xf32, #tpu.memory_space<vmem>>, %arg18: memref<2x1x32xf32, #tpu.memory_space<vmem>>, %arg19: memref<2x1x32xf32, #tpu.memory_space<vmem>>, %arg20: memref<32x32xbf16, #tpu.memory_space<vmem>>, %arg21: memref<1x32xf32, #tpu.memory_space<vmem>>, %arg22: memref<32x2xbf16, #tpu.memory_space<vmem>>, %arg23: memref<1x2xf32, #tpu.memory_space<vmem>>, %arg24: memref<1x1x1xf32, #tpu.memory_space<vmem>>, %arg25: memref<1x1x2xf32, #tpu.memory_space<vmem>>, %arg26: memref<1x1x1xf32, #tpu.memory_space<vmem>>) attributes {dimension_semantics = [#tpu.dimension_semantics<parallel>], iteration_bounds = array<i64: 2>, scalar_prefetch = 0 : i64, scratch_operands = 0 : i64, tpu.core_type = #tpu.core_type<tc>, window_params = [{transform_indices = @transform_0, window_bounds = array<i64: 1, 8, 1>}, {transform_indices = @transform_1, window_bounds = array<i64: 1, 1, 8>}, {pipeline_mode = #tpu.pipeline_mode<synchronous>, transform_indices = @transform_2, window_bounds = array<i64: 64, 32>}, {pipeline_mode = #tpu.pipeline_mode<synchronous>, transform_indices = @transform_3, window_bounds = array<i64: 8, 32>}, {pipeline_mode = #tpu.pipeline_mode<synchronous>, transform_indices = @transform_4, window_bounds = array<i64: 1, 32>}, {pipeline_mode = #tpu.pipeline_mode<synchronous>, transform_indices = @transform_5, window_bounds = array<i64: 1, 32>}, {pipeline_mode = #tpu.pipeline_mode<synchronous>, transform_indices = @transform_6, window_bounds = array<i64: 1, 32>}, {pipeline_mode = #tpu.pipeline_mode<synchronous>, transform_indices = @transform_7, window_bounds = array<i64: 2, 32, 96>}, {pipeline_mode = #tpu.pipeline_mode<synchronous>, transform_indices = @transform_8, window_bounds = array<i64: 2, 1, 96>}, {pipeline_mode = #tpu.pipeline_mode<synchronous>, transform_indices = @transform_9, window_bounds = array<i64: 2, 32, 32>}, {pipeline_mode = #tpu.pipeline_mode<synchronous>, transform_indices = @transform_10, window_bounds = array<i64: 2, 1, 32>}, {pipeline_mode = #tpu.pipeline_mode<synchronous>, transform_indices = @transform_11, window_bounds = array<i64: 2, 1, 32>}, {pipeline_mode = #tpu.pipeline_mode<synchronous>, transform_indices = @transform_12, window_bounds = array<i64: 2, 1, 32>}, {pipeline_mode = #tpu.pipeline_mode<synchronous>, transform_indices = @transform_13, window_bounds = array<i64: 2, 32, 64>}, {pipeline_mode = #tpu.pipeline_mode<synchronous>, transform_indices = @transform_14, window_bounds = array<i64: 2, 1, 64>}, {pipeline_mode = #tpu.pipeline_mode<synchronous>, transform_indices = @transform_15, window_bounds = array<i64: 2, 64, 32>}, {pipeline_mode = #tpu.pipeline_mode<synchronous>, transform_indices = @transform_16, window_bounds = array<i64: 2, 1, 32>}, {pipeline_mode = #tpu.pipeline_mode<synchronous>, transform_indices = @transform_17, window_bounds = array<i64: 2, 1, 32>}, {pipeline_mode = #tpu.pipeline_mode<synchronous>, transform_indices = @transform_18, window_bounds = array<i64: 2, 1, 32>}, {pipeline_mode = #tpu.pipeline_mode<synchronous>, transform_indices = @transform_19, window_bounds = array<i64: 32, 32>}, {pipeline_mode = #tpu.pipeline_mode<synchronous>, transform_indices = @transform_20, window_bounds = array<i64: 1, 32>}, {pipeline_mode = #tpu.pipeline_mode<synchronous>, transform_indices = @transform_21, window_bounds = array<i64: 32, 2>}, {pipeline_mode = #tpu.pipeline_mode<synchronous>, transform_indices = @transform_22, window_bounds = array<i64: 1, 2>}, {transform_indices = @transform_23, window_bounds = array<i64: 1, 1, 1>}, {transform_indices = @transform_24, window_bounds = array<i64: 1, 1, 2>}, {transform_indices = @transform_25, window_bounds = array<i64: 1, 1, 1>}]} {
    %c0 = arith.constant 0 : index
    %c0_0 = arith.constant 0 : index
    %c0_1 = arith.constant 0 : index
    %0 = vector.load %arg1[%c0, %c0_0, %c0_1] : memref<1x8x1xi32, #tpu.memory_space<vmem>>, vector<1x8x1xi32>
    %1 = vector.shape_cast %0 : vector<1x8x1xi32> to vector<8x1xi32>
    %2 = tpu.iota {dimensions = array<i32: 1>} : vector<8x64xi32>
    %3 = vector.broadcast %1 : vector<8x1xi32> to vector<8x64xi32>
    %4 = arith.cmpi eq, %3, %2 : vector<8x64xi32>
    %cst = arith.constant 1.000000e+00 : f32
    %cst_2 = arith.constant 0.000000e+00 : f32
    %5 = vector.broadcast %cst : f32 to vector<8x64xf32>
    %6 = vector.broadcast %cst_2 : f32 to vector<8x64xf32>
    %7 = arith.select %4, %5, %6 : vector<8x64xi1>, vector<8x64xf32>
    %8 = arith.truncf %7 : vector<8x64xf32> to vector<8x64xbf16>
    %c0_3 = arith.constant 0 : index
    %c0_4 = arith.constant 0 : index
    %9 = vector.load %arg3[%c0_3, %c0_4] : memref<64x32xbf16, #tpu.memory_space<vmem>>, vector<64x32xbf16>
    %cst_5 = arith.constant dense<0.000000e+00> : vector<8x32xf32>
    %10 = tpu.matmul %8, %9, %cst_5 {dimension_numbers = #tpu.dot_dimension_numbers<[1], [0], [0], [1], [0, 0, 1, 1], [], []>} : vector<8x64xbf16>, vector<64x32xbf16>, vector<8x32xf32> -> vector<8x32xf32>
    %c0_6 = arith.constant 0 : index
    %c0_7 = arith.constant 0 : index
    %11 = vector.load %arg4[%c0_6, %c0_7] : memref<8x32xf32, #tpu.memory_space<vmem>>, vector<8x32xf32>
    %12 = arith.addf %10, %11 : vector<8x32xf32>
    %c0_8 = arith.constant 0 : index
    %c0_9 = arith.constant 0 : index
    %13 = vector.load %arg5[%c0_8, %c0_9] : memref<1x32xf32, #tpu.memory_space<vmem>>, vector<1x32xf32>
    %14 = vector.broadcast %13 : vector<1x32xf32> to vector<8x32xf32>
    %15 = arith.addf %12, %14 : vector<8x32xf32>
    %c0_10 = arith.constant 0 : index
    %c0_11 = arith.constant 0 : index
    %16 = vector.load %arg6[%c0_10, %c0_11] : memref<1x32xf32, #tpu.memory_space<vmem>>, vector<1x32xf32>
    %c0_12 = arith.constant 0 : index
    %c0_13 = arith.constant 0 : index
    %17 = vector.load %arg7[%c0_12, %c0_13] : memref<1x32xf32, #tpu.memory_space<vmem>>, vector<1x32xf32>
    %cst_14 = arith.constant dense<0.000000e+00> : vector<8xf32>
    %18 = vector.multi_reduction <add>, %15, %cst_14 [1] : vector<8x32xf32> to vector<8xf32>
    %19 = vector.shape_cast %18 : vector<8xf32> to vector<8x1xf32>
    %cst_15 = arith.constant 3.200000e+01 : f32
    %20 = vector.broadcast %cst_15 : f32 to vector<8x1xf32>
    %21 = arith.divf %19, %20 : vector<8x1xf32>
    %22 = vector.broadcast %21 : vector<8x1xf32> to vector<8x32xf32>
    %23 = arith.subf %15, %22 : vector<8x32xf32>
    %24 = arith.mulf %23, %23 : vector<8x32xf32>
    %cst_16 = arith.constant dense<0.000000e+00> : vector<8xf32>
    %25 = vector.multi_reduction <add>, %24, %cst_16 [1] : vector<8x32xf32> to vector<8xf32>
    %26 = vector.shape_cast %25 : vector<8xf32> to vector<8x1xf32>
    %cst_17 = arith.constant 3.200000e+01 : f32
    %27 = vector.broadcast %cst_17 : f32 to vector<8x1xf32>
    %28 = arith.divf %26, %27 : vector<8x1xf32>
    %29 = vector.broadcast %21 : vector<8x1xf32> to vector<8x32xf32>
    %30 = arith.subf %15, %29 : vector<8x32xf32>
    %cst_18 = arith.constant 9.99999996E-13 : f32
    %31 = vector.broadcast %cst_18 : f32 to vector<8x1xf32>
    %32 = arith.addf %28, %31 : vector<8x1xf32>
    %33 = math.rsqrt %32 : vector<8x1xf32>
    %34 = vector.broadcast %33 : vector<8x1xf32> to vector<8x32xf32>
    %35 = arith.mulf %30, %34 : vector<8x32xf32>
    %36 = vector.broadcast %16 : vector<1x32xf32> to vector<8x32xf32>
    %37 = arith.mulf %35, %36 : vector<8x32xf32>
    %38 = vector.broadcast %17 : vector<1x32xf32> to vector<8x32xf32>
    %39 = arith.addf %37, %38 : vector<8x32xf32>
    %c0_19 = arith.constant 0 : index
    %c0_20 = arith.constant 0 : index
    %c0_21 = arith.constant 0 : index
    %40 = vector.load %arg2[%c0_19, %c0_20, %c0_21] : memref<1x1x8xi32, #tpu.memory_space<vmem>>, vector<1x1x8xi32>
    %41 = vector.shape_cast %40 : vector<1x1x8xi32> to vector<1x8xi32>
    %c1_i32 = arith.constant 1 : i32
    %42 = vector.broadcast %c1_i32 : i32 to vector<1x8xi32>
    %43 = arith.cmpi eq, %41, %42 : vector<1x8xi32>
    %cst_22 = arith.constant -1.000000e+09 : f32
    %cst_23 = arith.constant 0.000000e+00 : f32
    %44 = vector.broadcast %cst_22 : f32 to vector<1x8xf32>
    %45 = vector.broadcast %cst_23 : f32 to vector<1x8xf32>
    %46 = arith.select %43, %44, %45 : vector<1x8xi1>, vector<1x8xf32>
    %47 = vector.shape_cast %46 : vector<1x8xf32> to vector<1x1x8xf32>
    %c0_i32 = arith.constant 0 : i32
    %48 = arith.truncf %39 : vector<8x32xf32> to vector<8x32xbf16>
    %49 = arith.index_cast %c0_i32 : i32 to index
    %c0_24 = arith.constant 0 : index
    %c0_25 = arith.constant 0 : index
    %50 = vector.load %arg8[%49, %c0_24, %c0_25] : memref<2x32x96xbf16, #tpu.memory_space<vmem>>, vector<1x32x96xbf16>
    %51 = vector.shape_cast %50 : vector<1x32x96xbf16> to vector<32x96xbf16>
    %cst_26 = arith.constant dense<0.000000e+00> : vector<8x96xf32>
    %52 = tpu.matmul %48, %51, %cst_26 {dimension_numbers = #tpu.dot_dimension_numbers<[1], [0], [0], [1], [0, 0, 1, 1], [], []>} : vector<8x32xbf16>, vector<32x96xbf16>, vector<8x96xf32> -> vector<8x96xf32>
    %53 = arith.index_cast %c0_i32 : i32 to index
    %c0_27 = arith.constant 0 : index
    %c0_28 = arith.constant 0 : index
    %54 = vector.load %arg9[%53, %c0_27, %c0_28] : memref<2x1x96xf32, #tpu.memory_space<vmem>>, vector<1x1x96xf32>
    %55 = vector.shape_cast %54 : vector<1x1x96xf32> to vector<1x96xf32>
    %56 = vector.broadcast %55 : vector<1x96xf32> to vector<8x96xf32>
    %57 = arith.addf %52, %56 : vector<8x96xf32>
    %58 = arith.truncf %57 : vector<8x96xf32> to vector<8x96xbf16>
    %59 = vector.extract_strided_slice %58 {offsets = [0, 0], sizes = [8, 16], strides = [1, 1]} : vector<8x96xbf16> to vector<8x16xbf16>
    %60 = vector.extract_strided_slice %58 {offsets = [0, 16], sizes = [8, 16], strides = [1, 1]} : vector<8x96xbf16> to vector<8x16xbf16>
    %61 = vector.shape_cast %59 : vector<8x16xbf16> to vector<1x8x16xbf16>
    %62 = vector.shape_cast %60 : vector<8x16xbf16> to vector<1x8x16xbf16>
    %63 = tpu.concatenate %61, %62 in 0 : vector<1x8x16xbf16>, vector<1x8x16xbf16> -> vector<2x8x16xbf16>
    %64 = vector.extract_strided_slice %58 {offsets = [0, 32], sizes = [8, 16], strides = [1, 1]} : vector<8x96xbf16> to vector<8x16xbf16>
    %65 = vector.extract_strided_slice %58 {offsets = [0, 48], sizes = [8, 16], strides = [1, 1]} : vector<8x96xbf16> to vector<8x16xbf16>
    %66 = vector.shape_cast %64 : vector<8x16xbf16> to vector<1x8x16xbf16>
    %67 = vector.shape_cast %65 : vector<8x16xbf16> to vector<1x8x16xbf16>
    %68 = tpu.concatenate %66, %67 in 0 : vector<1x8x16xbf16>, vector<1x8x16xbf16> -> vector<2x8x16xbf16>
    %69 = vector.extract_strided_slice %58 {offsets = [0, 64], sizes = [8, 16], strides = [1, 1]} : vector<8x96xbf16> to vector<8x16xbf16>
    %70 = vector.extract_strided_slice %58 {offsets = [0, 80], sizes = [8, 16], strides = [1, 1]} : vector<8x96xbf16> to vector<8x16xbf16>
    %71 = vector.shape_cast %69 : vector<8x16xbf16> to vector<1x8x16xbf16>
    %72 = vector.shape_cast %70 : vector<8x16xbf16> to vector<1x8x16xbf16>
    %73 = tpu.concatenate %71, %72 in 0 : vector<1x8x16xbf16>, vector<1x8x16xbf16> -> vector<2x8x16xbf16>
    "tpu.trace_start"() <{level = 10 : i32, message = "hqd,hkd->hqk"}> : () -> ()
    %cst_29 = arith.constant dense<0.000000e+00> : vector<2x8x8xf32>
    %74 = tpu.matmul %63, %68, %cst_29 {dimension_numbers = #tpu.dot_dimension_numbers<[2], [2], [1], [1], [0, 0, 0, 1, 1, 1], [0], [0]>} : vector<2x8x16xbf16>, vector<2x8x16xbf16>, vector<2x8x8xf32> -> vector<2x8x8xf32>
    "tpu.trace_stop"() : () -> ()
    %75 = vector.broadcast %47 : vector<1x1x8xf32> to vector<2x8x8xf32>
    %76 = arith.addf %74, %75 : vector<2x8x8xf32>
    %cst_30 = arith.constant dense<0xFF800000> : vector<2x8xf32>
    %77 = vector.multi_reduction <maximumf>, %76, %cst_30 [2] : vector<2x8x8xf32> to vector<2x8xf32>
    %78 = vector.shape_cast %77 : vector<2x8xf32> to vector<2x8x1xf32>
    %79 = vector.broadcast %78 : vector<2x8x1xf32> to vector<2x8x8xf32>
    %80 = arith.subf %76, %79 : vector<2x8x8xf32>
    %81 = math.exp %80 : vector<2x8x8xf32>
    %cst_31 = arith.constant dense<0.000000e+00> : vector<2x8xf32>
    %82 = vector.multi_reduction <add>, %81, %cst_31 [2] : vector<2x8x8xf32> to vector<2x8xf32>
    %83 = vector.shape_cast %82 : vector<2x8xf32> to vector<2x8x1xf32>
    %84 = tpu.reciprocal %83 {approx = true} : vector<2x8x1xf32> -> vector<2x8x1xf32>
    %85 = vector.broadcast %84 : vector<2x8x1xf32> to vector<2x8x8xf32>
    %86 = arith.mulf %81, %85 : vector<2x8x8xf32>
    %87 = arith.truncf %86 : vector<2x8x8xf32> to vector<2x8x8xbf16>
    "tpu.trace_start"() <{level = 10 : i32, message = "hqk,hkd->hqd"}> : () -> ()
    %cst_32 = arith.constant dense<0.000000e+00> : vector<2x8x16xf32>
    %88 = tpu.matmul %87, %73, %cst_32 {dimension_numbers = #tpu.dot_dimension_numbers<[2], [1], [1], [2], [0, 0, 0, 1, 1, 2], [0], [0]>} : vector<2x8x8xbf16>, vector<2x8x16xbf16>, vector<2x8x16xf32> -> vector<2x8x16xf32>
    "tpu.trace_stop"() : () -> ()
    %89 = vector.extract_strided_slice %88 {offsets = [0, 0, 0], sizes = [1, 8, 16], strides = [1, 1, 1]} : vector<2x8x16xf32> to vector<1x8x16xf32>
    %90 = vector.shape_cast %89 : vector<1x8x16xf32> to vector<8x16xf32>
    %91 = vector.extract_strided_slice %88 {offsets = [1, 0, 0], sizes = [1, 8, 16], strides = [1, 1, 1]} : vector<2x8x16xf32> to vector<1x8x16xf32>
    %92 = vector.shape_cast %91 : vector<1x8x16xf32> to vector<8x16xf32>
    %93 = tpu.concatenate %90, %92 in 1 : vector<8x16xf32>, vector<8x16xf32> -> vector<8x32xf32>
    %94 = arith.truncf %93 : vector<8x32xf32> to vector<8x32xbf16>
    %95 = arith.index_cast %c0_i32 : i32 to index
    %c0_33 = arith.constant 0 : index
    %c0_34 = arith.constant 0 : index
    %96 = vector.load %arg10[%95, %c0_33, %c0_34] : memref<2x32x32xbf16, #tpu.memory_space<vmem>>, vector<1x32x32xbf16>
    %97 = vector.shape_cast %96 : vector<1x32x32xbf16> to vector<32x32xbf16>
    %cst_35 = arith.constant dense<0.000000e+00> : vector<8x32xf32>
    %98 = tpu.matmul %94, %97, %cst_35 {dimension_numbers = #tpu.dot_dimension_numbers<[1], [0], [0], [1], [0, 0, 1, 1], [], []>} : vector<8x32xbf16>, vector<32x32xbf16>, vector<8x32xf32> -> vector<8x32xf32>
    %99 = arith.index_cast %c0_i32 : i32 to index
    %c0_36 = arith.constant 0 : index
    %c0_37 = arith.constant 0 : index
    %100 = vector.load %arg11[%99, %c0_36, %c0_37] : memref<2x1x32xf32, #tpu.memory_space<vmem>>, vector<1x1x32xf32>
    %101 = vector.shape_cast %100 : vector<1x1x32xf32> to vector<1x32xf32>
    %102 = vector.broadcast %101 : vector<1x32xf32> to vector<8x32xf32>
    %103 = arith.addf %98, %102 : vector<8x32xf32>
    %104 = arith.addf %39, %103 : vector<8x32xf32>
    %105 = arith.index_cast %c0_i32 : i32 to index
    %c0_38 = arith.constant 0 : index
    %c0_39 = arith.constant 0 : index
    %106 = vector.load %arg12[%105, %c0_38, %c0_39] : memref<2x1x32xf32, #tpu.memory_space<vmem>>, vector<1x1x32xf32>
    %107 = vector.shape_cast %106 : vector<1x1x32xf32> to vector<1x32xf32>
    %108 = arith.index_cast %c0_i32 : i32 to index
    %c0_40 = arith.constant 0 : index
    %c0_41 = arith.constant 0 : index
    %109 = vector.load %arg13[%108, %c0_40, %c0_41] : memref<2x1x32xf32, #tpu.memory_space<vmem>>, vector<1x1x32xf32>
    %110 = vector.shape_cast %109 : vector<1x1x32xf32> to vector<1x32xf32>
    %cst_42 = arith.constant dense<0.000000e+00> : vector<8xf32>
    %111 = vector.multi_reduction <add>, %104, %cst_42 [1] : vector<8x32xf32> to vector<8xf32>
    %112 = vector.shape_cast %111 : vector<8xf32> to vector<8x1xf32>
    %cst_43 = arith.constant 3.200000e+01 : f32
    %113 = vector.broadcast %cst_43 : f32 to vector<8x1xf32>
    %114 = arith.divf %112, %113 : vector<8x1xf32>
    %115 = vector.broadcast %114 : vector<8x1xf32> to vector<8x32xf32>
    %116 = arith.subf %104, %115 : vector<8x32xf32>
    %117 = arith.mulf %116, %116 : vector<8x32xf32>
    %cst_44 = arith.constant dense<0.000000e+00> : vector<8xf32>
    %118 = vector.multi_reduction <add>, %117, %cst_44 [1] : vector<8x32xf32> to vector<8xf32>
    %119 = vector.shape_cast %118 : vector<8xf32> to vector<8x1xf32>
    %cst_45 = arith.constant 3.200000e+01 : f32
    %120 = vector.broadcast %cst_45 : f32 to vector<8x1xf32>
    %121 = arith.divf %119, %120 : vector<8x1xf32>
    %122 = vector.broadcast %114 : vector<8x1xf32> to vector<8x32xf32>
    %123 = arith.subf %104, %122 : vector<8x32xf32>
    %cst_46 = arith.constant 9.99999996E-13 : f32
    %124 = vector.broadcast %cst_46 : f32 to vector<8x1xf32>
    %125 = arith.addf %121, %124 : vector<8x1xf32>
    %126 = math.rsqrt %125 : vector<8x1xf32>
    %127 = vector.broadcast %126 : vector<8x1xf32> to vector<8x32xf32>
    %128 = arith.mulf %123, %127 : vector<8x32xf32>
    %129 = vector.broadcast %107 : vector<1x32xf32> to vector<8x32xf32>
    %130 = arith.mulf %128, %129 : vector<8x32xf32>
    %131 = vector.broadcast %110 : vector<1x32xf32> to vector<8x32xf32>
    %132 = arith.addf %130, %131 : vector<8x32xf32>
    %133 = arith.truncf %132 : vector<8x32xf32> to vector<8x32xbf16>
    %134 = arith.index_cast %c0_i32 : i32 to index
    %c0_47 = arith.constant 0 : index
    %c0_48 = arith.constant 0 : index
    %135 = vector.load %arg14[%134, %c0_47, %c0_48] : memref<2x32x64xbf16, #tpu.memory_space<vmem>>, vector<1x32x64xbf16>
    %136 = vector.shape_cast %135 : vector<1x32x64xbf16> to vector<32x64xbf16>
    %cst_49 = arith.constant dense<0.000000e+00> : vector<8x64xf32>
    %137 = tpu.matmul %133, %136, %cst_49 {dimension_numbers = #tpu.dot_dimension_numbers<[1], [0], [0], [1], [0, 0, 1, 1], [], []>} : vector<8x32xbf16>, vector<32x64xbf16>, vector<8x64xf32> -> vector<8x64xf32>
    %138 = arith.index_cast %c0_i32 : i32 to index
    %c0_50 = arith.constant 0 : index
    %c0_51 = arith.constant 0 : index
    %139 = vector.load %arg15[%138, %c0_50, %c0_51] : memref<2x1x64xf32, #tpu.memory_space<vmem>>, vector<1x1x64xf32>
    %140 = vector.shape_cast %139 : vector<1x1x64xf32> to vector<1x64xf32>
    %141 = vector.broadcast %140 : vector<1x64xf32> to vector<8x64xf32>
    %142 = arith.addf %137, %141 : vector<8x64xf32>
    %143 = arith.mulf %142, %142 : vector<8x64xf32>
    %144 = arith.mulf %142, %143 : vector<8x64xf32>
    %cst_52 = arith.constant 4.471500e-02 : f32
    %145 = vector.broadcast %cst_52 : f32 to vector<8x64xf32>
    %146 = arith.mulf %145, %144 : vector<8x64xf32>
    %147 = arith.addf %142, %146 : vector<8x64xf32>
    %cst_53 = arith.constant 0.797884583 : f32
    %148 = vector.broadcast %cst_53 : f32 to vector<8x64xf32>
    %149 = arith.mulf %148, %147 : vector<8x64xf32>
    %150 = math.tanh %149 : vector<8x64xf32>
    %cst_54 = arith.constant 1.000000e+00 : f32
    %151 = vector.broadcast %cst_54 : f32 to vector<8x64xf32>
    %152 = arith.addf %151, %150 : vector<8x64xf32>
    %cst_55 = arith.constant 5.000000e-01 : f32
    %153 = vector.broadcast %cst_55 : f32 to vector<8x64xf32>
    %154 = arith.mulf %153, %152 : vector<8x64xf32>
    %155 = arith.mulf %142, %154 : vector<8x64xf32>
    %156 = arith.truncf %155 : vector<8x64xf32> to vector<8x64xbf16>
    %157 = arith.index_cast %c0_i32 : i32 to index
    %c0_56 = arith.constant 0 : index
    %c0_57 = arith.constant 0 : index
    %158 = vector.load %arg16[%157, %c0_56, %c0_57] : memref<2x64x32xbf16, #tpu.memory_space<vmem>>, vector<1x64x32xbf16>
    %159 = vector.shape_cast %158 : vector<1x64x32xbf16> to vector<64x32xbf16>
    %cst_58 = arith.constant dense<0.000000e+00> : vector<8x32xf32>
    %160 = tpu.matmul %156, %159, %cst_58 {dimension_numbers = #tpu.dot_dimension_numbers<[1], [0], [0], [1], [0, 0, 1, 1], [], []>} : vector<8x64xbf16>, vector<64x32xbf16>, vector<8x32xf32> -> vector<8x32xf32>
    %161 = arith.index_cast %c0_i32 : i32 to index
    %c0_59 = arith.constant 0 : index
    %c0_60 = arith.constant 0 : index
    %162 = vector.load %arg17[%161, %c0_59, %c0_60] : memref<2x1x32xf32, #tpu.memory_space<vmem>>, vector<1x1x32xf32>
    %163 = vector.shape_cast %162 : vector<1x1x32xf32> to vector<1x32xf32>
    %164 = vector.broadcast %163 : vector<1x32xf32> to vector<8x32xf32>
    %165 = arith.addf %160, %164 : vector<8x32xf32>
    %166 = arith.addf %132, %165 : vector<8x32xf32>
    %167 = arith.index_cast %c0_i32 : i32 to index
    %c0_61 = arith.constant 0 : index
    %c0_62 = arith.constant 0 : index
    %168 = vector.load %arg18[%167, %c0_61, %c0_62] : memref<2x1x32xf32, #tpu.memory_space<vmem>>, vector<1x1x32xf32>
    %169 = vector.shape_cast %168 : vector<1x1x32xf32> to vector<1x32xf32>
    %170 = arith.index_cast %c0_i32 : i32 to index
    %c0_63 = arith.constant 0 : index
    %c0_64 = arith.constant 0 : index
    %171 = vector.load %arg19[%170, %c0_63, %c0_64] : memref<2x1x32xf32, #tpu.memory_space<vmem>>, vector<1x1x32xf32>
    %172 = vector.shape_cast %171 : vector<1x1x32xf32> to vector<1x32xf32>
    %cst_65 = arith.constant dense<0.000000e+00> : vector<8xf32>
    %173 = vector.multi_reduction <add>, %166, %cst_65 [1] : vector<8x32xf32> to vector<8xf32>
    %174 = vector.shape_cast %173 : vector<8xf32> to vector<8x1xf32>
    %cst_66 = arith.constant 3.200000e+01 : f32
    %175 = vector.broadcast %cst_66 : f32 to vector<8x1xf32>
    %176 = arith.divf %174, %175 : vector<8x1xf32>
    %177 = vector.broadcast %176 : vector<8x1xf32> to vector<8x32xf32>
    %178 = arith.subf %166, %177 : vector<8x32xf32>
    %179 = arith.mulf %178, %178 : vector<8x32xf32>
    %cst_67 = arith.constant dense<0.000000e+00> : vector<8xf32>
    %180 = vector.multi_reduction <add>, %179, %cst_67 [1] : vector<8x32xf32> to vector<8xf32>
    %181 = vector.shape_cast %180 : vector<8xf32> to vector<8x1xf32>
    %cst_68 = arith.constant 3.200000e+01 : f32
    %182 = vector.broadcast %cst_68 : f32 to vector<8x1xf32>
    %183 = arith.divf %181, %182 : vector<8x1xf32>
    %184 = vector.broadcast %176 : vector<8x1xf32> to vector<8x32xf32>
    %185 = arith.subf %166, %184 : vector<8x32xf32>
    %cst_69 = arith.constant 9.99999996E-13 : f32
    %186 = vector.broadcast %cst_69 : f32 to vector<8x1xf32>
    %187 = arith.addf %183, %186 : vector<8x1xf32>
    %188 = math.rsqrt %187 : vector<8x1xf32>
    %189 = vector.broadcast %188 : vector<8x1xf32> to vector<8x32xf32>
    %190 = arith.mulf %185, %189 : vector<8x32xf32>
    %191 = vector.broadcast %169 : vector<1x32xf32> to vector<8x32xf32>
    %192 = arith.mulf %190, %191 : vector<8x32xf32>
    %193 = vector.broadcast %172 : vector<1x32xf32> to vector<8x32xf32>
    %194 = arith.addf %192, %193 : vector<8x32xf32>
    %c1_i32_70 = arith.constant 1 : i32
    %195 = arith.truncf %194 : vector<8x32xf32> to vector<8x32xbf16>
    %196 = arith.index_cast %c1_i32_70 : i32 to index
    %c0_71 = arith.constant 0 : index
    %c0_72 = arith.constant 0 : index
    %197 = vector.load %arg8[%196, %c0_71, %c0_72] : memref<2x32x96xbf16, #tpu.memory_space<vmem>>, vector<1x32x96xbf16>
    %198 = vector.shape_cast %197 : vector<1x32x96xbf16> to vector<32x96xbf16>
    %cst_73 = arith.constant dense<0.000000e+00> : vector<8x96xf32>
    %199 = tpu.matmul %195, %198, %cst_73 {dimension_numbers = #tpu.dot_dimension_numbers<[1], [0], [0], [1], [0, 0, 1, 1], [], []>} : vector<8x32xbf16>, vector<32x96xbf16>, vector<8x96xf32> -> vector<8x96xf32>
    %200 = arith.index_cast %c1_i32_70 : i32 to index
    %c0_74 = arith.constant 0 : index
    %c0_75 = arith.constant 0 : index
    %201 = vector.load %arg9[%200, %c0_74, %c0_75] : memref<2x1x96xf32, #tpu.memory_space<vmem>>, vector<1x1x96xf32>
    %202 = vector.shape_cast %201 : vector<1x1x96xf32> to vector<1x96xf32>
    %203 = vector.broadcast %202 : vector<1x96xf32> to vector<8x96xf32>
    %204 = arith.addf %199, %203 : vector<8x96xf32>
    %205 = arith.truncf %204 : vector<8x96xf32> to vector<8x96xbf16>
    %206 = vector.extract_strided_slice %205 {offsets = [0, 0], sizes = [8, 16], strides = [1, 1]} : vector<8x96xbf16> to vector<8x16xbf16>
    %207 = vector.extract_strided_slice %205 {offsets = [0, 16], sizes = [8, 16], strides = [1, 1]} : vector<8x96xbf16> to vector<8x16xbf16>
    %208 = vector.shape_cast %206 : vector<8x16xbf16> to vector<1x8x16xbf16>
    %209 = vector.shape_cast %207 : vector<8x16xbf16> to vector<1x8x16xbf16>
    %210 = tpu.concatenate %208, %209 in 0 : vector<1x8x16xbf16>, vector<1x8x16xbf16> -> vector<2x8x16xbf16>
    %211 = vector.extract_strided_slice %205 {offsets = [0, 32], sizes = [8, 16], strides = [1, 1]} : vector<8x96xbf16> to vector<8x16xbf16>
    %212 = vector.extract_strided_slice %205 {offsets = [0, 48], sizes = [8, 16], strides = [1, 1]} : vector<8x96xbf16> to vector<8x16xbf16>
    %213 = vector.shape_cast %211 : vector<8x16xbf16> to vector<1x8x16xbf16>
    %214 = vector.shape_cast %212 : vector<8x16xbf16> to vector<1x8x16xbf16>
    %215 = tpu.concatenate %213, %214 in 0 : vector<1x8x16xbf16>, vector<1x8x16xbf16> -> vector<2x8x16xbf16>
    %216 = vector.extract_strided_slice %205 {offsets = [0, 64], sizes = [8, 16], strides = [1, 1]} : vector<8x96xbf16> to vector<8x16xbf16>
    %217 = vector.extract_strided_slice %205 {offsets = [0, 80], sizes = [8, 16], strides = [1, 1]} : vector<8x96xbf16> to vector<8x16xbf16>
    %218 = vector.shape_cast %216 : vector<8x16xbf16> to vector<1x8x16xbf16>
    %219 = vector.shape_cast %217 : vector<8x16xbf16> to vector<1x8x16xbf16>
    %220 = tpu.concatenate %218, %219 in 0 : vector<1x8x16xbf16>, vector<1x8x16xbf16> -> vector<2x8x16xbf16>
    "tpu.trace_start"() <{level = 10 : i32, message = "hqd,hkd->hqk"}> : () -> ()
    %cst_76 = arith.constant dense<0.000000e+00> : vector<2x8x8xf32>
    %221 = tpu.matmul %210, %215, %cst_76 {dimension_numbers = #tpu.dot_dimension_numbers<[2], [2], [1], [1], [0, 0, 0, 1, 1, 1], [0], [0]>} : vector<2x8x16xbf16>, vector<2x8x16xbf16>, vector<2x8x8xf32> -> vector<2x8x8xf32>
    "tpu.trace_stop"() : () -> ()
    %222 = vector.broadcast %47 : vector<1x1x8xf32> to vector<2x8x8xf32>
    %223 = arith.addf %221, %222 : vector<2x8x8xf32>
    %cst_77 = arith.constant dense<0xFF800000> : vector<2x8xf32>
    %224 = vector.multi_reduction <maximumf>, %223, %cst_77 [2] : vector<2x8x8xf32> to vector<2x8xf32>
    %225 = vector.shape_cast %224 : vector<2x8xf32> to vector<2x8x1xf32>
    %226 = vector.broadcast %225 : vector<2x8x1xf32> to vector<2x8x8xf32>
    %227 = arith.subf %223, %226 : vector<2x8x8xf32>
    %228 = math.exp %227 : vector<2x8x8xf32>
    %cst_78 = arith.constant dense<0.000000e+00> : vector<2x8xf32>
    %229 = vector.multi_reduction <add>, %228, %cst_78 [2] : vector<2x8x8xf32> to vector<2x8xf32>
    %230 = vector.shape_cast %229 : vector<2x8xf32> to vector<2x8x1xf32>
    %231 = tpu.reciprocal %230 {approx = true} : vector<2x8x1xf32> -> vector<2x8x1xf32>
    %232 = vector.broadcast %231 : vector<2x8x1xf32> to vector<2x8x8xf32>
    %233 = arith.mulf %228, %232 : vector<2x8x8xf32>
    %234 = arith.truncf %233 : vector<2x8x8xf32> to vector<2x8x8xbf16>
    "tpu.trace_start"() <{level = 10 : i32, message = "hqk,hkd->hqd"}> : () -> ()
    %cst_79 = arith.constant dense<0.000000e+00> : vector<2x8x16xf32>
    %235 = tpu.matmul %234, %220, %cst_79 {dimension_numbers = #tpu.dot_dimension_numbers<[2], [1], [1], [2], [0, 0, 0, 1, 1, 2], [0], [0]>} : vector<2x8x8xbf16>, vector<2x8x16xbf16>, vector<2x8x16xf32> -> vector<2x8x16xf32>
    "tpu.trace_stop"() : () -> ()
    %236 = vector.extract_strided_slice %235 {offsets = [0, 0, 0], sizes = [1, 8, 16], strides = [1, 1, 1]} : vector<2x8x16xf32> to vector<1x8x16xf32>
    %237 = vector.shape_cast %236 : vector<1x8x16xf32> to vector<8x16xf32>
    %238 = vector.extract_strided_slice %235 {offsets = [1, 0, 0], sizes = [1, 8, 16], strides = [1, 1, 1]} : vector<2x8x16xf32> to vector<1x8x16xf32>
    %239 = vector.shape_cast %238 : vector<1x8x16xf32> to vector<8x16xf32>
    %240 = tpu.concatenate %237, %239 in 1 : vector<8x16xf32>, vector<8x16xf32> -> vector<8x32xf32>
    %241 = arith.truncf %240 : vector<8x32xf32> to vector<8x32xbf16>
    %242 = arith.index_cast %c1_i32_70 : i32 to index
    %c0_80 = arith.constant 0 : index
    %c0_81 = arith.constant 0 : index
    %243 = vector.load %arg10[%242, %c0_80, %c0_81] : memref<2x32x32xbf16, #tpu.memory_space<vmem>>, vector<1x32x32xbf16>
    %244 = vector.shape_cast %243 : vector<1x32x32xbf16> to vector<32x32xbf16>
    %cst_82 = arith.constant dense<0.000000e+00> : vector<8x32xf32>
    %245 = tpu.matmul %241, %244, %cst_82 {dimension_numbers = #tpu.dot_dimension_numbers<[1], [0], [0], [1], [0, 0, 1, 1], [], []>} : vector<8x32xbf16>, vector<32x32xbf16>, vector<8x32xf32> -> vector<8x32xf32>
    %246 = arith.index_cast %c1_i32_70 : i32 to index
    %c0_83 = arith.constant 0 : index
    %c0_84 = arith.constant 0 : index
    %247 = vector.load %arg11[%246, %c0_83, %c0_84] : memref<2x1x32xf32, #tpu.memory_space<vmem>>, vector<1x1x32xf32>
    %248 = vector.shape_cast %247 : vector<1x1x32xf32> to vector<1x32xf32>
    %249 = vector.broadcast %248 : vector<1x32xf32> to vector<8x32xf32>
    %250 = arith.addf %245, %249 : vector<8x32xf32>
    %251 = arith.addf %194, %250 : vector<8x32xf32>
    %252 = arith.index_cast %c1_i32_70 : i32 to index
    %c0_85 = arith.constant 0 : index
    %c0_86 = arith.constant 0 : index
    %253 = vector.load %arg12[%252, %c0_85, %c0_86] : memref<2x1x32xf32, #tpu.memory_space<vmem>>, vector<1x1x32xf32>
    %254 = vector.shape_cast %253 : vector<1x1x32xf32> to vector<1x32xf32>
    %255 = arith.index_cast %c1_i32_70 : i32 to index
    %c0_87 = arith.constant 0 : index
    %c0_88 = arith.constant 0 : index
    %256 = vector.load %arg13[%255, %c0_87, %c0_88] : memref<2x1x32xf32, #tpu.memory_space<vmem>>, vector<1x1x32xf32>
    %257 = vector.shape_cast %256 : vector<1x1x32xf32> to vector<1x32xf32>
    %cst_89 = arith.constant dense<0.000000e+00> : vector<8xf32>
    %258 = vector.multi_reduction <add>, %251, %cst_89 [1] : vector<8x32xf32> to vector<8xf32>
    %259 = vector.shape_cast %258 : vector<8xf32> to vector<8x1xf32>
    %cst_90 = arith.constant 3.200000e+01 : f32
    %260 = vector.broadcast %cst_90 : f32 to vector<8x1xf32>
    %261 = arith.divf %259, %260 : vector<8x1xf32>
    %262 = vector.broadcast %261 : vector<8x1xf32> to vector<8x32xf32>
    %263 = arith.subf %251, %262 : vector<8x32xf32>
    %264 = arith.mulf %263, %263 : vector<8x32xf32>
    %cst_91 = arith.constant dense<0.000000e+00> : vector<8xf32>
    %265 = vector.multi_reduction <add>, %264, %cst_91 [1] : vector<8x32xf32> to vector<8xf32>
    %266 = vector.shape_cast %265 : vector<8xf32> to vector<8x1xf32>
    %cst_92 = arith.constant 3.200000e+01 : f32
    %267 = vector.broadcast %cst_92 : f32 to vector<8x1xf32>
    %268 = arith.divf %266, %267 : vector<8x1xf32>
    %269 = vector.broadcast %261 : vector<8x1xf32> to vector<8x32xf32>
    %270 = arith.subf %251, %269 : vector<8x32xf32>
    %cst_93 = arith.constant 9.99999996E-13 : f32
    %271 = vector.broadcast %cst_93 : f32 to vector<8x1xf32>
    %272 = arith.addf %268, %271 : vector<8x1xf32>
    %273 = math.rsqrt %272 : vector<8x1xf32>
    %274 = vector.broadcast %273 : vector<8x1xf32> to vector<8x32xf32>
    %275 = arith.mulf %270, %274 : vector<8x32xf32>
    %276 = vector.broadcast %254 : vector<1x32xf32> to vector<8x32xf32>
    %277 = arith.mulf %275, %276 : vector<8x32xf32>
    %278 = vector.broadcast %257 : vector<1x32xf32> to vector<8x32xf32>
    %279 = arith.addf %277, %278 : vector<8x32xf32>
    %280 = arith.truncf %279 : vector<8x32xf32> to vector<8x32xbf16>
    %281 = arith.index_cast %c1_i32_70 : i32 to index
    %c0_94 = arith.constant 0 : index
    %c0_95 = arith.constant 0 : index
    %282 = vector.load %arg14[%281, %c0_94, %c0_95] : memref<2x32x64xbf16, #tpu.memory_space<vmem>>, vector<1x32x64xbf16>
    %283 = vector.shape_cast %282 : vector<1x32x64xbf16> to vector<32x64xbf16>
    %cst_96 = arith.constant dense<0.000000e+00> : vector<8x64xf32>
    %284 = tpu.matmul %280, %283, %cst_96 {dimension_numbers = #tpu.dot_dimension_numbers<[1], [0], [0], [1], [0, 0, 1, 1], [], []>} : vector<8x32xbf16>, vector<32x64xbf16>, vector<8x64xf32> -> vector<8x64xf32>
    %285 = arith.index_cast %c1_i32_70 : i32 to index
    %c0_97 = arith.constant 0 : index
    %c0_98 = arith.constant 0 : index
    %286 = vector.load %arg15[%285, %c0_97, %c0_98] : memref<2x1x64xf32, #tpu.memory_space<vmem>>, vector<1x1x64xf32>
    %287 = vector.shape_cast %286 : vector<1x1x64xf32> to vector<1x64xf32>
    %288 = vector.broadcast %287 : vector<1x64xf32> to vector<8x64xf32>
    %289 = arith.addf %284, %288 : vector<8x64xf32>
    %290 = arith.mulf %289, %289 : vector<8x64xf32>
    %291 = arith.mulf %289, %290 : vector<8x64xf32>
    %cst_99 = arith.constant 4.471500e-02 : f32
    %292 = vector.broadcast %cst_99 : f32 to vector<8x64xf32>
    %293 = arith.mulf %292, %291 : vector<8x64xf32>
    %294 = arith.addf %289, %293 : vector<8x64xf32>
    %cst_100 = arith.constant 0.797884583 : f32
    %295 = vector.broadcast %cst_100 : f32 to vector<8x64xf32>
    %296 = arith.mulf %295, %294 : vector<8x64xf32>
    %297 = math.tanh %296 : vector<8x64xf32>
    %cst_101 = arith.constant 1.000000e+00 : f32
    %298 = vector.broadcast %cst_101 : f32 to vector<8x64xf32>
    %299 = arith.addf %298, %297 : vector<8x64xf32>
    %cst_102 = arith.constant 5.000000e-01 : f32
    %300 = vector.broadcast %cst_102 : f32 to vector<8x64xf32>
    %301 = arith.mulf %300, %299 : vector<8x64xf32>
    %302 = arith.mulf %289, %301 : vector<8x64xf32>
    %303 = arith.truncf %302 : vector<8x64xf32> to vector<8x64xbf16>
    %304 = arith.index_cast %c1_i32_70 : i32 to index
    %c0_103 = arith.constant 0 : index
    %c0_104 = arith.constant 0 : index
    %305 = vector.load %arg16[%304, %c0_103, %c0_104] : memref<2x64x32xbf16, #tpu.memory_space<vmem>>, vector<1x64x32xbf16>
    %306 = vector.shape_cast %305 : vector<1x64x32xbf16> to vector<64x32xbf16>
    %cst_105 = arith.constant dense<0.000000e+00> : vector<8x32xf32>
    %307 = tpu.matmul %303, %306, %cst_105 {dimension_numbers = #tpu.dot_dimension_numbers<[1], [0], [0], [1], [0, 0, 1, 1], [], []>} : vector<8x64xbf16>, vector<64x32xbf16>, vector<8x32xf32> -> vector<8x32xf32>
    %308 = arith.index_cast %c1_i32_70 : i32 to index
    %c0_106 = arith.constant 0 : index
    %c0_107 = arith.constant 0 : index
    %309 = vector.load %arg17[%308, %c0_106, %c0_107] : memref<2x1x32xf32, #tpu.memory_space<vmem>>, vector<1x1x32xf32>
    %310 = vector.shape_cast %309 : vector<1x1x32xf32> to vector<1x32xf32>
    %311 = vector.broadcast %310 : vector<1x32xf32> to vector<8x32xf32>
    %312 = arith.addf %307, %311 : vector<8x32xf32>
    %313 = arith.addf %279, %312 : vector<8x32xf32>
    %314 = arith.index_cast %c1_i32_70 : i32 to index
    %c0_108 = arith.constant 0 : index
    %c0_109 = arith.constant 0 : index
    %315 = vector.load %arg18[%314, %c0_108, %c0_109] : memref<2x1x32xf32, #tpu.memory_space<vmem>>, vector<1x1x32xf32>
    %316 = vector.shape_cast %315 : vector<1x1x32xf32> to vector<1x32xf32>
    %317 = arith.index_cast %c1_i32_70 : i32 to index
    %c0_110 = arith.constant 0 : index
    %c0_111 = arith.constant 0 : index
    %318 = vector.load %arg19[%317, %c0_110, %c0_111] : memref<2x1x32xf32, #tpu.memory_space<vmem>>, vector<1x1x32xf32>
    %319 = vector.shape_cast %318 : vector<1x1x32xf32> to vector<1x32xf32>
    %cst_112 = arith.constant dense<0.000000e+00> : vector<8xf32>
    %320 = vector.multi_reduction <add>, %313, %cst_112 [1] : vector<8x32xf32> to vector<8xf32>
    %321 = vector.shape_cast %320 : vector<8xf32> to vector<8x1xf32>
    %cst_113 = arith.constant 3.200000e+01 : f32
    %322 = vector.broadcast %cst_113 : f32 to vector<8x1xf32>
    %323 = arith.divf %321, %322 : vector<8x1xf32>
    %324 = vector.broadcast %323 : vector<8x1xf32> to vector<8x32xf32>
    %325 = arith.subf %313, %324 : vector<8x32xf32>
    %326 = arith.mulf %325, %325 : vector<8x32xf32>
    %cst_114 = arith.constant dense<0.000000e+00> : vector<8xf32>
    %327 = vector.multi_reduction <add>, %326, %cst_114 [1] : vector<8x32xf32> to vector<8xf32>
    %328 = vector.shape_cast %327 : vector<8xf32> to vector<8x1xf32>
    %cst_115 = arith.constant 3.200000e+01 : f32
    %329 = vector.broadcast %cst_115 : f32 to vector<8x1xf32>
    %330 = arith.divf %328, %329 : vector<8x1xf32>
    %331 = vector.broadcast %323 : vector<8x1xf32> to vector<8x32xf32>
    %332 = arith.subf %313, %331 : vector<8x32xf32>
    %cst_116 = arith.constant 9.99999996E-13 : f32
    %333 = vector.broadcast %cst_116 : f32 to vector<8x1xf32>
    %334 = arith.addf %330, %333 : vector<8x1xf32>
    %335 = math.rsqrt %334 : vector<8x1xf32>
    %336 = vector.broadcast %335 : vector<8x1xf32> to vector<8x32xf32>
    %337 = arith.mulf %332, %336 : vector<8x32xf32>
    %338 = vector.broadcast %316 : vector<1x32xf32> to vector<8x32xf32>
    %339 = arith.mulf %337, %338 : vector<8x32xf32>
    %340 = vector.broadcast %319 : vector<1x32xf32> to vector<8x32xf32>
    %341 = arith.addf %339, %340 : vector<8x32xf32>
    %c2_i32 = arith.constant 2 : i32
    %342 = vector.extract_strided_slice %341 {offsets = [0, 0], sizes = [1, 32], strides = [1, 1]} : vector<8x32xf32> to vector<1x32xf32>
    %343 = arith.truncf %342 : vector<1x32xf32> to vector<1x32xbf16>
    %c0_117 = arith.constant 0 : index
    %c0_118 = arith.constant 0 : index
    %344 = vector.load %arg20[%c0_117, %c0_118] : memref<32x32xbf16, #tpu.memory_space<vmem>>, vector<32x32xbf16>
    %cst_119 = arith.constant dense<0.000000e+00> : vector<1x32xf32>
    %345 = tpu.matmul %343, %344, %cst_119 {dimension_numbers = #tpu.dot_dimension_numbers<[1], [0], [0], [1], [0, 0, 1, 1], [], []>} : vector<1x32xbf16>, vector<32x32xbf16>, vector<1x32xf32> -> vector<1x32xf32>
    %c0_120 = arith.constant 0 : index
    %c0_121 = arith.constant 0 : index
    %346 = vector.load %arg21[%c0_120, %c0_121] : memref<1x32xf32, #tpu.memory_space<vmem>>, vector<1x32xf32>
    %347 = arith.addf %345, %346 : vector<1x32xf32>
    %348 = math.tanh %347 : vector<1x32xf32>
    %349 = arith.truncf %348 : vector<1x32xf32> to vector<1x32xbf16>
    %c0_122 = arith.constant 0 : index
    %c0_123 = arith.constant 0 : index
    %350 = vector.load %arg22[%c0_122, %c0_123] : memref<32x2xbf16, #tpu.memory_space<vmem>>, vector<32x2xbf16>
    %cst_124 = arith.constant dense<0.000000e+00> : vector<1x2xf32>
    %351 = tpu.matmul %349, %350, %cst_124 {dimension_numbers = #tpu.dot_dimension_numbers<[1], [0], [0], [1], [0, 0, 1, 1], [], []>} : vector<1x32xbf16>, vector<32x2xbf16>, vector<1x2xf32> -> vector<1x2xf32>
    %c0_125 = arith.constant 0 : index
    %c0_126 = arith.constant 0 : index
    %352 = vector.load %arg23[%c0_125, %c0_126] : memref<1x2xf32, #tpu.memory_space<vmem>>, vector<1x2xf32>
    %353 = arith.addf %351, %352 : vector<1x2xf32>
    %354 = arith.negf %353 : vector<1x2xf32>
    %355 = math.exp %354 : vector<1x2xf32>
    %cst_127 = arith.constant 1.000000e+00 : f32
    %356 = vector.broadcast %cst_127 : f32 to vector<1x2xf32>
    %357 = arith.addf %356, %355 : vector<1x2xf32>
    %358 = arith.divf %356, %357 : vector<1x2xf32>
    %c0_128 = arith.constant 0 : index
    %c0_129 = arith.constant 0 : index
    %c0_130 = arith.constant 0 : index
    %359 = vector.load %arg25[%c0_128, %c0_129, %c0_130] : memref<1x1x2xf32, #tpu.memory_space<vmem>>, vector<1x1x2xf32>
    %360 = vector.shape_cast %359 : vector<1x1x2xf32> to vector<1x2xf32>
    %361 = vector.shape_cast %358 : vector<1x2xf32> to vector<1x1x2xf32>
    tpu.vector_store %arg25[%c0_128, %c0_129, %c0_130], %361 {strides = array<i32>} : memref<1x1x2xf32, #tpu.memory_space<vmem>>, vector<1x1x2xf32>,
    %c0_131 = arith.constant 0 : index
    %c0_132 = arith.constant 0 : index
    %c0_133 = arith.constant 0 : index
    %362 = vector.load %arg24[%c0_131, %c0_132, %c0_133] : memref<1x1x1xf32, #tpu.memory_space<vmem>>, vector<1x1x1xf32>
    %363 = vector.shape_cast %362 : vector<1x1x1xf32> to vector<1x1xf32>
    %364 = vector.extract_strided_slice %358 {offsets = [0, 0], sizes = [1, 1], strides = [1, 1]} : vector<1x2xf32> to vector<1x1xf32>
    %cst_134 = arith.constant 1.000000e-10 : f32
    %365 = vector.broadcast %cst_134 : f32 to vector<1x1xf32>
    %366 = arith.addf %364, %365 : vector<1x1xf32>
    %367 = math.log %366 : vector<1x1xf32>
    %368 = arith.mulf %367, %363 : vector<1x1xf32>
    %cst_135 = arith.constant 1.000000e+00 : f32
    %369 = vector.broadcast %cst_135 : f32 to vector<1x1xf32>
    %370 = arith.subf %369, %364 : vector<1x1xf32>
    %cst_136 = arith.constant 1.000000e-10 : f32
    %371 = vector.broadcast %cst_136 : f32 to vector<1x1xf32>
    %372 = arith.addf %370, %371 : vector<1x1xf32>
    %373 = math.log %372 : vector<1x1xf32>
    %cst_137 = arith.constant 1.000000e+00 : f32
    %374 = vector.broadcast %cst_137 : f32 to vector<1x1xf32>
    %375 = arith.subf %374, %363 : vector<1x1xf32>
    %376 = arith.mulf %373, %375 : vector<1x1xf32>
    %377 = arith.addf %368, %376 : vector<1x1xf32>
    %c0_138 = arith.constant 0 : index
    %c0_139 = arith.constant 0 : index
    %c0_140 = arith.constant 0 : index
    %378 = vector.load %arg26[%c0_138, %c0_139, %c0_140] : memref<1x1x1xf32, #tpu.memory_space<vmem>>, vector<1x1x1xf32>
    %379 = vector.shape_cast %378 : vector<1x1x1xf32> to vector<1x1xf32>
    %380 = vector.shape_cast %377 : vector<1x1xf32> to vector<1x1x1xf32>
    tpu.vector_store %arg26[%c0_138, %c0_139, %c0_140], %380 {strides = array<i32>} : memref<1x1x1xf32, #tpu.memory_space<vmem>>, vector<1x1x1xf32>,
    return
  }
  func.func @transform_0(%arg0: i32) -> (i32, i32, i32) {
    %c0_i32 = arith.constant 0 : i32
    %c0_i32_0 = arith.constant 0 : i32
    %c0_i32_1 = arith.constant 0 : i32
    return %arg0, %c0_i32, %c0_i32_0 : i32, i32, i32
  }
  func.func @transform_1(%arg0: i32) -> (i32, i32, i32) {
    %c0_i32 = arith.constant 0 : i32
    %c0_i32_0 = arith.constant 0 : i32
    %c0_i32_1 = arith.constant 0 : i32
    return %arg0, %c0_i32, %c0_i32_0 : i32, i32, i32
  }
  func.func @transform_2(%arg0: i32) -> (i32, i32) {
    %c0_i32 = arith.constant 0 : i32
    %c0_i32_0 = arith.constant 0 : i32
    %c0_i32_1 = arith.constant 0 : i32
    return %c0_i32, %c0_i32_0 : i32, i32
  }
  func.func @transform_3(%arg0: i32) -> (i32, i32) {
    %c0_i32 = arith.constant 0 : i32
    %c0_i32_0 = arith.constant 0 : i32
    %c0_i32_1 = arith.constant 0 : i32
    return %c0_i32, %c0_i32_0 : i32, i32
  }
  func.func @transform_4(%arg0: i32) -> (i32, i32) {
    %c0_i32 = arith.constant 0 : i32
    %c0_i32_0 = arith.constant 0 : i32
    %c0_i32_1 = arith.constant 0 : i32
    return %c0_i32, %c0_i32_0 : i32, i32
  }
  func.func @transform_5(%arg0: i32) -> (i32, i32) {
    %c0_i32 = arith.constant 0 : i32
    %c0_i32_0 = arith.constant 0 : i32
    %c0_i32_1 = arith.constant 0 : i32
    return %c0_i32, %c0_i32_0 : i32, i32
  }
  func.func @transform_6(%arg0: i32) -> (i32, i32) {
    %c0_i32 = arith.constant 0 : i32
    %c0_i32_0 = arith.constant 0 : i32
    %c0_i32_1 = arith.constant 0 : i32
    return %c0_i32, %c0_i32_0 : i32, i32
  }
  func.func @transform_7(%arg0: i32) -> (i32, i32, i32) {
    %c0_i32 = arith.constant 0 : i32
    %c0_i32_0 = arith.constant 0 : i32
    %c0_i32_1 = arith.constant 0 : i32
    %c0_i32_2 = arith.constant 0 : i32
    return %c0_i32, %c0_i32_0, %c0_i32_1 : i32, i32, i32
  }
  func.func @transform_8(%arg0: i32) -> (i32, i32, i32) {
    %c0_i32 = arith.constant 0 : i32
    %c0_i32_0 = arith.constant 0 : i32
    %c0_i32_1 = arith.constant 0 : i32
    %c0_i32_2 = arith.constant 0 : i32
    return %c0_i32, %c0_i32_0, %c0_i32_1 : i32, i32, i32
  }
  func.func @transform_9(%arg0: i32) -> (i32, i32, i32) {
    %c0_i32 = arith.constant 0 : i32
    %c0_i32_0 = arith.constant 0 : i32
    %c0_i32_1 = arith.constant 0 : i32
    %c0_i32_2 = arith.constant 0 : i32
    return %c0_i32, %c0_i32_0, %c0_i32_1 : i32, i32, i32
  }
  func.func @transform_10(%arg0: i32) -> (i32, i32, i32) {
    %c0_i32 = arith.constant 0 : i32
    %c0_i32_0 = arith.constant 0 : i32
    %c0_i32_1 = arith.constant 0 : i32
    %c0_i32_2 = arith.constant 0 : i32
    return %c0_i32, %c0_i32_0, %c0_i32_1 : i32, i32, i32
  }
  func.func @transform_11(%arg0: i32) -> (i32, i32, i32) {
    %c0_i32 = arith.constant 0 : i32
    %c0_i32_0 = arith.constant 0 : i32
    %c0_i32_1 = arith.constant 0 : i32
    %c0_i32_2 = arith.constant 0 : i32
    return %c0_i32, %c0_i32_0, %c0_i32_1 : i32, i32, i32
  }
  func.func @transform_12(%arg0: i32) -> (i32, i32, i32) {
    %c0_i32 = arith.constant 0 : i32
    %c0_i32_0 = arith.constant 0 : i32
    %c0_i32_1 = arith.constant 0 : i32
    %c0_i32_2 = arith.constant 0 : i32
    return %c0_i32, %c0_i32_0, %c0_i32_1 : i32, i32, i32
  }
  func.func @transform_13(%arg0: i32) -> (i32, i32, i32) {
    %c0_i32 = arith.constant 0 : i32
    %c0_i32_0 = arith.constant 0 : i32
    %c0_i32_1 = arith.constant 0 : i32
    %c0_i32_2 = arith.constant 0 : i32
    return %c0_i32, %c0_i32_0, %c0_i32_1 : i32, i32, i32
  }
  func.func @transform_14(%arg0: i32) -> (i32, i32, i32) {
    %c0_i32 = arith.constant 0 : i32
    %c0_i32_0 = arith.constant 0 : i32
    %c0_i32_1 = arith.constant 0 : i32
    %c0_i32_2 = arith.constant 0 : i32
    return %c0_i32, %c0_i32_0, %c0_i32_1 : i32, i32, i32
  }
  func.func @transform_15(%arg0: i32) -> (i32, i32, i32) {
    %c0_i32 = arith.constant 0 : i32
    %c0_i32_0 = arith.constant 0 : i32
    %c0_i32_1 = arith.constant 0 : i32
    %c0_i32_2 = arith.constant 0 : i32
    return %c0_i32, %c0_i32_0, %c0_i32_1 : i32, i32, i32
  }
  func.func @transform_16(%arg0: i32) -> (i32, i32, i32) {
    %c0_i32 = arith.constant 0 : i32
    %c0_i32_0 = arith.constant 0 : i32
    %c0_i32_1 = arith.constant 0 : i32
    %c0_i32_2 = arith.constant 0 : i32
    return %c0_i32, %c0_i32_0, %c0_i32_1 : i32, i32, i32
  }
  func.func @transform_17(%arg0: i32) -> (i32, i32, i32) {
    %c0_i32 = arith.constant 0 : i32
    %c0_i32_0 = arith.constant 0 : i32
    %c0_i32_1 = arith.constant 0 : i32
    %c0_i32_2 = arith.constant 0 : i32
    return %c0_i32, %c0_i32_0, %c0_i32_1 : i32, i32, i32
  }
  func.func @transform_18(%arg0: i32) -> (i32, i32, i32) {
    %c0_i32 = arith.constant 0 : i32
    %c0_i32_0 = arith.constant 0 : i32
    %c0_i32_1 = arith.constant 0 : i32
    %c0_i32_2 = arith.constant 0 : i32
    return %c0_i32, %c0_i32_0, %c0_i32_1 : i32, i32, i32
  }
  func.func @transform_19(%arg0: i32) -> (i32, i32) {
    %c0_i32 = arith.constant 0 : i32
    %c0_i32_0 = arith.constant 0 : i32
    %c0_i32_1 = arith.constant 0 : i32
    return %c0_i32, %c0_i32_0 : i32, i32
  }
  func.func @transform_20(%arg0: i32) -> (i32, i32) {
    %c0_i32 = arith.constant 0 : i32
    %c0_i32_0 = arith.constant 0 : i32
    %c0_i32_1 = arith.constant 0 : i32
    return %c0_i32, %c0_i32_0 : i32, i32
  }
  func.func @transform_21(%arg0: i32) -> (i32, i32) {
    %c0_i32 = arith.constant 0 : i32
    %c0_i32_0 = arith.constant 0 : i32
    %c0_i32_1 = arith.constant 0 : i32
    return %c0_i32, %c0_i32_0 : i32, i32
  }
  func.func @transform_22(%arg0: i32) -> (i32, i32) {
    %c0_i32 = arith.constant 0 : i32
    %c0_i32_0 = arith.constant 0 : i32
    %c0_i32_1 = arith.constant 0 : i32
    return %c0_i32, %c0_i32_0 : i32, i32
  }
  func.func @transform_23(%arg0: i32) -> (i32, i32, i32) {
    %c0_i32 = arith.constant 0 : i32
    %c0_i32_0 = arith.constant 0 : i32
    %c0_i32_1 = arith.constant 0 : i32
    return %arg0, %c0_i32, %c0_i32_0 : i32, i32, i32
  }
  func.func @transform_24(%arg0: i32) -> (i32, i32, i32) {
    %c0_i32 = arith.constant 0 : i32
    %c0_i32_0 = arith.constant 0 : i32
    %c0_i32_1 = arith.constant 0 : i32
    return %arg0, %c0_i32, %c0_i32_0 : i32, i32, i32
  }
  func.func @transform_25(%arg0: i32) -> (i32, i32, i32) {
    %c0_i32 = arith.constant 0 : i32
    %c0_i32_0 = arith.constant 0 : i32
    %c0_i32_1 = arith.constant 0 : i32
    return %arg0, %c0_i32, %c0_i32_0 : i32, i32, i32
  }
}

</mosaic_0001>

<llo_original>
// kernel: _lambda_.1
$region0: #{_lambda_.1}
  #allocation0 [shape = 'u32[]', space=smem, size = 0x4, offset = 0x4, fixed_abs, tag = 'smem constant byte address 0x4 - core index']
  #allocation1 [shape = 'u32[144,128]{1,0:T(1,128)}', space=vmem, size = 0x12000, scoped, tag = 'internal scratch']
  %s0 = inlined_call_operand.vmem [shape: s32[2,8,1], index: 0, kind: input, shape index: {}]
  %s1 = inlined_call_operand.vmem [shape: s32[2,1,8], index: 1, kind: input, shape index: {}]
  %s2 = inlined_call_operand.vmem [shape: bf16[64,32], index: 2, kind: input, shape index: {}]
  %s3 = inlined_call_operand.vmem [shape: f32[8,32], index: 3, kind: input, shape index: {}]
  %s4 = inlined_call_operand.vmem [shape: f32[1,32], index: 4, kind: input, shape index: {}]
  %s5 = inlined_call_operand.vmem [shape: f32[1,32], index: 5, kind: input, shape index: {}]
  %s6 = inlined_call_operand.vmem [shape: f32[1,32], index: 6, kind: input, shape index: {}]
  %s7 = inlined_call_operand.vmem [shape: bf16[2,32,96], index: 7, kind: input, shape index: {}]
  %s8 = inlined_call_operand.vmem [shape: f32[2,1,96], index: 8, kind: input, shape index: {}]
  %s9 = inlined_call_operand.vmem [shape: bf16[2,32,32], index: 9, kind: input, shape index: {}]
  %s10 = inlined_call_operand.vmem [shape: f32[2,1,32], index: 10, kind: input, shape index: {}]
  %s11 = inlined_call_operand.vmem [shape: f32[2,1,32], index: 11, kind: input, shape index: {}]
  %s12 = inlined_call_operand.vmem [shape: f32[2,1,32], index: 12, kind: input, shape index: {}]
  %s13 = inlined_call_operand.vmem [shape: bf16[2,32,64], index: 13, kind: input, shape index: {}]
  %s14 = inlined_call_operand.vmem [shape: f32[2,1,64], index: 14, kind: input, shape index: {}]
  %s15 = inlined_call_operand.vmem [shape: bf16[2,64,32], index: 15, kind: input, shape index: {}]
  %s16 = inlined_call_operand.vmem [shape: f32[2,1,32], index: 16, kind: input, shape index: {}]
  %s17 = inlined_call_operand.vmem [shape: f32[2,1,32], index: 17, kind: input, shape index: {}]
  %s18 = inlined_call_operand.vmem [shape: f32[2,1,32], index: 18, kind: input, shape index: {}]
  %s19 = inlined_call_operand.vmem [shape: bf16[32,32], index: 19, kind: input, shape index: {}]
  %s20 = inlined_call_operand.vmem [shape: f32[1,32], index: 20, kind: input, shape index: {}]
  %s21 = inlined_call_operand.vmem [shape: bf16[32,2], index: 21, kind: input, shape index: {}]
  %s22 = inlined_call_operand.vmem [shape: f32[1,2], index: 22, kind: input, shape index: {}]
  %s23 = inlined_call_operand.vmem [shape: f32[2,1,1], index: 23, kind: input, shape index: {}]
  %s24 = inlined_call_operand.hbm [shape: f32[2,1,2], index: 24, kind: output, shape index: {0}]
  %s25 = inlined_call_operand.vmem [shape: f32[2,1,1], index: 25, kind: output, shape index: {1}]
  %26 = xla_tuple %s24, %s25
  %s27 = sld [smem:[#allocation0]]
  $region137: #{_lambda_.1} parent=0
    _
  %s29 = ssub.s32 1, %s27
  %s30 = scalar_select 0, %s29, %s27
  $region1: #{_lambda_.1} parent=0
    #allocation2 [shape = 'u8[1024]{0}', space=vmem, size = 0x400, scoped, tag = 'output window, operand 0']
    #allocation3 [shape = 's32[2]{0}', space=sflag, size = 0x8, scoped, tag = 'scoped memory for _lambda_.1']
    %31 = vsyncpa [#allocation3], 0
    %s32 = scalar_lea.sflag [#allocation3], 1
    %33 = vsyncpa %s32, 0
    loop: start=0, step=1, limit=4
    $region2: #{_lambda_.1} parent=1 // loop_pre_header
      _
    $region3: #{_lambda_.1} parent=1 // loop_header
      %s35 = sphi 0, %s39
      %p36 = scmp.ge.s32.totalorder %s35, 4
      %s45 = sphi 0, %s47
      %s48 = sphi 0, %s45
      %s49 = sphi 0, %s48
      %s65 = sphi 0, %s49
      %s71 = sphi 0, %s73
      %s74 = sphi 0, %s71
      %s75 = sphi 0, %s74
      %s91 = sphi 0, %s75
      %s95 = sphi 0, %s95
      %s97 = sphi 0, %s95
      %s98 = sphi 0, %s97
      %s112 = sphi 0, %s98
      %s116 = sphi 0, %s116
      %s118 = sphi 0, %s116
      %s119 = sphi 0, %s118
      %s133 = sphi 0, %s119
      %s137 = sphi 0, %s137
      %s139 = sphi 0, %s137
      %s140 = sphi 0, %s139
      %s154 = sphi 0, %s140
      %s158 = sphi 0, %s158
      %s160 = sphi 0, %s158
      %s161 = sphi 0, %s160
      %s175 = sphi 0, %s161
      %s179 = sphi 0, %s179
      %s181 = sphi 0, %s179
      %s182 = sphi 0, %s181
      %s196 = sphi 0, %s182
      %s200 = sphi 0, %s200
      %s202 = sphi 0, %s200
      %s203 = sphi 0, %s202
      %s217 = sphi 0, %s203
      %s221 = sphi 0, %s221
      %s223 = sphi 0, %s221
      %s224 = sphi 0, %s223
      %s238 = sphi 0, %s224
      %s242 = sphi 0, %s242
      %s244 = sphi 0, %s242
      %s245 = sphi 0, %s244
      %s259 = sphi 0, %s245
      %s263 = sphi 0, %s263
      %s265 = sphi 0, %s263
      %s266 = sphi 0, %s265
      %s280 = sphi 0, %s266
      %s284 = sphi 0, %s284
      %s286 = sphi 0, %s284
      %s287 = sphi 0, %s286
      %s301 = sphi 0, %s287
      %s305 = sphi 0, %s305
      %s307 = sphi 0, %s305
      %s308 = sphi 0, %s307
      %s322 = sphi 0, %s308
      %s326 = sphi 0, %s326
      %s328 = sphi 0, %s326
      %s329 = sphi 0, %s328
      %s343 = sphi 0, %s329
      %s347 = sphi 0, %s347
      %s349 = sphi 0, %s347
      %s350 = sphi 0, %s349
      %s364 = sphi 0, %s350
      %s368 = sphi 0, %s368
      %s370 = sphi 0, %s368
      %s371 = sphi 0, %s370
      %s385 = sphi 0, %s371
      %s389 = sphi 0, %s389
      %s391 = sphi 0, %s389
      %s392 = sphi 0, %s391
      %s406 = sphi 0, %s392
      %s410 = sphi 0, %s410
      %s412 = sphi 0, %s410
      %s413 = sphi 0, %s412
      %s427 = sphi 0, %s413
      %s431 = sphi 0, %s431
      %s433 = sphi 0, %s431
      %s434 = sphi 0, %s433
      %s448 = sphi 0, %s434
      %s452 = sphi 0, %s452
      %s454 = sphi 0, %s452
      %s455 = sphi 0, %s454
      %s469 = sphi 0, %s455
      %s473 = sphi 0, %s473
      %s475 = sphi 0, %s473
      %s476 = sphi 0, %s475
      %s490 = sphi 0, %s476
      %s494 = sphi 0, %s494
      %s496 = sphi 0, %s494
      %s497 = sphi 0, %s496
      %s511 = sphi 0, %s497
      %s515 = sphi 0, %s515
      %s517 = sphi 0, %s515
      %s518 = sphi 0, %s517
      %s532 = sphi 0, %s518
      %s538 = sphi 0, %s540
      %s541 = sphi 0, %s538
      %s542 = sphi 0, %s541
      %s558 = sphi 0, %s542
      %s564 = sphi 0, %s566
      %s567 = sphi 0, %s564
      %s568 = sphi 0, %s567
      %s584 = sphi 0, %s568
      %s590 = sphi 0, %s592
      %s593 = sphi 0, %s590
      %s594 = sphi 0, %s593
      %s610 = sphi 0, %s594
    $region4: #{_lambda_.1} parent=1 // loop_header_branch
      %38 = sbr.rel (%p36) target = $region8
    $region5: #{_lambda_.1} parent=1 // loop_body
      %s40 = ssub.s32 %s35, 1
      %s41 = ssub.s32 %s35, 2
      %s42 = sadd.s32 %s35, 1
      %s43 = ssub.s32 %s35, %s42
      %p44 = scmp.eq.s32.totalorder %s43, 0
      %s46 = sadd.s32 %s45, 1
      %s47 = scalar_select %p44, %s45, %s46
      %p50 = pneg %p44
      %p51 = scmp.eq.s32.totalorder %s35, 1
      %p52 = por %p50, %p51
      %p53 = scmp.ne.s32.totalorder %s45, %s48
      %p54 = scmp.eq.s32.totalorder %s35, 0
      %p55 = por %p53, %p54
      %p56 = scmp.ne.s32.totalorder %s45, %s48
      %p57 = scmp.eq.s32.totalorder %s40, 1
      %p58 = por %p56, %p57
      %p59 = scmp.ne.s32.totalorder %s48, %s49
      %p60 = scmp.eq.s32.totalorder %s40, 0
      %p61 = por %p59, %p60
      %p62 = scmp.ne.s32.totalorder %s48, %s49
      %p63 = scmp.eq.s32.totalorder %s41, 1
      %p64 = por %p62, %p63
      %p66 = scmp.ne.s32.totalorder %s49, %s65
      %p67 = scmp.eq.s32.totalorder %s41, 0
      %p68 = por %p66, %p67
      %s69 = ssub.s32 %s35, %s42
      %p70 = scmp.eq.s32.totalorder %s69, 0
      %s72 = sadd.s32 %s71, 1
      %s73 = scalar_select %p70, %s71, %s72
      %p76 = pneg %p70
      %p77 = scmp.eq.s32.totalorder %s35, 1
      %p78 = por %p76, %p77
      %p79 = scmp.ne.s32.totalorder %s71, %s74
      %p80 = scmp.eq.s32.totalorder %s35, 0
      %p81 = por %p79, %p80
      %p82 = scmp.ne.s32.totalorder %s71, %s74
      %p83 = scmp.eq.s32.totalorder %s40, 1
      %p84 = por %p82, %p83
      %p85 = scmp.ne.s32.totalorder %s74, %s75
      %p86 = scmp.eq.s32.totalorder %s40, 0
      %p87 = por %p85, %p86
      %p88 = scmp.ne.s32.totalorder %s74, %s75
      %p89 = scmp.eq.s32.totalorder %s41, 1
      %p90 = por %p88, %p89
      %p92 = scmp.ne.s32.totalorder %s75, %s91
      %p93 = scmp.eq.s32.totalorder %s41, 0
      %p94 = por %p92, %p93
      %s96 = sadd.s32 %s95, 1
      %p99 = scmp.eq.s32.totalorder %s35, 1
      %p100 = scmp.ne.s32.totalorder %s95, %s97
      %p101 = scmp.eq.s32.totalorder %s35, 0
      %p102 = por %p100, %p101
      %p103 = scmp.ne.s32.totalorder %s95, %s97
      %p104 = scmp.eq.s32.totalorder %s40, 1
      %p105 = por %p103, %p104
      %p106 = scmp.ne.s32.totalorder %s97, %s98
      %p107 = scmp.eq.s32.totalorder %s40, 0
      %p108 = por %p106, %p107
      %p109 = scmp.ne.s32.totalorder %s97, %s98
      %p110 = scmp.eq.s32.totalorder %s41, 1
      %p111 = por %p109, %p110
      %p113 = scmp.ne.s32.totalorder %s98, %s112
      %p114 = scmp.eq.s32.totalorder %s41, 0
      %p115 = por %p113, %p114
      %s117 = sadd.s32 %s116, 1
      %p120 = scmp.eq.s32.totalorder %s35, 1
      %p121 = scmp.ne.s32.totalorder %s116, %s118
      %p122 = scmp.eq.s32.totalorder %s35, 0
      %p123 = por %p121, %p122
      %p124 = scmp.ne.s32.totalorder %s116, %s118
      %p125 = scmp.eq.s32.totalorder %s40, 1
      %p126 = por %p124, %p125
      %p127 = scmp.ne.s32.totalorder %s118, %s119
      %p128 = scmp.eq.s32.totalorder %s40, 0
      %p129 = por %p127, %p128
      %p130 = scmp.ne.s32.totalorder %s118, %s119
      %p131 = scmp.eq.s32.totalorder %s41, 1
      %p132 = por %p130, %p131
      %p134 = scmp.ne.s32.totalorder %s119, %s133
      %p135 = scmp.eq.s32.totalorder %s41, 0
      %p136 = por %p134, %p135
      %s138 = sadd.s32 %s137, 1
      %p141 = scmp.eq.s32.totalorder %s35, 1
      %p142 = scmp.ne.s32.totalorder %s137, %s139
      %p143 = scmp.eq.s32.totalorder %s35, 0
      %p144 = por %p142, %p143
      %p145 = scmp.ne.s32.totalorder %s137, %s139
      %p146 = scmp.eq.s32.totalorder %s40, 1
      %p147 = por %p145, %p146
      %p148 = scmp.ne.s32.totalorder %s139, %s140
      %p149 = scmp.eq.s32.totalorder %s40, 0
      %p150 = por %p148, %p149
      %p151 = scmp.ne.s32.totalorder %s139, %s140
      %p152 = scmp.eq.s32.totalorder %s41, 1
      %p153 = por %p151, %p152
      %p155 = scmp.ne.s32.totalorder %s140, %s154
      %p156 = scmp.eq.s32.totalorder %s41, 0
      %p157 = por %p155, %p156
      %s159 = sadd.s32 %s158, 1
      %p162 = scmp.eq.s32.totalorder %s35, 1
      %p163 = scmp.ne.s32.totalorder %s158, %s160
      %p164 = scmp.eq.s32.totalorder %s35, 0
      %p165 = por %p163, %p164
      %p166 = scmp.ne.s32.totalorder %s158, %s160
      %p167 = scmp.eq.s32.totalorder %s40, 1
      %p168 = por %p166, %p167
      %p169 = scmp.ne.s32.totalorder %s160, %s161
      %p170 = scmp.eq.s32.totalorder %s40, 0
      %p171 = por %p169, %p170
      %p172 = scmp.ne.s32.totalorder %s160, %s161
      %p173 = scmp.eq.s32.totalorder %s41, 1
      %p174 = por %p172, %p173
      %p176 = scmp.ne.s32.totalorder %s161, %s175
      %p177 = scmp.eq.s32.totalorder %s41, 0
      %p178 = por %p176, %p177
      %s180 = sadd.s32 %s179, 1
      %p183 = scmp.eq.s32.totalorder %s35, 1
      %p184 = scmp.ne.s32.totalorder %s179, %s181
      %p185 = scmp.eq.s32.totalorder %s35, 0
      %p186 = por %p184, %p185
      %p187 = scmp.ne.s32.totalorder %s179, %s181
      %p188 = scmp.eq.s32.totalorder %s40, 1
      %p189 = por %p187, %p188
      %p190 = scmp.ne.s32.totalorder %s181, %s182
      %p191 = scmp.eq.s32.totalorder %s40, 0
      %p192 = por %p190, %p191
      %p193 = scmp.ne.s32.totalorder %s181, %s182
      %p194 = scmp.eq.s32.totalorder %s41, 1
      %p195 = por %p193, %p194
      %p197 = scmp.ne.s32.totalorder %s182, %s196
      %p198 = scmp.eq.s32.totalorder %s41, 0
      %p199 = por %p197, %p198
      %s201 = sadd.s32 %s200, 1
      %p204 = scmp.eq.s32.totalorder %s35, 1
      %p205 = scmp.ne.s32.totalorder %s200, %s202
      %p206 = scmp.eq.s32.totalorder %s35, 0
      %p207 = por %p205, %p206
      %p208 = scmp.ne.s32.totalorder %s200, %s202
      %p209 = scmp.eq.s32.totalorder %s40, 1
      %p210 = por %p208, %p209
      %p211 = scmp.ne.s32.totalorder %s202, %s203
      %p212 = scmp.eq.s32.totalorder %s40, 0
      %p213 = por %p211, %p212
      %p214 = scmp.ne.s32.totalorder %s202, %s203
      %p215 = scmp.eq.s32.totalorder %s41, 1
      %p216 = por %p214, %p215
      %p218 = scmp.ne.s32.totalorder %s203, %s217
      %p219 = scmp.eq.s32.totalorder %s41, 0
      %p220 = por %p218, %p219
      %s222 = sadd.s32 %s221, 1
      %p225 = scmp.eq.s32.totalorder %s35, 1
      %p226 = scmp.ne.s32.totalorder %s221, %s223
      %p227 = scmp.eq.s32.totalorder %s35, 0
      %p228 = por %p226, %p227
      %p229 = scmp.ne.s32.totalorder %s221, %s223
      %p230 = scmp.eq.s32.totalorder %s40, 1
      %p231 = por %p229, %p230
      %p232 = scmp.ne.s32.totalorder %s223, %s224
      %p233 = scmp.eq.s32.totalorder %s40, 0
      %p234 = por %p232, %p233
      %p235 = scmp.ne.s32.totalorder %s223, %s224
      %p236 = scmp.eq.s32.totalorder %s41, 1
      %p237 = por %p235, %p236
      %p239 = scmp.ne.s32.totalorder %s224, %s238
      %p240 = scmp.eq.s32.totalorder %s41, 0
      %p241 = por %p239, %p240
      %s243 = sadd.s32 %s242, 1
      %p246 = scmp.eq.s32.totalorder %s35, 1
      %p247 = scmp.ne.s32.totalorder %s242, %s244
      %p248 = scmp.eq.s32.totalorder %s35, 0
      %p249 = por %p247, %p248
      %p250 = scmp.ne.s32.totalorder %s242, %s244
      %p251 = scmp.eq.s32.totalorder %s40, 1
      %p252 = por %p250, %p251
      %p253 = scmp.ne.s32.totalorder %s244, %s245
      %p254 = scmp.eq.s32.totalorder %s40, 0
      %p255 = por %p253, %p254
      %p256 = scmp.ne.s32.totalorder %s244, %s245
      %p257 = scmp.eq.s32.totalorder %s41, 1
      %p258 = por %p256, %p257
      %p260 = scmp.ne.s32.totalorder %s245, %s259
      %p261 = scmp.eq.s32.totalorder %s41, 0
      %p262 = por %p260, %p261
      %s264 = sadd.s32 %s263, 1
      %p267 = scmp.eq.s32.totalorder %s35, 1
      %p268 = scmp.ne.s32.totalorder %s263, %s265
      %p269 = scmp.eq.s32.totalorder %s35, 0
      %p270 = por %p268, %p269
      %p271 = scmp.ne.s32.totalorder %s263, %s265
      %p272 = scmp.eq.s32.totalorder %s40, 1
      %p273 = por %p271, %p272
      %p274 = scmp.ne.s32.totalorder %s265, %s266
      %p275 = scmp.eq.s32.totalorder %s40, 0
      %p276 = por %p274, %p275
      %p277 = scmp.ne.s32.totalorder %s265, %s266
      %p278 = scmp.eq.s32.totalorder %s41, 1
      %p279 = por %p277, %p278
      %p281 = scmp.ne.s32.totalorder %s266, %s280
      %p282 = scmp.eq.s32.totalorder %s41, 0
      %p283 = por %p281, %p282
      %s285 = sadd.s32 %s284, 1
      %p288 = scmp.eq.s32.totalorder %s35, 1
      %p289 = scmp.ne.s32.totalorder %s284, %s286
      %p290 = scmp.eq.s32.totalorder %s35, 0
      %p291 = por %p289, %p290
      %p292 = scmp.ne.s32.totalorder %s284, %s286
      %p293 = scmp.eq.s32.totalorder %s40, 1
      %p294 = por %p292, %p293
      %p295 = scmp.ne.s32.totalorder %s286, %s287
      %p296 = scmp.eq.s32.totalorder %s40, 0
      %p297 = por %p295, %p296
      %p298 = scmp.ne.s32.totalorder %s286, %s287
      %p299 = scmp.eq.s32.totalorder %s41, 1
      %p300 = por %p298, %p299
      %p302 = scmp.ne.s32.totalorder %s287, %s301
      %p303 = scmp.eq.s32.totalorder %s41, 0
      %p304 = por %p302, %p303
      %s306 = sadd.s32 %s305, 1
      %p309 = scmp.eq.s32.totalorder %s35, 1
      %p310 = scmp.ne.s32.totalorder %s305, %s307
      %p311 = scmp.eq.s32.totalorder %s35, 0
      %p312 = por %p310, %p311
      %p313 = scmp.ne.s32.totalorder %s305, %s307
      %p314 = scmp.eq.s32.totalorder %s40, 1
      %p315 = por %p313, %p314
      %p316 = scmp.ne.s32.totalorder %s307, %s308
      %p317 = scmp.eq.s32.totalorder %s40, 0
      %p318 = por %p316, %p317
      %p319 = scmp.ne.s32.totalorder %s307, %s308
      %p320 = scmp.eq.s32.totalorder %s41, 1
      %p321 = por %p319, %p320
      %p323 = scmp.ne.s32.totalorder %s308, %s322
      %p324 = scmp.eq.s32.totalorder %s41, 0
      %p325 = por %p323, %p324
      %s327 = sadd.s32 %s326, 1
      %p330 = scmp.eq.s32.totalorder %s35, 1
      %p331 = scmp.ne.s32.totalorder %s326, %s328
      %p332 = scmp.eq.s32.totalorder %s35, 0
      %p333 = por %p331, %p332
      %p334 = scmp.ne.s32.totalorder %s326, %s328
      %p335 = scmp.eq.s32.totalorder %s40, 1
      %p336 = por %p334, %p335
      %p337 = scmp.ne.s32.totalorder %s328, %s329
      %p338 = scmp.eq.s32.totalorder %s40, 0
      %p339 = por %p337, %p338
      %p340 = scmp.ne.s32.totalorder %s328, %s329
      %p341 = scmp.eq.s32.totalorder %s41, 1
      %p342 = por %p340, %p341
      %p344 = scmp.ne.s32.totalorder %s329, %s343
      %p345 = scmp.eq.s32.totalorder %s41, 0
      %p346 = por %p344, %p345
      %s348 = sadd.s32 %s347, 1
      %p351 = scmp.eq.s32.totalorder %s35, 1
      %p352 = scmp.ne.s32.totalorder %s347, %s349
      %p353 = scmp.eq.s32.totalorder %s35, 0
      %p354 = por %p352, %p353
      %p355 = scmp.ne.s32.totalorder %s347, %s349
      %p356 = scmp.eq.s32.totalorder %s40, 1
      %p357 = por %p355, %p356
      %p358 = scmp.ne.s32.totalorder %s349, %s350
      %p359 = scmp.eq.s32.totalorder %s40, 0
      %p360 = por %p358, %p359
      %p361 = scmp.ne.s32.totalorder %s349, %s350
      %p362 = scmp.eq.s32.totalorder %s41, 1
      %p363 = por %p361, %p362
      %p365 = scmp.ne.s32.totalorder %s350, %s364
      %p366 = scmp.eq.s32.totalorder %s41, 0
      %p367 = por %p365, %p366
      %s369 = sadd.s32 %s368, 1
      %p372 = scmp.eq.s32.totalorder %s35, 1
      %p373 = scmp.ne.s32.totalorder %s368, %s370
      %p374 = scmp.eq.s32.totalorder %s35, 0
      %p375 = por %p373, %p374
      %p376 = scmp.ne.s32.totalorder %s368, %s370
      %p377 = scmp.eq.s32.totalorder %s40, 1
      %p378 = por %p376, %p377
      %p379 = scmp.ne.s32.totalorder %s370, %s371
      %p380 = scmp.eq.s32.totalorder %s40, 0
      %p381 = por %p379, %p380
      %p382 = scmp.ne.s32.totalorder %s370, %s371
      %p383 = scmp.eq.s32.totalorder %s41, 1
      %p384 = por %p382, %p383
      %p386 = scmp.ne.s32.totalorder %s371, %s385
      %p387 = scmp.eq.s32.totalorder %s41, 0
      %p388 = por %p386, %p387
      %s390 = sadd.s32 %s389, 1
      %p393 = scmp.eq.s32.totalorder %s35, 1
      %p394 = scmp.ne.s32.totalorder %s389, %s391
      %p395 = scmp.eq.s32.totalorder %s35, 0
      %p396 = por %p394, %p395
      %p397 = scmp.ne.s32.totalorder %s389, %s391
      %p398 = scmp.eq.s32.totalorder %s40, 1
      %p399 = por %p397, %p398
      %p400 = scmp.ne.s32.totalorder %s391, %s392
      %p401 = scmp.eq.s32.totalorder %s40, 0
      %p402 = por %p400, %p401
      %p403 = scmp.ne.s32.totalorder %s391, %s392
      %p404 = scmp.eq.s32.totalorder %s41, 1
      %p405 = por %p403, %p404
      %p407 = scmp.ne.s32.totalorder %s392, %s406
      %p408 = scmp.eq.s32.totalorder %s41, 0
      %p409 = por %p407, %p408
      %s411 = sadd.s32 %s410, 1
      %p414 = scmp.eq.s32.totalorder %s35, 1
      %p415 = scmp.ne.s32.totalorder %s410, %s412
      %p416 = scmp.eq.s32.totalorder %s35, 0
      %p417 = por %p415, %p416
      %p418 = scmp.ne.s32.totalorder %s410, %s412
      %p419 = scmp.eq.s32.totalorder %s40, 1
      %p420 = por %p418, %p419
      %p421 = scmp.ne.s32.totalorder %s412, %s413
      %p422 = scmp.eq.s32.totalorder %s40, 0
      %p423 = por %p421, %p422
      %p424 = scmp.ne.s32.totalorder %s412, %s413
      %p425 = scmp.eq.s32.totalorder %s41, 1
      %p426 = por %p424, %p425
      %p428 = scmp.ne.s32.totalorder %s413, %s427
      %p429 = scmp.eq.s32.totalorder %s41, 0
      %p430 = por %p428, %p429
      %s432 = sadd.s32 %s431, 1
      %p435 = scmp.eq.s32.totalorder %s35, 1
      %p436 = scmp.ne.s32.totalorder %s431, %s433
      %p437 = scmp.eq.s32.totalorder %s35, 0
      %p438 = por %p436, %p437
      %p439 = scmp.ne.s32.totalorder %s431, %s433
      %p440 = scmp.eq.s32.totalorder %s40, 1
      %p441 = por %p439, %p440
      %p442 = scmp.ne.s32.totalorder %s433, %s434
      %p443 = scmp.eq.s32.totalorder %s40, 0
      %p444 = por %p442, %p443
      %p445 = scmp.ne.s32.totalorder %s433, %s434
      %p446 = scmp.eq.s32.totalorder %s41, 1
      %p447 = por %p445, %p446
      %p449 = scmp.ne.s32.totalorder %s434, %s448
      %p450 = scmp.eq.s32.totalorder %s41, 0
      %p451 = por %p449, %p450
      %s453 = sadd.s32 %s452, 1
      %p456 = scmp.eq.s32.totalorder %s35, 1
      %p457 = scmp.ne.s32.totalorder %s452, %s454
      %p458 = scmp.eq.s32.totalorder %s35, 0
      %p459 = por %p457, %p458
      %p460 = scmp.ne.s32.totalorder %s452, %s454
      %p461 = scmp.eq.s32.totalorder %s40, 1
      %p462 = por %p460, %p461
      %p463 = scmp.ne.s32.totalorder %s454, %s455
      %p464 = scmp.eq.s32.totalorder %s40, 0
      %p465 = por %p463, %p464
      %p466 = scmp.ne.s32.totalorder %s454, %s455
      %p467 = scmp.eq.s32.totalorder %s41, 1
      %p468 = por %p466, %p467
      %p470 = scmp.ne.s32.totalorder %s455, %s469
      %p471 = scmp.eq.s32.totalorder %s41, 0
      %p472 = por %p470, %p471
      %s474 = sadd.s32 %s473, 1
      %p477 = scmp.eq.s32.totalorder %s35, 1
      %p478 = scmp.ne.s32.totalorder %s473, %s475
      %p479 = scmp.eq.s32.totalorder %s35, 0
      %p480 = por %p478, %p479
      %p481 = scmp.ne.s32.totalorder %s473, %s475
      %p482 = scmp.eq.s32.totalorder %s40, 1
      %p483 = por %p481, %p482
      %p484 = scmp.ne.s32.totalorder %s475, %s476
      %p485 = scmp.eq.s32.totalorder %s40, 0
      %p486 = por %p484, %p485
      %p487 = scmp.ne.s32.totalorder %s475, %s476
      %p488 = scmp.eq.s32.totalorder %s41, 1
      %p489 = por %p487, %p488
      %p491 = scmp.ne.s32.totalorder %s476, %s490
      %p492 = scmp.eq.s32.totalorder %s41, 0
      %p493 = por %p491, %p492
      %s495 = sadd.s32 %s494, 1
      %p498 = scmp.eq.s32.totalorder %s35, 1
      %p499 = scmp.ne.s32.totalorder %s494, %s496
      %p500 = scmp.eq.s32.totalorder %s35, 0
      %p501 = por %p499, %p500
      %p502 = scmp.ne.s32.totalorder %s494, %s496
      %p503 = scmp.eq.s32.totalorder %s40, 1
      %p504 = por %p502, %p503
      %p505 = scmp.ne.s32.totalorder %s496, %s497
      %p506 = scmp.eq.s32.totalorder %s40, 0
      %p507 = por %p505, %p506
      %p508 = scmp.ne.s32.totalorder %s496, %s497
      %p509 = scmp.eq.s32.totalorder %s41, 1
      %p510 = por %p508, %p509
      %p512 = scmp.ne.s32.totalorder %s497, %s511
      %p513 = scmp.eq.s32.totalorder %s41, 0
      %p514 = por %p512, %p513
      %s516 = sadd.s32 %s515, 1
      %p519 = scmp.eq.s32.totalorder %s35, 1
      %p520 = scmp.ne.s32.totalorder %s515, %s517
      %p521 = scmp.eq.s32.totalorder %s35, 0
      %p522 = por %p520, %p521
      %p523 = scmp.ne.s32.totalorder %s515, %s517
      %p524 = scmp.eq.s32.totalorder %s40, 1
      %p525 = por %p523, %p524
      %p526 = scmp.ne.s32.totalorder %s517, %s518
      %p527 = scmp.eq.s32.totalorder %s40, 0
      %p528 = por %p526, %p527
      %p529 = scmp.ne.s32.totalorder %s517, %s518
      %p530 = scmp.eq.s32.totalorder %s41, 1
      %p531 = por %p529, %p530
      %p533 = scmp.ne.s32.totalorder %s518, %s532
      %p534 = scmp.eq.s32.totalorder %s41, 0
      %p535 = por %p533, %p534
      %s536 = ssub.s32 %s35, %s42
      %p537 = scmp.eq.s32.totalorder %s536, 0
      %s539 = sadd.s32 %s538, 1
      %s540 = scalar_select %p537, %s538, %s539
      %p543 = pneg %p537
      %p544 = scmp.eq.s32.totalorder %s35, 1
      %p545 = por %p543, %p544
      %p546 = scmp.ne.s32.totalorder %s538, %s541
      %p547 = scmp.eq.s32.totalorder %s35, 0
      %p548 = por %p546, %p547
      %p549 = scmp.ne.s32.totalorder %s538, %s541
      %p550 = scmp.eq.s32.totalorder %s40, 1
      %p551 = por %p549, %p550
      %p552 = scmp.ne.s32.totalorder %s541, %s542
      %p553 = scmp.eq.s32.totalorder %s40, 0
      %p554 = por %p552, %p553
      %p555 = scmp.ne.s32.totalorder %s541, %s542
      %p556 = scmp.eq.s32.totalorder %s41, 1
      %p557 = por %p555, %p556
      %p559 = scmp.ne.s32.totalorder %s542, %s558
      %p560 = scmp.eq.s32.totalorder %s41, 0
      %p561 = por %p559, %p560
      %s562 = ssub.s32 %s35, %s42
      %p563 = scmp.eq.s32.totalorder %s562, 0
      %s565 = sadd.s32 %s564, 1
      %s566 = scalar_select %p563, %s564, %s565
      %p569 = pneg %p563
      %p570 = scmp.eq.s32.totalorder %s35, 1
      %p571 = por %p569, %p570
      %p572 = scmp.ne.s32.totalorder %s564, %s567
      %p573 = scmp.eq.s32.totalorder %s35, 0
      %p574 = por %p572, %p573
      %p575 = scmp.ne.s32.totalorder %s564, %s567
      %p576 = scmp.eq.s32.totalorder %s40, 1
      %p577 = por %p575, %p576
      %p578 = scmp.ne.s32.totalorder %s567, %s568
      %p579 = scmp.eq.s32.totalorder %s40, 0
      %p580 = por %p578, %p579
      %p581 = scmp.ne.s32.totalorder %s567, %s568
      %p582 = scmp.eq.s32.totalorder %s41, 1
      %p583 = por %p581, %p582
      %p585 = scmp.ne.s32.totalorder %s568, %s584
      %p586 = scmp.eq.s32.totalorder %s41, 0
      %p587 = por %p585, %p586
      %s588 = ssub.s32 %s35, %s42
      %p589 = scmp.eq.s32.totalorder %s588, 0
      %s591 = sadd.s32 %s590, 1
      %s592 = scalar_select %p589, %s590, %s591
      %p595 = pneg %p589
      %p596 = scmp.eq.s32.totalorder %s35, 1
      %p597 = por %p595, %p596
      %p598 = scmp.ne.s32.totalorder %s590, %s593
      %p599 = scmp.eq.s32.totalorder %s35, 0
      %p600 = por %p598, %p599
      %p601 = scmp.ne.s32.totalorder %s590, %s593
      %p602 = scmp.eq.s32.totalorder %s40, 1
      %p603 = por %p601, %p602
      %p604 = scmp.ne.s32.totalorder %s593, %s594
      %p605 = scmp.eq.s32.totalorder %s40, 0
      %p606 = por %p604, %p605
      %p607 = scmp.ne.s32.totalorder %s593, %s594
      %p608 = scmp.eq.s32.totalorder %s41, 1
      %p609 = por %p607, %p608
      %p611 = scmp.ne.s32.totalorder %s594, %s610
      %p612 = scmp.eq.s32.totalorder %s41, 0
      %p613 = por %p611, %p612
      %p614 = scmp.le.s32.totalorder 1, %s35
      %p615 = scmp.lt.s32.totalorder %s35, 3
      %p616 = pnand %p614, %p615
      %p617 = pneg %p616
      // Predicated region
      $region9: #{_lambda_.1} parent=5 // pred_check
        _
      $region10: #{_lambda_.1} parent=5 // pred_check_branch
        %619 = sbr.rel (%p616) target = $region12
      $region11: #{_lambda_.1} parent=5 // pred_region
        %s620 = ssub.s32 %s35, 1
        // Predicated region
        $region13: #{_lambda_.1} parent=11 // pred_check
          %p621 = pneg %p108
        $region14: #{_lambda_.1} parent=11 // pred_check_branch
          %623 = sbr.rel (%p621) target = $region16
        $region15: #{_lambda_.1} parent=11 // pred_region
          _
        $region16: #{_lambda_.1} parent=11 // pred_fallthru
          _
        // Predicated region
        $region17: #{_lambda_.1} parent=11 // pred_check
          %p624 = pneg %p129
        $region18: #{_lambda_.1} parent=11 // pred_check_branch
          %626 = sbr.rel (%p624) target = $region20
        $region19: #{_lambda_.1} parent=11 // pred_region
          _
        $region20: #{_lambda_.1} parent=11 // pred_fallthru
          _
        // Predicated region
        $region21: #{_lambda_.1} parent=11 // pred_check
          %p627 = pneg %p150
        $region22: #{_lambda_.1} parent=11 // pred_check_branch
          %629 = sbr.rel (%p627) target = $region24
        $region23: #{_lambda_.1} parent=11 // pred_region
          _
        $region24: #{_lambda_.1} parent=11 // pred_fallthru
          _
        // Predicated region
        $region25: #{_lambda_.1} parent=11 // pred_check
          %p630 = pneg %p171
        $region26: #{_lambda_.1} parent=11 // pred_check_branch
          %632 = sbr.rel (%p630) target = $region28
        $region27: #{_lambda_.1} parent=11 // pred_region
          _
        $region28: #{_lambda_.1} parent=11 // pred_fallthru
          _
        // Predicated region
        $region29: #{_lambda_.1} parent=11 // pred_check
          %p633 = pneg %p192
        $region30: #{_lambda_.1} parent=11 // pred_check_branch
          %635 = sbr.rel (%p633) target = $region32
        $region31: #{_lambda_.1} parent=11 // pred_region
          _
        $region32: #{_lambda_.1} parent=11 // pred_fallthru
          _
        // Predicated region
        $region33: #{_lambda_.1} parent=11 // pred_check
          %p636 = pneg %p213
        $region34: #{_lambda_.1} parent=11 // pred_check_branch
          %638 = sbr.rel (%p636) target = $region36
        $region35: #{_lambda_.1} parent=11 // pred_region
          _
        $region36: #{_lambda_.1} parent=11 // pred_fallthru
          _
        // Predicated region
        $region37: #{_lambda_.1} parent=11 // pred_check
          %p639 = pneg %p234
        $region38: #{_lambda_.1} parent=11 // pred_check_branch
          %641 = sbr.rel (%p639) target = $region40
        $region39: #{_lambda_.1} parent=11 // pred_region
          _
        $region40: #{_lambda_.1} parent=11 // pred_fallthru
          _
        // Predicated region
        $region41: #{_lambda_.1} parent=11 // pred_check
          %p642 = pneg %p255
        $region42: #{_lambda_.1} parent=11 // pred_check_branch
          %644 = sbr.rel (%p642) target = $region44
        $region43: #{_lambda_.1} parent=11 // pred_region
          _
        $region44: #{_lambda_.1} parent=11 // pred_fallthru
          _
        // Predicated region
        $region45: #{_lambda_.1} parent=11 // pred_check
          %p645 = pneg %p276
        $region46: #{_lambda_.1} parent=11 // pred_check_branch
          %647 = sbr.rel (%p645) target = $region48
        $region47: #{_lambda_.1} parent=11 // pred_region
          _
        $region48: #{_lambda_.1} parent=11 // pred_fallthru
          _
        // Predicated region
        $region49: #{_lambda_.1} parent=11 // pred_check
          %p648 = pneg %p297
        $region50: #{_lambda_.1} parent=11 // pred_check_branch
          %650 = sbr.rel (%p648) target = $region52
        $region51: #{_lambda_.1} parent=11 // pred_region
          _
        $region52: #{_lambda_.1} parent=11 // pred_fallthru
          _
        // Predicated region
        $region53: #{_lambda_.1} parent=11 // pred_check
          %p651 = pneg %p318
        $region54: #{_lambda_.1} parent=11 // pred_check_branch
          %653 = sbr.rel (%p651) target = $region56
        $region55: #{_lambda_.1} parent=11 // pred_region
          _
        $region56: #{_lambda_.1} parent=11 // pred_fallthru
          _
        // Predicated region
        $region57: #{_lambda_.1} parent=11 // pred_check
          %p654 = pneg %p339
        $region58: #{_lambda_.1} parent=11 // pred_check_branch
          %656 = sbr.rel (%p654) target = $region60
        $region59: #{_lambda_.1} parent=11 // pred_region
          _
        $region60: #{_lambda_.1} parent=11 // pred_fallthru
          _
        // Predicated region
        $region61: #{_lambda_.1} parent=11 // pred_check
          %p657 = pneg %p360
        $region62: #{_lambda_.1} parent=11 // pred_check_branch
          %659 = sbr.rel (%p657) target = $region64
        $region63: #{_lambda_.1} parent=11 // pred_region
          _
        $region64: #{_lambda_.1} parent=11 // pred_fallthru
          _
        // Predicated region
        $region65: #{_lambda_.1} parent=11 // pred_check
          %p660 = pneg %p381
        $region66: #{_lambda_.1} parent=11 // pred_check_branch
          %662 = sbr.rel (%p660) target = $region68
        $region67: #{_lambda_.1} parent=11 // pred_region
          _
        $region68: #{_lambda_.1} parent=11 // pred_fallthru
          _
        // Predicated region
        $region69: #{_lambda_.1} parent=11 // pred_check
          %p663 = pneg %p402
        $region70: #{_lambda_.1} parent=11 // pred_check_branch
          %665 = sbr.rel (%p663) target = $region72
        $region71: #{_lambda_.1} parent=11 // pred_region
          _
        $region72: #{_lambda_.1} parent=11 // pred_fallthru
          _
        // Predicated region
        $region73: #{_lambda_.1} parent=11 // pred_check
          %p666 = pneg %p423
        $region74: #{_lambda_.1} parent=11 // pred_check_branch
          %668 = sbr.rel (%p666) target = $region76
        $region75: #{_lambda_.1} parent=11 // pred_region
          _
        $region76: #{_lambda_.1} parent=11 // pred_fallthru
          _
        // Predicated region
        $region77: #{_lambda_.1} parent=11 // pred_check
          %p669 = pneg %p444
        $region78: #{_lambda_.1} parent=11 // pred_check_branch
          %671 = sbr.rel (%p669) target = $region80
        $region79: #{_lambda_.1} parent=11 // pred_region
          _
        $region80: #{_lambda_.1} parent=11 // pred_fallthru
          _
        // Predicated region
        $region81: #{_lambda_.1} parent=11 // pred_check
          %p672 = pneg %p465
        $region82: #{_lambda_.1} parent=11 // pred_check_branch
          %674 = sbr.rel (%p672) target = $region84
        $region83: #{_lambda_.1} parent=11 // pred_region
          _
        $region84: #{_lambda_.1} parent=11 // pred_fallthru
          _
        // Predicated region
        $region85: #{_lambda_.1} parent=11 // pred_check
          %p675 = pneg %p486
        $region86: #{_lambda_.1} parent=11 // pred_check_branch
          %677 = sbr.rel (%p675) target = $region88
        $region87: #{_lambda_.1} parent=11 // pred_region
          _
        $region88: #{_lambda_.1} parent=11 // pred_fallthru
          _
        // Predicated region
        $region89: #{_lambda_.1} parent=11 // pred_check
          %p678 = pneg %p507
        $region90: #{_lambda_.1} parent=11 // pred_check_branch
          %680 = sbr.rel (%p678) target = $region92
        $region91: #{_lambda_.1} parent=11 // pred_region
          _
        $region92: #{_lambda_.1} parent=11 // pred_fallthru
          _
        // Predicated region
        $region93: #{_lambda_.1} parent=11 // pred_check
          %p681 = pneg %p528
        $region94: #{_lambda_.1} parent=11 // pred_check_branch
          %683 = sbr.rel (%p681) target = $region96
        $region95: #{_lambda_.1} parent=11 // pred_region
          _
        $region96: #{_lambda_.1} parent=11 // pred_fallthru
          _
      $region12: #{_lambda_.1} parent=5 // pred_fallthru
        _
      %p684 = scmp.lt.s32.totalorder %s35, 2
      // Predicated region
      $region97: #{_lambda_.1} parent=5 // pred_check
        %p685 = pneg %p684
      $region98: #{_lambda_.1} parent=5 // pred_check_branch
        %687 = sbr.rel (%p685) target = $region100
      $region99: #{_lambda_.1} parent=5 // pred_region
        // Predicated region
        $region101: #{_lambda_.1} parent=99 // pred_check
          %p688 = pneg %p55
        $region102: #{_lambda_.1} parent=99 // pred_check_branch
          %690 = sbr.rel (%p688) target = $region104
        $region103: #{_lambda_.1} parent=99 // pred_region
          %p691 = scmp.lt.s32.totalorder %s35, 1
          %s692 = scalar_select %p691, %s35, 1
          %s693 = smul.addr %s692, 8
          %s694 = scalar_lea.vmem %s0, %s693
        $region104: #{_lambda_.1} parent=99 // pred_fallthru
          _
        // Predicated region
        $region105: #{_lambda_.1} parent=99 // pred_check
          %p695 = pneg %p81
        $region106: #{_lambda_.1} parent=99 // pred_check_branch
          %697 = sbr.rel (%p695) target = $region108
        $region107: #{_lambda_.1} parent=99 // pred_region
          %p698 = scmp.lt.s32.totalorder %s35, 1
          %s699 = scalar_select %p698, %s35, 1
          %s700 = scalar_lea.vmem %s1, %s699
        $region108: #{_lambda_.1} parent=99 // pred_fallthru
          _
        // Predicated region
        $region109: #{_lambda_.1} parent=99 // pred_check
          %p701 = pneg %p548
        $region110: #{_lambda_.1} parent=99 // pred_check_branch
          %703 = sbr.rel (%p701) target = $region112
        $region111: #{_lambda_.1} parent=99 // pred_region
          %p704 = scmp.lt.s32.totalorder %s35, 1
          %s705 = scalar_select %p704, %s35, 1
          %s706 = scalar_lea.vmem %s23, %s705
        $region112: #{_lambda_.1} parent=99 // pred_fallthru
          _
      $region100: #{_lambda_.1} parent=5 // pred_fallthru
        _
      %p707 = scmp.le.s32.totalorder 1, %s35
      %p708 = scmp.lt.s32.totalorder %s35, 3
      %p709 = pnand %p707, %p708
      %p710 = pneg %p709
      // Predicated region
      $region113: #{_lambda_.1} parent=5 // pred_check
        _
      $region114: #{_lambda_.1} parent=5 // pred_check_branch
        %712 = sbr.rel (%p709) target = $region116
      $region115: #{_lambda_.1} parent=5 // pred_region
        %s713 = ssub.s32 %s35, 1
        %p714 = scmp.lt.s32.totalorder %s40, 1
        %s715 = scalar_select %p714, %s40, 1
        %s716 = smul.addr %s715, 8
        %s717 = scalar_lea.vmem %s0, %s716
        %p718 = pneg %p61
        %p719 = pneg %p58
        %p720 = scmp.lt.s32.totalorder %s40, 1
        %s721 = scalar_select %p720, %s40, 1
        %s722 = scalar_lea.vmem %s1, %s721
        %p723 = pneg %p87
        %p724 = pneg %p84
        %p725 = pneg %p108
        %p726 = pneg %p105
        %p727 = pneg %p129
        %p728 = pneg %p126
        %p729 = pneg %p150
        %p730 = pneg %p147
        %p731 = pneg %p171
        %p732 = pneg %p168
        %p733 = pneg %p192
        %p734 = pneg %p189
        %p735 = pneg %p213
        %p736 = pneg %p210
        %p737 = pneg %p234
        %p738 = pneg %p231
        %p739 = pneg %p255
        %p740 = pneg %p252
        %p741 = pneg %p276
        %p742 = pneg %p273
        %p743 = pneg %p297
        %p744 = pneg %p294
        %p745 = pneg %p318
        %p746 = pneg %p315
        %p747 = pneg %p339
        %p748 = pneg %p336
        %p749 = pneg %p360
        %p750 = pneg %p357
        %p751 = pneg %p381
        %p752 = pneg %p378
        %p753 = pneg %p402
        %p754 = pneg %p399
        %p755 = pneg %p423
        %p756 = pneg %p420
        %p757 = pneg %p444
        %p758 = pneg %p441
        %p759 = pneg %p465
        %p760 = pneg %p462
        %p761 = pneg %p486
        %p762 = pneg %p483
        %p763 = pneg %p507
        %p764 = pneg %p504
        %p765 = pneg %p528
        %p766 = pneg %p525
        %p767 = scmp.lt.s32.totalorder %s40, 1
        %s768 = scalar_select %p767, %s40, 1
        %s769 = scalar_lea.vmem %s23, %s768
        %p770 = pneg %p554
        %p771 = pneg %p551
        %p772 = pneg %p580
        %p773 = pneg %p577
        %s774 = sand.u32 %s567, 1
        %s775 = scalar_lea.sflag [#allocation3], %s774
        %s776 = sand.u32 %s567, 1
        %s777 = scalar_lea.vmem [#allocation2], %s776
        %p778 = pneg %p606
        %p779 = pneg %p603
        %p780 = scmp.lt.s32.totalorder %s40, 1
        %s781 = scalar_select %p780, %s40, 1
        %s782 = scalar_lea.vmem %s25, %s781
        %p783 = scmp.lt.s32.totalorder %s40, 1
        %s784 = scalar_select %p783, %s40, 1
        %s785 = smul.addr %s784, 8
        %s786 = scalar_lea.vmem %s0, %s785
        %p787 = scmp.lt.s32.totalorder %s40, 1
        %s788 = scalar_select %p787, %s40, 1
        %s789 = scalar_lea.vmem %s1, %s788
        %p790 = scmp.lt.s32.totalorder %s40, 1
        %s791 = scalar_select %p790, %s40, 1
        %s792 = scalar_lea.vmem %s23, %s791
        %p793 = scmp.lt.s32.totalorder %s40, 1
        %s794 = scalar_select %p793, %s40, 1
        %s795 = scalar_lea.vmem %s25, %s794
        %v797 = vld [vmem:[%s786] sm:$0xff]
        %v798 = vlaneseq
        %v799 = vand.u32 %v798, 127
        %800 = vset.pattern.permute.xlu0 0
        %801 = vperm.xlu0 %800, %v797
        %v802 = vpop.permute.xlu0 %801
        %vm803 = vcmp.eq.s32.totalorder %v802, %v799
        %v804 = vsel %vm803, 1.0, 0.0
        %v805 = vpack.c.bf16 %v804, %v804
        %v806 = vld [vmem:[%s2] sm:$0xf]
        %v807 = vld [vmem:[%s2 + $0x4] sm:$0xf]
        %v808 = vld [vmem:[%s2 + $0x8] sm:$0xf]
        %v809 = vld [vmem:[%s2 + $0xc] sm:$0xf]
        %v810 = vld [vmem:[%s2 + $0x10] sm:$0xf]
        %v811 = vld [vmem:[%s2 + $0x14] sm:$0xf]
        %v812 = vld [vmem:[%s2 + $0x18] sm:$0xf]
        %v813 = vld [vmem:[%s2 + $0x1c] sm:$0xf]
        %v814 = vld [vmem:[%s3] sm:$0xff]
        %v823 = vunpack.c.l.b16 %v806
        %v824 = vunpack.c.l.b16 %v807
        %v825 = vunpack.c.l.b16 %v808
        %v826 = vunpack.c.l.b16 %v809
        %v827 = vunpack.c.l.b16 %v810
        %v828 = vunpack.c.l.b16 %v811
        %v829 = vunpack.c.l.b16 %v812
        %v830 = vunpack.c.l.b16 %v813
        %v831 = vpack.c.b16 %v824, %v823
        %v832 = vpack.c.b16 %v826, %v825
        %v833 = vpack.c.b16 %v828, %v827
        %v834 = vpack.c.b16 %v830, %v829
        %vm839 = vcmask 523264
        %v841 = vsel %vm839, %v805, 0
        %843 = vmatprep.subr.bf16.mxu0 0
        %844 = vmatpush1.bf16.msra.mxu0 %v831
        %845 = vmatprep.subr.bf16.mxu0 0
        %846 = vmatpush1.bf16.msra.mxu0 %v832
        %847 = vmatprep.subr.bf16.mxu0 0
        %848 = vmatpush1.bf16.msra.mxu0 %v833
        %849 = vmatprep.subr.bf16.mxu0 0
        %850 = vmatpush1.bf16.msra.mxu0 %v834
        %851 = vmatprep.subr.bf16.mxu0 0
        %852 = vmatpush1.bf16.msra.mxu0 0
        %853 = vmatprep.subr.bf16.mxu0 0
        %854 = vmatpush1.bf16.msra.mxu0 0
        %855 = vmatprep.subr.bf16.mxu0 0
        %856 = vmatpush1.bf16.msra.mxu0 0
        %857 = vmatprep.subr.bf16.mxu0 0
        %858 = vmatpush1.bf16.msra.mxu0 0
        %859 = vmatprep.subr.bf16.mxu0 0
        %860 = vmatpush1.bf16.msra.mxu0 0
        %861 = vmatprep.subr.bf16.mxu0 0
        %862 = vmatpush1.bf16.msra.mxu0 0
        %863 = vmatprep.subr.bf16.mxu0 0
        %864 = vmatpush1.bf16.msra.mxu0 0
        %865 = vmatprep.subr.bf16.mxu0 0
        %866 = vmatpush1.bf16.msra.mxu0 0
        %867 = vmatprep.subr.bf16.mxu0 0
        %868 = vmatpush1.bf16.msra.mxu0 0
        %869 = vmatprep.subr.bf16.mxu0 0
        %870 = vmatpush1.bf16.msra.mxu0 0
        %871 = vmatprep.subr.bf16.mxu0 0
        %872 = vmatpush1.bf16.msra.mxu0 0
        %873 = vmatprep.subr.bf16.mxu0 0
        %874 = vmatpush1.bf16.msra.mxu0 0
        %875 = vmatprep.mubr.bf16.mxu0 0
        %876 = vmatmul.mubr.bf16.gmra.mrb[0].mxu0 %v841
        %v877 = vpop.f32.mrb[0].mxu0
        %v878 = vadd.f32 %v814, %v877
        %v879 = vpop.f32.mrb[0].mxu0
        %v880 = vpop.f32.mrb[0].mxu0
        %v881 = vpop.f32.mrb[0].mxu0
        %882 = vdwg.mxu0
        %v883 = vld [vmem:[%s4] sm:$0x1]
        %v885 = vlaneseq
        %v886 = vshrl.u32 %v885, 7
        %v887 = vsub.s32 0, %v886
        %v888 = vrot.slane %v883, %v887
        %v890 = vadd.f32 %v878, %v888
        %v891 = vld [vmem:[%s5] sm:$0x1]
        %v892 = vld [vmem:[%s6] sm:$0x1]
        %vm893 = vcmask 261120
        %v894 = vsel %vm893, %v890, 0.0
        %895 = vadd.xlane.f32.xlu0 %v894
        %v896 = vpop.xlane.xlu0 %895
        %v897 = vrcp.pop 32.0
        %v898 = vmul.f32 %v896, %v897
        %v899 = vsub.f32 %v890, %v898
        %v900 = vmul.f32 %v899, %v899
        %v901 = vsel %vm893, %v900, 0.0
        %902 = vadd.xlane.f32.xlu0 %v901
        %v903 = vpop.xlane.xlu0 %902
        %v904 = vmul.f32 %v903, %v897
        %v905 = vadd.f32 %v904, 1e-12
        %v906 = vrsqrt.pop %v905
        %v907 = vmul.f32 %v899, %v906
        %v909 = vlaneseq
        %v910 = vshrl.u32 %v909, 7
        %v911 = vsub.s32 0, %v910
        %v912 = vrot.slane %v891, %v911
        %v914 = vmul.f32 %v907, %v912
        %v916 = vlaneseq
        %v917 = vshrl.u32 %v916, 7
        %v918 = vsub.s32 0, %v917
        %v919 = vrot.slane %v892, %v918
        %v921 = vadd.f32 %v914, %v919
        %v922 = vld [vmem:[%s789] sm:$0x1]
        %vm923 = vcmp.eq.s32.totalorder %v922, 1
        %v924 = vsel %vm923, -1e+09, 0.0
        %v925 = vpack.c.bf16 %v921, %v921
        %v926 = vld [vmem:[%s7] sm:$0xf]
        %v927 = vld [vmem:[%s7 + $0x4] sm:$0xf]
        %v928 = vld [vmem:[%s7 + $0x8] sm:$0xf]
        %v929 = vld [vmem:[%s7 + $0xc] sm:$0xf]
        %v930 = vld [vmem:[%s8] sm:$0x1]
        %v932 = vlaneseq
        %v933 = vshrl.u32 %v932, 7
        %v934 = vsub.s32 0, %v933
        %v935 = vrot.slane %v930, %v934
        %v941 = vunpack.c.l.b16 %v926
        %v942 = vunpack.c.l.b16 %v927
        %v943 = vunpack.c.l.b16 %v928
        %v944 = vunpack.c.l.b16 %v929
        %v945 = vpack.c.b16 %v942, %v941
        %v946 = vpack.c.b16 %v944, %v943
        %v950 = vsel %vm893, %v925, 0
        %952 = vmatprep.subr.bf16.mxu0 0
        %953 = vmatpush1.bf16.msra.mxu0 %v945
        %954 = vmatprep.subr.bf16.mxu0 0
        %955 = vmatpush1.bf16.msra.mxu0 %v946
        %956 = vmatprep.subr.bf16.mxu0 0
        %957 = vmatpush1.bf16.msra.mxu0 0
        %958 = vmatprep.subr.bf16.mxu0 0
        %959 = vmatpush1.bf16.msra.mxu0 0
        %960 = vmatprep.subr.bf16.mxu0 0
        %961 = vmatpush1.bf16.msra.mxu0 0
        %962 = vmatprep.subr.bf16.mxu0 0
        %963 = vmatpush1.bf16.msra.mxu0 0
        %964 = vmatprep.subr.bf16.mxu0 0
        %965 = vmatpush1.bf16.msra.mxu0 0
        %966 = vmatprep.subr.bf16.mxu0 0
        %967 = vmatpush1.bf16.msra.mxu0 0
        %968 = vmatprep.subr.bf16.mxu0 0
        %969 = vmatpush1.bf16.msra.mxu0 0
        %970 = vmatprep.subr.bf16.mxu0 0
        %971 = vmatpush1.bf16.msra.mxu0 0
        %972 = vmatprep.subr.bf16.mxu0 0
        %973 = vmatpush1.bf16.msra.mxu0 0
        %974 = vmatprep.subr.bf16.mxu0 0
        %975 = vmatpush1.bf16.msra.mxu0 0
        %976 = vmatprep.subr.bf16.mxu0 0
        %977 = vmatpush1.bf16.msra.mxu0 0
        %978 = vmatprep.subr.bf16.mxu0 0
        %979 = vmatpush1.bf16.msra.mxu0 0
        %980 = vmatprep.subr.bf16.mxu0 0
        %981 = vmatpush1.bf16.msra.mxu0 0
        %982 = vmatprep.subr.bf16.mxu0 0
        %983 = vmatpush1.bf16.msra.mxu0 0
        %984 = vmatprep.mubr.bf16.mxu0 0
        %985 = vmatmul.mubr.bf16.gmra.mrb[0].mxu0 %v950
        %v986 = vpop.f32.mrb[0].mxu0
        %v987 = vadd.f32 %v935, %v986
        %v988 = vpop.f32.mrb[0].mxu0
        %v989 = vpop.f32.mrb[0].mxu0
        %v990 = vpop.f32.mrb[0].mxu0
        %991 = vdwg.mxu0
        %v992 = vpack.c.bf16 %v987, %v987
        %994 = vrot.lane.b32.xlu0 %v992, 112
        %v995 = vpop.permute.xlu0 %994
        %v997 = vlaneseq
        %v998 = vshrl.u32 %v997, 7
        %v999 = vsub.s32 0, %v998
        %v1000 = vrot.slane %v924, %v999
        %1002 = vrot.lane.b32.xlu0 %v992, 96
        %v1003 = vpop.permute.xlu0 %1002
        %vm1004 = vcmask 130048
        %v1006 = vsel %vm1004, %v992, 0
        %v1009 = vsel %vm1004, %v1003, 0
        %1011 = vmatprep.subr.bf16.mxu0 0
        %1012 = vmatpush1.bf16.xpose.msra.mxu0 %v1009
        %1013 = vmatprep.subr.bf16.mxu0 0
        %1014 = vmatpush1.bf16.xpose.msra.mxu0 0
        %1015 = vmatprep.subr.bf16.mxu0 0
        %1016 = vmatpush1.bf16.xpose.msra.mxu0 0
        %1017 = vmatprep.subr.bf16.mxu0 0
        %1018 = vmatpush1.bf16.xpose.msra.mxu0 0
        %1019 = vmatprep.subr.bf16.mxu0 0
        %1020 = vmatpush1.bf16.xpose.msra.mxu0 0
        %1021 = vmatprep.subr.bf16.mxu0 0
        %1022 = vmatpush1.bf16.xpose.msra.mxu0 0
        %1023 = vmatprep.subr.bf16.mxu0 0
        %1024 = vmatpush1.bf16.xpose.msra.mxu0 0
        %1025 = vmatprep.subr.bf16.mxu0 0
        %1026 = vmatpush1.bf16.xpose.msra.mxu0 0
        %1027 = vmatprep.subr.bf16.mxu0 0
        %1028 = vmatpush1.bf16.xpose.msra.mxu0 0
        %1029 = vmatprep.subr.bf16.mxu0 0
        %1030 = vmatpush1.bf16.xpose.msra.mxu0 0
        %1031 = vmatprep.subr.bf16.mxu0 0
        %1032 = vmatpush1.bf16.xpose.msra.mxu0 0
        %1033 = vmatprep.subr.bf16.mxu0 0
        %1034 = vmatpush1.bf16.xpose.msra.mxu0 0
        %1035 = vmatprep.subr.bf16.mxu0 0
        %1036 = vmatpush1.bf16.xpose.msra.mxu0 0
        %1037 = vmatprep.subr.bf16.mxu0 0
        %1038 = vmatpush1.bf16.xpose.msra.mxu0 0
        %1039 = vmatprep.subr.bf16.mxu0 0
        %1040 = vmatpush1.bf16.xpose.msra.mxu0 0
        %1041 = vmatprep.subr.bf16.mxu0 0
        %1042 = vmatpush1.bf16.xpose.msra.mxu0 0
        %1043 = vmatprep.mubr.bf16.mxu0 0
        %1044 = vmatmul.mubr.bf16.gmra.mrb[0].mxu0 %v1006
        %v1045 = vpop.f32.mrb[0].mxu0
        %v1046 = vadd.f32 %v1000, %v1045
        %v1047 = vpop.f32.mrb[0].mxu0
        %v1048 = vpop.f32.mrb[0].mxu0
        %v1049 = vpop.f32.mrb[0].mxu0
        %1050 = vdwg.mxu0
        %1051 = vrot.lane.b32.xlu0 %v995, 96
        %v1052 = vpop.permute.xlu0 %1051
        %v1054 = vsel %vm1004, %v995, 0
        %v1057 = vsel %vm1004, %v1052, 0
        %1059 = vmatprep.subr.bf16.mxu0 0
        %1060 = vmatpush1.bf16.xpose.msra.mxu0 %v1057
        %1061 = vmatprep.subr.bf16.mxu0 0
        %1062 = vmatpush1.bf16.xpose.msra.mxu0 0
        %1063 = vmatprep.subr.bf16.mxu0 0
        %1064 = vmatpush1.bf16.xpose.msra.mxu0 0
        %1065 = vmatprep.subr.bf16.mxu0 0
        %1066 = vmatpush1.bf16.xpose.msra.mxu0 0
        %1067 = vmatprep.subr.bf16.mxu0 0
        %1068 = vmatpush1.bf16.xpose.msra.mxu0 0
        %1069 = vmatprep.subr.bf16.mxu0 0
        %1070 = vmatpush1.bf16.xpose.msra.mxu0 0
        %1071 = vmatprep.subr.bf16.mxu0 0
        %1072 = vmatpush1.bf16.xpose.msra.mxu0 0
        %1073 = vmatprep.subr.bf16.mxu0 0
        %1074 = vmatpush1.bf16.xpose.msra.mxu0 0
        %1075 = vmatprep.subr.bf16.mxu0 0
        %1076 = vmatpush1.bf16.xpose.msra.mxu0 0
        %1077 = vmatprep.subr.bf16.mxu0 0
        %1078 = vmatpush1.bf16.xpose.msra.mxu0 0
        %1079 = vmatprep.subr.bf16.mxu0 0
        %1080 = vmatpush1.bf16.xpose.msra.mxu0 0
        %1081 = vmatprep.subr.bf16.mxu0 0
        %1082 = vmatpush1.bf16.xpose.msra.mxu0 0
        %1083 = vmatprep.subr.bf16.mxu0 0
        %1084 = vmatpush1.bf16.xpose.msra.mxu0 0
        %1085 = vmatprep.subr.bf16.mxu0 0
        %1086 = vmatpush1.bf16.xpose.msra.mxu0 0
        %1087 = vmatprep.subr.bf16.mxu0 0
        %1088 = vmatpush1.bf16.xpose.msra.mxu0 0
        %1089 = vmatprep.subr.bf16.mxu0 0
        %1090 = vmatpush1.bf16.xpose.msra.mxu0 0
        %1091 = vmatprep.mubr.bf16.mxu0 0
        %1092 = vmatmul.mubr.bf16.gmra.mrb[0].mxu0 %v1054
        %v1093 = vpop.f32.mrb[0].mxu0
        %v1094 = vadd.f32 %v1000, %v1093
        %v1095 = vpop.f32.mrb[0].mxu0
        %v1096 = vpop.f32.mrb[0].mxu0
        %v1097 = vpop.f32.mrb[0].mxu0
        %1098 = vdwg.mxu0
        %vm1099 = vcmask 64512
        %v1100 = vsel %vm1099, %v1046, -inf
        %1101 = vmax.xlane.f32.xlu0 %v1100
        %v1102 = vpop.xlane.xlu0 %1101
        %v1103 = vsel %vm1099, %v1094, -inf
        %1104 = vmax.xlane.f32.xlu0 %v1103
        %v1105 = vpop.xlane.xlu0 %1104
        %v1106 = vsub.f32 %v1046, %v1102
        %v1107 = vsub.f32 %v1094, %v1105
        %v1108 = vmul.f32 %v1106, 1.442695
        %v1109 = vpow.pop %v1108
        %v1110 = vmul.f32 %v1107, 1.442695
        %v1111 = vpow.pop %v1110
        %v1112 = vsel %vm1099, %v1109, 0.0
        %1113 = vadd.xlane.f32.xlu0 %v1112
        %v1114 = vpop.xlane.xlu0 %1113
        %v1115 = vsel %vm1099, %v1111, 0.0
        %1116 = vadd.xlane.f32.xlu0 %v1115
        %v1117 = vpop.xlane.xlu0 %1116
        %v1118 = vrcp.pop %v1114
        %v1119 = vrcp.pop %v1117
        %v1120 = vmul.f32 %v1109, %v1118
        %v1121 = vmul.f32 %v1111, %v1119
        %v1122 = vpack.c.bf16 %v1120, %v1120
        %v1123 = vpack.c.bf16 %v1121, %v1121
        %1124 = vrot.lane.b32.xlu0 %v992, 64
        %v1125 = vpop.permute.xlu0 %1124
        %v1127 = vsel %vm1099, %v1122, 0
        %vm1129 = vcmask 1043456
        %v1131 = vsel %vm1129, %v1125, 0
        %1133 = vmatprep.subr.bf16.mxu0 0
        %1134 = vmatpush1.bf16.msra.mxu0 %v1131
        %1135 = vmatprep.subr.bf16.mxu0 0
        %1136 = vmatpush1.bf16.msra.mxu0 0
        %1137 = vmatprep.subr.bf16.mxu0 0
        %1138 = vmatpush1.bf16.msra.mxu0 0
        %1139 = vmatprep.subr.bf16.mxu0 0
        %1140 = vmatpush1.bf16.msra.mxu0 0
        %1141 = vmatprep.subr.bf16.mxu0 0
        %1142 = vmatpush1.bf16.msra.mxu0 0
        %1143 = vmatprep.subr.bf16.mxu0 0
        %1144 = vmatpush1.bf16.msra.mxu0 0
        %1145 = vmatprep.subr.bf16.mxu0 0
        %1146 = vmatpush1.bf16.msra.mxu0 0
        %1147 = vmatprep.subr.bf16.mxu0 0
        %1148 = vmatpush1.bf16.msra.mxu0 0
        %1149 = vmatprep.subr.bf16.mxu0 0
        %1150 = vmatpush1.bf16.msra.mxu0 0
        %1151 = vmatprep.subr.bf16.mxu0 0
        %1152 = vmatpush1.bf16.msra.mxu0 0
        %1153 = vmatprep.subr.bf16.mxu0 0
        %1154 = vmatpush1.bf16.msra.mxu0 0
        %1155 = vmatprep.subr.bf16.mxu0 0
        %1156 = vmatpush1.bf16.msra.mxu0 0
        %1157 = vmatprep.subr.bf16.mxu0 0
        %1158 = vmatpush1.bf16.msra.mxu0 0
        %1159 = vmatprep.subr.bf16.mxu0 0
        %1160 = vmatpush1.bf16.msra.mxu0 0
        %1161 = vmatprep.subr.bf16.mxu0 0
        %1162 = vmatpush1.bf16.msra.mxu0 0
        %1163 = vmatprep.subr.bf16.mxu0 0
        %1164 = vmatpush1.bf16.msra.mxu0 0
        %1165 = vmatprep.mubr.bf16.mxu0 0
        %1166 = vmatmul.mubr.bf16.gmra.mrb[0].mxu0 %v1127
        %v1167 = vpop.f32.mrb[0].mxu0
        %v1168 = vadd.f32 0.0, %v1167
        %v1169 = vpop.f32.mrb[0].mxu0
        %v1170 = vpop.f32.mrb[0].mxu0
        %v1171 = vpop.f32.mrb[0].mxu0
        %1172 = vdwg.mxu0
        %1173 = vrot.lane.b32.xlu0 %v995, 64
        %v1174 = vpop.permute.xlu0 %1173
        %v1176 = vsel %vm1099, %v1123, 0
        %v1179 = vsel %vm1129, %v1174, 0
        %1181 = vmatprep.subr.bf16.mxu0 0
        %1182 = vmatpush1.bf16.msra.mxu0 %v1179
        %1183 = vmatprep.subr.bf16.mxu0 0
        %1184 = vmatpush1.bf16.msra.mxu0 0
        %1185 = vmatprep.subr.bf16.mxu0 0
        %1186 = vmatpush1.bf16.msra.mxu0 0
        %1187 = vmatprep.subr.bf16.mxu0 0
        %1188 = vmatpush1.bf16.msra.mxu0 0
        %1189 = vmatprep.subr.bf16.mxu0 0
        %1190 = vmatpush1.bf16.msra.mxu0 0
        %1191 = vmatprep.subr.bf16.mxu0 0
        %1192 = vmatpush1.bf16.msra.mxu0 0
        %1193 = vmatprep.subr.bf16.mxu0 0
        %1194 = vmatpush1.bf16.msra.mxu0 0
        %1195 = vmatprep.subr.bf16.mxu0 0
        %1196 = vmatpush1.bf16.msra.mxu0 0
        %1197 = vmatprep.subr.bf16.mxu0 0
        %1198 = vmatpush1.bf16.msra.mxu0 0
        %1199 = vmatprep.subr.bf16.mxu0 0
        %1200 = vmatpush1.bf16.msra.mxu0 0
        %1201 = vmatprep.subr.bf16.mxu0 0
        %1202 = vmatpush1.bf16.msra.mxu0 0
        %1203 = vmatprep.subr.bf16.mxu0 0
        %1204 = vmatpush1.bf16.msra.mxu0 0
        %1205 = vmatprep.subr.bf16.mxu0 0
        %1206 = vmatpush1.bf16.msra.mxu0 0
        %1207 = vmatprep.subr.bf16.mxu0 0
        %1208 = vmatpush1.bf16.msra.mxu0 0
        %1209 = vmatprep.subr.bf16.mxu0 0
        %1210 = vmatpush1.bf16.msra.mxu0 0
        %1211 = vmatprep.subr.bf16.mxu0 0
        %1212 = vmatpush1.bf16.msra.mxu0 0
        %1213 = vmatprep.mubr.bf16.mxu0 0
        %1214 = vmatmul.mubr.bf16.gmra.mrb[0].mxu0 %v1176
        %v1215 = vpop.f32.mrb[0].mxu0
        %v1216 = vadd.f32 0.0, %v1215
        %v1217 = vpop.f32.mrb[0].mxu0
        %v1218 = vpop.f32.mrb[0].mxu0
        %v1219 = vpop.f32.mrb[0].mxu0
        %1220 = vdwg.mxu0
        %1222 = vrot.lane.b32.xlu0 %v1216, 16
        %v1223 = vpop.permute.xlu0 %1222
        %v1225 = vsel %vm1004, %v1168, %v1223
        %v1226 = vpack.c.bf16 %v1225, %v1225
        %v1227 = vld [vmem:[%s9] sm:$0xf]
        %v1228 = vld [vmem:[%s9 + $0x4] sm:$0xf]
        %v1229 = vld [vmem:[%s9 + $0x8] sm:$0xf]
        %v1230 = vld [vmem:[%s9 + $0xc] sm:$0xf]
        %v1231 = vld [vmem:[%s10] sm:$0x1]
        %v1233 = vlaneseq
        %v1234 = vshrl.u32 %v1233, 7
        %v1235 = vsub.s32 0, %v1234
        %v1236 = vrot.slane %v1231, %v1235
        %v1242 = vunpack.c.l.b16 %v1227
        %v1243 = vunpack.c.l.b16 %v1228
        %v1244 = vunpack.c.l.b16 %v1229
        %v1245 = vunpack.c.l.b16 %v1230
        %v1246 = vpack.c.b16 %v1243, %v1242
        %v1247 = vpack.c.b16 %v1245, %v1244
        %v1251 = vsel %vm893, %v1226, 0
        %1253 = vmatprep.subr.bf16.mxu0 0
        %1254 = vmatpush1.bf16.msra.mxu0 %v1246
        %1255 = vmatprep.subr.bf16.mxu0 0
        %1256 = vmatpush1.bf16.msra.mxu0 %v1247
        %1257 = vmatprep.subr.bf16.mxu0 0
        %1258 = vmatpush1.bf16.msra.mxu0 0
        %1259 = vmatprep.subr.bf16.mxu0 0
        %1260 = vmatpush1.bf16.msra.mxu0 0
        %1261 = vmatprep.subr.bf16.mxu0 0
        %1262 = vmatpush1.bf16.msra.mxu0 0
        %1263 = vmatprep.subr.bf16.mxu0 0
        %1264 = vmatpush1.bf16.msra.mxu0 0
        %1265 = vmatprep.subr.bf16.mxu0 0
        %1266 = vmatpush1.bf16.msra.mxu0 0
        %1267 = vmatprep.subr.bf16.mxu0 0
        %1268 = vmatpush1.bf16.msra.mxu0 0
        %1269 = vmatprep.subr.bf16.mxu0 0
        %1270 = vmatpush1.bf16.msra.mxu0 0
        %1271 = vmatprep.subr.bf16.mxu0 0
        %1272 = vmatpush1.bf16.msra.mxu0 0
        %1273 = vmatprep.subr.bf16.mxu0 0
        %1274 = vmatpush1.bf16.msra.mxu0 0
        %1275 = vmatprep.subr.bf16.mxu0 0
        %1276 = vmatpush1.bf16.msra.mxu0 0
        %1277 = vmatprep.subr.bf16.mxu0 0
        %1278 = vmatpush1.bf16.msra.mxu0 0
        %1279 = vmatprep.subr.bf16.mxu0 0
        %1280 = vmatpush1.bf16.msra.mxu0 0
        %1281 = vmatprep.subr.bf16.mxu0 0
        %1282 = vmatpush1.bf16.msra.mxu0 0
        %1283 = vmatprep.subr.bf16.mxu0 0
        %1284 = vmatpush1.bf16.msra.mxu0 0
        %1285 = vmatprep.mubr.bf16.mxu0 0
        %1286 = vmatmul.mubr.bf16.gmra.mrb[0].mxu0 %v1251
        %v1287 = vpop.f32.mrb[0].mxu0
        %v1288 = vadd.f32 %v1236, %v1287
        %v1289 = vpop.f32.mrb[0].mxu0
        %v1290 = vpop.f32.mrb[0].mxu0
        %v1291 = vpop.f32.mrb[0].mxu0
        %1292 = vdwg.mxu0
        %v1293 = vadd.f32 %v921, %v1288
        %v1294 = vld [vmem:[%s11] sm:$0x1]
        %v1295 = vld [vmem:[%s12] sm:$0x1]
        %v1296 = vsel %vm893, %v1293, 0.0
        %1297 = vadd.xlane.f32.xlu0 %v1296
        %v1298 = vpop.xlane.xlu0 %1297
        %v1299 = vmul.f32 %v1298, %v897
        %v1300 = vsub.f32 %v1293, %v1299
        %v1301 = vmul.f32 %v1300, %v1300
        %v1302 = vsel %vm893, %v1301, 0.0
        %1303 = vadd.xlane.f32.xlu0 %v1302
        %v1304 = vpop.xlane.xlu0 %1303
        %v1305 = vmul.f32 %v1304, %v897
        %v1306 = vadd.f32 %v1305, 1e-12
        %v1307 = vrsqrt.pop %v1306
        %v1308 = vmul.f32 %v1300, %v1307
        %v1310 = vlaneseq
        %v1311 = vshrl.u32 %v1310, 7
        %v1312 = vsub.s32 0, %v1311
        %v1313 = vrot.slane %v1294, %v1312
        %v1315 = vmul.f32 %v1308, %v1313
        %v1317 = vlaneseq
        %v1318 = vshrl.u32 %v1317, 7
        %v1319 = vsub.s32 0, %v1318
        %v1320 = vrot.slane %v1295, %v1319
        %v1322 = vadd.f32 %v1315, %v1320
        %v1323 = vpack.c.bf16 %v1322, %v1322
        %v1324 = vld [vmem:[%s13] sm:$0xf]
        %v1325 = vld [vmem:[%s13 + $0x4] sm:$0xf]
        %v1326 = vld [vmem:[%s13 + $0x8] sm:$0xf]
        %v1327 = vld [vmem:[%s13 + $0xc] sm:$0xf]
        %v1328 = vld [vmem:[%s14] sm:$0x1]
        %v1330 = vlaneseq
        %v1331 = vshrl.u32 %v1330, 7
        %v1332 = vsub.s32 0, %v1331
        %v1333 = vrot.slane %v1328, %v1332
        %v1339 = vunpack.c.l.b16 %v1324
        %v1340 = vunpack.c.l.b16 %v1325
        %v1341 = vunpack.c.l.b16 %v1326
        %v1342 = vunpack.c.l.b16 %v1327
        %v1343 = vpack.c.b16 %v1340, %v1339
        %v1344 = vpack.c.b16 %v1342, %v1341
        %v1348 = vsel %vm893, %v1323, 0
        %1350 = vmatprep.subr.bf16.mxu0 0
        %1351 = vmatpush1.bf16.msra.mxu0 %v1343
        %1352 = vmatprep.subr.bf16.mxu0 0
        %1353 = vmatpush1.bf16.msra.mxu0 %v1344
        %1354 = vmatprep.subr.bf16.mxu0 0
        %1355 = vmatpush1.bf16.msra.mxu0 0
        %1356 = vmatprep.subr.bf16.mxu0 0
        %1357 = vmatpush1.bf16.msra.mxu0 0
        %1358 = vmatprep.subr.bf16.mxu0 0
        %1359 = vmatpush1.bf16.msra.mxu0 0
        %1360 = vmatprep.subr.bf16.mxu0 0
        %1361 = vmatpush1.bf16.msra.mxu0 0
        %1362 = vmatprep.subr.bf16.mxu0 0
        %1363 = vmatpush1.bf16.msra.mxu0 0
        %1364 = vmatprep.subr.bf16.mxu0 0
        %1365 = vmatpush1.bf16.msra.mxu0 0
        %1366 = vmatprep.subr.bf16.mxu0 0
        %1367 = vmatpush1.bf16.msra.mxu0 0
        %1368 = vmatprep.subr.bf16.mxu0 0
        %1369 = vmatpush1.bf16.msra.mxu0 0
        %1370 = vmatprep.subr.bf16.mxu0 0
        %1371 = vmatpush1.bf16.msra.mxu0 0
        %1372 = vmatprep.subr.bf16.mxu0 0
        %1373 = vmatpush1.bf16.msra.mxu0 0
        %1374 = vmatprep.subr.bf16.mxu0 0
        %1375 = vmatpush1.bf16.msra.mxu0 0
        %1376 = vmatprep.subr.bf16.mxu0 0
        %1377 = vmatpush1.bf16.msra.mxu0 0
        %1378 = vmatprep.subr.bf16.mxu0 0
        %1379 = vmatpush1.bf16.msra.mxu0 0
        %1380 = vmatprep.subr.bf16.mxu0 0
        %1381 = vmatpush1.bf16.msra.mxu0 0
        %1382 = vmatprep.mubr.bf16.mxu0 0
        %1383 = vmatmul.mubr.bf16.gmra.mrb[0].mxu0 %v1348
        %v1384 = vpop.f32.mrb[0].mxu0
        %v1385 = vadd.f32 %v1333, %v1384
        %v1386 = vpop.f32.mrb[0].mxu0
        %v1387 = vpop.f32.mrb[0].mxu0
        %v1388 = vpop.f32.mrb[0].mxu0
        %1389 = vdwg.mxu0
        %v1390 = vmul.f32 %v1385, %v1385
        %v1391 = vmul.f32 %v1385, %v1390
        %v1392 = vmul.f32 %v1391, 0.044715
        %v1393 = vadd.f32 %v1385, %v1392
        %v1394 = vmul.f32 %v1393, 0.7978846
        %v1395 = vtanh.pop %v1394
        %v1396 = vadd.f32 %v1395, 1.0
        %v1397 = vmul.f32 %v1396, 0.5
        %v1398 = vmul.f32 %v1385, %v1397
        %v1399 = vpack.c.bf16 %v1398, %v1398
        %v1400 = vld [vmem:[%s15] sm:$0xf]
        %v1401 = vld [vmem:[%s15 + $0x4] sm:$0xf]
        %v1402 = vld [vmem:[%s15 + $0x8] sm:$0xf]
        %v1403 = vld [vmem:[%s15 + $0xc] sm:$0xf]
        %v1404 = vld [vmem:[%s15 + $0x10] sm:$0xf]
        %v1405 = vld [vmem:[%s15 + $0x14] sm:$0xf]
        %v1406 = vld [vmem:[%s15 + $0x18] sm:$0xf]
        %v1407 = vld [vmem:[%s15 + $0x1c] sm:$0xf]
        %v1408 = vld [vmem:[%s16] sm:$0x1]
        %v1410 = vlaneseq
        %v1411 = vshrl.u32 %v1410, 7
        %v1412 = vsub.s32 0, %v1411
        %v1413 = vrot.slane %v1408, %v1412
        %v1423 = vunpack.c.l.b16 %v1400
        %v1424 = vunpack.c.l.b16 %v1401
        %v1425 = vunpack.c.l.b16 %v1402
        %v1426 = vunpack.c.l.b16 %v1403
        %v1427 = vunpack.c.l.b16 %v1404
        %v1428 = vunpack.c.l.b16 %v1405
        %v1429 = vunpack.c.l.b16 %v1406
        %v1430 = vunpack.c.l.b16 %v1407
        %v1431 = vpack.c.b16 %v1424, %v1423
        %v1432 = vpack.c.b16 %v1426, %v1425
        %v1433 = vpack.c.b16 %v1428, %v1427
        %v1434 = vpack.c.b16 %v1430, %v1429
        %v1440 = vsel %vm839, %v1399, 0
        %1442 = vmatprep.subr.bf16.mxu0 0
        %1443 = vmatpush1.bf16.msra.mxu0 %v1431
        %1444 = vmatprep.subr.bf16.mxu0 0
        %1445 = vmatpush1.bf16.msra.mxu0 %v1432
        %1446 = vmatprep.subr.bf16.mxu0 0
        %1447 = vmatpush1.bf16.msra.mxu0 %v1433
        %1448 = vmatprep.subr.bf16.mxu0 0
        %1449 = vmatpush1.bf16.msra.mxu0 %v1434
        %1450 = vmatprep.subr.bf16.mxu0 0
        %1451 = vmatpush1.bf16.msra.mxu0 0
        %1452 = vmatprep.subr.bf16.mxu0 0
        %1453 = vmatpush1.bf16.msra.mxu0 0
        %1454 = vmatprep.subr.bf16.mxu0 0
        %1455 = vmatpush1.bf16.msra.mxu0 0
        %1456 = vmatprep.subr.bf16.mxu0 0
        %1457 = vmatpush1.bf16.msra.mxu0 0
        %1458 = vmatprep.subr.bf16.mxu0 0
        %1459 = vmatpush1.bf16.msra.mxu0 0
        %1460 = vmatprep.subr.bf16.mxu0 0
        %1461 = vmatpush1.bf16.msra.mxu0 0
        %1462 = vmatprep.subr.bf16.mxu0 0
        %1463 = vmatpush1.bf16.msra.mxu0 0
        %1464 = vmatprep.subr.bf16.mxu0 0
        %1465 = vmatpush1.bf16.msra.mxu0 0
        %1466 = vmatprep.subr.bf16.mxu0 0
        %1467 = vmatpush1.bf16.msra.mxu0 0
        %1468 = vmatprep.subr.bf16.mxu0 0
        %1469 = vmatpush1.bf16.msra.mxu0 0
        %1470 = vmatprep.subr.bf16.mxu0 0
        %1471 = vmatpush1.bf16.msra.mxu0 0
        %1472 = vmatprep.subr.bf16.mxu0 0
        %1473 = vmatpush1.bf16.msra.mxu0 0
        %1474 = vmatprep.mubr.bf16.mxu0 0
        %1475 = vmatmul.mubr.bf16.gmra.mrb[0].mxu0 %v1440
        %v1476 = vpop.f32.mrb[0].mxu0
        %v1477 = vadd.f32 %v1413, %v1476
        %v1478 = vpop.f32.mrb[0].mxu0
        %v1479 = vpop.f32.mrb[0].mxu0
        %v1480 = vpop.f32.mrb[0].mxu0
        %1481 = vdwg.mxu0
        %v1482 = vadd.f32 %v1322, %v1477
        %v1483 = vld [vmem:[%s17] sm:$0x1]
        %v1484 = vld [vmem:[%s18] sm:$0x1]
        %v1485 = vsel %vm893, %v1482, 0.0
        %1486 = vadd.xlane.f32.xlu0 %v1485
        %v1487 = vpop.xlane.xlu0 %1486
        %v1488 = vmul.f32 %v1487, %v897
        %v1489 = vsub.f32 %v1482, %v1488
        %v1490 = vmul.f32 %v1489, %v1489
        %v1491 = vsel %vm893, %v1490, 0.0
        %1492 = vadd.xlane.f32.xlu0 %v1491
        %v1493 = vpop.xlane.xlu0 %1492
        %v1494 = vmul.f32 %v1493, %v897
        %v1495 = vadd.f32 %v1494, 1e-12
        %v1496 = vrsqrt.pop %v1495
        %v1497 = vmul.f32 %v1489, %v1496
        %v1499 = vlaneseq
        %v1500 = vshrl.u32 %v1499, 7
        %v1501 = vsub.s32 0, %v1500
        %v1502 = vrot.slane %v1483, %v1501
        %v1504 = vmul.f32 %v1497, %v1502
        %v1506 = vlaneseq
        %v1507 = vshrl.u32 %v1506, 7
        %v1508 = vsub.s32 0, %v1507
        %v1509 = vrot.slane %v1484, %v1508
        %v1511 = vadd.f32 %v1504, %v1509
        %v1512 = vpack.c.bf16 %v1511, %v1511
        %s1513 = scalar_lea.vmem %s7, 16
        %v1514 = vld [vmem:[%s1513] sm:$0xf]
        %v1515 = vld [vmem:[%s1513 + $0x4] sm:$0xf]
        %v1516 = vld [vmem:[%s1513 + $0x8] sm:$0xf]
        %v1517 = vld [vmem:[%s1513 + $0xc] sm:$0xf]
        %s1518 = scalar_lea.vmem %s8, 1
        %v1519 = vld [vmem:[%s1518] sm:$0x1]
        %v1521 = vlaneseq
        %v1522 = vshrl.u32 %v1521, 7
        %v1523 = vsub.s32 0, %v1522
        %v1524 = vrot.slane %v1519, %v1523
        %v1530 = vunpack.c.l.b16 %v1514
        %v1531 = vunpack.c.l.b16 %v1515
        %v1532 = vunpack.c.l.b16 %v1516
        %v1533 = vunpack.c.l.b16 %v1517
        %v1534 = vpack.c.b16 %v1531, %v1530
        %v1535 = vpack.c.b16 %v1533, %v1532
        %v1539 = vsel %vm893, %v1512, 0
        %1541 = vmatprep.subr.bf16.mxu0 0
        %1542 = vmatpush1.bf16.msra.mxu0 %v1534
        %1543 = vmatprep.subr.bf16.mxu0 0
        %1544 = vmatpush1.bf16.msra.mxu0 %v1535
        %1545 = vmatprep.subr.bf16.mxu0 0
        %1546 = vmatpush1.bf16.msra.mxu0 0
        %1547 = vmatprep.subr.bf16.mxu0 0
        %1548 = vmatpush1.bf16.msra.mxu0 0
        %1549 = vmatprep.subr.bf16.mxu0 0
        %1550 = vmatpush1.bf16.msra.mxu0 0
        %1551 = vmatprep.subr.bf16.mxu0 0
        %1552 = vmatpush1.bf16.msra.mxu0 0
        %1553 = vmatprep.subr.bf16.mxu0 0
        %1554 = vmatpush1.bf16.msra.mxu0 0
        %1555 = vmatprep.subr.bf16.mxu0 0
        %1556 = vmatpush1.bf16.msra.mxu0 0
        %1557 = vmatprep.subr.bf16.mxu0 0
        %1558 = vmatpush1.bf16.msra.mxu0 0
        %1559 = vmatprep.subr.bf16.mxu0 0
        %1560 = vmatpush1.bf16.msra.mxu0 0
        %1561 = vmatprep.subr.bf16.mxu0 0
        %1562 = vmatpush1.bf16.msra.mxu0 0
        %1563 = vmatprep.subr.bf16.mxu0 0
        %1564 = vmatpush1.bf16.msra.mxu0 0
        %1565 = vmatprep.subr.bf16.mxu0 0
        %1566 = vmatpush1.bf16.msra.mxu0 0
        %1567 = vmatprep.subr.bf16.mxu0 0
        %1568 = vmatpush1.bf16.msra.mxu0 0
        %1569 = vmatprep.subr.bf16.mxu0 0
        %1570 = vmatpush1.bf16.msra.mxu0 0
        %1571 = vmatprep.subr.bf16.mxu0 0
        %1572 = vmatpush1.bf16.msra.mxu0 0
        %1573 = vmatprep.mubr.bf16.mxu0 0
        %1574 = vmatmul.mubr.bf16.gmra.mrb[0].mxu0 %v1539
        %v1575 = vpop.f32.mrb[0].mxu0
        %v1576 = vadd.f32 %v1524, %v1575
        %v1577 = vpop.f32.mrb[0].mxu0
        %v1578 = vpop.f32.mrb[0].mxu0
        %v1579 = vpop.f32.mrb[0].mxu0
        %1580 = vdwg.mxu0
        %v1581 = vpack.c.bf16 %v1576, %v1576
        %1583 = vrot.lane.b32.xlu0 %v1581, 112
        %v1584 = vpop.permute.xlu0 %1583
        %1585 = vrot.lane.b32.xlu0 %v1581, 96
        %v1586 = vpop.permute.xlu0 %1585
        %v1588 = vsel %vm1004, %v1581, 0
        %v1591 = vsel %vm1004, %v1586, 0
        %1593 = vmatprep.subr.bf16.mxu0 0
        %1594 = vmatpush1.bf16.xpose.msra.mxu0 %v1591
        %1595 = vmatprep.subr.bf16.mxu0 0
        %1596 = vmatpush1.bf16.xpose.msra.mxu0 0
        %1597 = vmatprep.subr.bf16.mxu0 0
        %1598 = vmatpush1.bf16.xpose.msra.mxu0 0
        %1599 = vmatprep.subr.bf16.mxu0 0
        %1600 = vmatpush1.bf16.xpose.msra.mxu0 0
        %1601 = vmatprep.subr.bf16.mxu0 0
        %1602 = vmatpush1.bf16.xpose.msra.mxu0 0
        %1603 = vmatprep.subr.bf16.mxu0 0
        %1604 = vmatpush1.bf16.xpose.msra.mxu0 0
        %1605 = vmatprep.subr.bf16.mxu0 0
        %1606 = vmatpush1.bf16.xpose.msra.mxu0 0
        %1607 = vmatprep.subr.bf16.mxu0 0
        %1608 = vmatpush1.bf16.xpose.msra.mxu0 0
        %1609 = vmatprep.subr.bf16.mxu0 0
        %1610 = vmatpush1.bf16.xpose.msra.mxu0 0
        %1611 = vmatprep.subr.bf16.mxu0 0
        %1612 = vmatpush1.bf16.xpose.msra.mxu0 0
        %1613 = vmatprep.subr.bf16.mxu0 0
        %1614 = vmatpush1.bf16.xpose.msra.mxu0 0
        %1615 = vmatprep.subr.bf16.mxu0 0
        %1616 = vmatpush1.bf16.xpose.msra.mxu0 0
        %1617 = vmatprep.subr.bf16.mxu0 0
        %1618 = vmatpush1.bf16.xpose.msra.mxu0 0
        %1619 = vmatprep.subr.bf16.mxu0 0
        %1620 = vmatpush1.bf16.xpose.msra.mxu0 0
        %1621 = vmatprep.subr.bf16.mxu0 0
        %1622 = vmatpush1.bf16.xpose.msra.mxu0 0
        %1623 = vmatprep.subr.bf16.mxu0 0
        %1624 = vmatpush1.bf16.xpose.msra.mxu0 0
        %1625 = vmatprep.mubr.bf16.mxu0 0
        %1626 = vmatmul.mubr.bf16.gmra.mrb[0].mxu0 %v1588
        %v1627 = vpop.f32.mrb[0].mxu0
        %v1628 = vadd.f32 %v1000, %v1627
        %v1629 = vpop.f32.mrb[0].mxu0
        %v1630 = vpop.f32.mrb[0].mxu0
        %v1631 = vpop.f32.mrb[0].mxu0
        %1632 = vdwg.mxu0
        %1633 = vrot.lane.b32.xlu0 %v1584, 96
        %v1634 = vpop.permute.xlu0 %1633
        %v1636 = vsel %vm1004, %v1584, 0
        %v1639 = vsel %vm1004, %v1634, 0
        %1641 = vmatprep.subr.bf16.mxu0 0
        %1642 = vmatpush1.bf16.xpose.msra.mxu0 %v1639
        %1643 = vmatprep.subr.bf16.mxu0 0
        %1644 = vmatpush1.bf16.xpose.msra.mxu0 0
        %1645 = vmatprep.subr.bf16.mxu0 0
        %1646 = vmatpush1.bf16.xpose.msra.mxu0 0
        %1647 = vmatprep.subr.bf16.mxu0 0
        %1648 = vmatpush1.bf16.xpose.msra.mxu0 0
        %1649 = vmatprep.subr.bf16.mxu0 0
        %1650 = vmatpush1.bf16.xpose.msra.mxu0 0
        %1651 = vmatprep.subr.bf16.mxu0 0
        %1652 = vmatpush1.bf16.xpose.msra.mxu0 0
        %1653 = vmatprep.subr.bf16.mxu0 0
        %1654 = vmatpush1.bf16.xpose.msra.mxu0 0
        %1655 = vmatprep.subr.bf16.mxu0 0
        %1656 = vmatpush1.bf16.xpose.msra.mxu0 0
        %1657 = vmatprep.subr.bf16.mxu0 0
        %1658 = vmatpush1.bf16.xpose.msra.mxu0 0
        %1659 = vmatprep.subr.bf16.mxu0 0
        %1660 = vmatpush1.bf16.xpose.msra.mxu0 0
        %1661 = vmatprep.subr.bf16.mxu0 0
        %1662 = vmatpush1.bf16.xpose.msra.mxu0 0
        %1663 = vmatprep.subr.bf16.mxu0 0
        %1664 = vmatpush1.bf16.xpose.msra.mxu0 0
        %1665 = vmatprep.subr.bf16.mxu0 0
        %1666 = vmatpush1.bf16.xpose.msra.mxu0 0
        %1667 = vmatprep.subr.bf16.mxu0 0
        %1668 = vmatpush1.bf16.xpose.msra.mxu0 0
        %1669 = vmatprep.subr.bf16.mxu0 0
        %1670 = vmatpush1.bf16.xpose.msra.mxu0 0
        %1671 = vmatprep.subr.bf16.mxu0 0
        %1672 = vmatpush1.bf16.xpose.msra.mxu0 0
        %1673 = vmatprep.mubr.bf16.mxu0 0
        %1674 = vmatmul.mubr.bf16.gmra.mrb[0].mxu0 %v1636
        %v1675 = vpop.f32.mrb[0].mxu0
        %v1676 = vadd.f32 %v1000, %v1675
        %v1677 = vpop.f32.mrb[0].mxu0
        %v1678 = vpop.f32.mrb[0].mxu0
        %v1679 = vpop.f32.mrb[0].mxu0
        %1680 = vdwg.mxu0
        %v1681 = vsel %vm1099, %v1628, -inf
        %1682 = vmax.xlane.f32.xlu0 %v1681
        %v1683 = vpop.xlane.xlu0 %1682
        %v1684 = vsel %vm1099, %v1676, -inf
        %1685 = vmax.xlane.f32.xlu0 %v1684
        %v1686 = vpop.xlane.xlu0 %1685
        %v1687 = vsub.f32 %v1628, %v1683
        %v1688 = vsub.f32 %v1676, %v1686
        %v1689 = vmul.f32 %v1687, 1.442695
        %v1690 = vpow.pop %v1689
        %v1691 = vmul.f32 %v1688, 1.442695
        %v1692 = vpow.pop %v1691
        %v1693 = vsel %vm1099, %v1690, 0.0
        %1694 = vadd.xlane.f32.xlu0 %v1693
        %v1695 = vpop.xlane.xlu0 %1694
        %v1696 = vsel %vm1099, %v1692, 0.0
        %1697 = vadd.xlane.f32.xlu0 %v1696
        %v1698 = vpop.xlane.xlu0 %1697
        %v1699 = vrcp.pop %v1695
        %v1700 = vrcp.pop %v1698
        %v1701 = vmul.f32 %v1690, %v1699
        %v1702 = vmul.f32 %v1692, %v1700
        %v1703 = vpack.c.bf16 %v1701, %v1701
        %v1704 = vpack.c.bf16 %v1702, %v1702
        %1705 = vrot.lane.b32.xlu0 %v1581, 64
        %v1706 = vpop.permute.xlu0 %1705
        %v1708 = vsel %vm1099, %v1703, 0
        %v1711 = vsel %vm1129, %v1706, 0
        %1713 = vmatprep.subr.bf16.mxu0 0
        %1714 = vmatpush1.bf16.msra.mxu0 %v1711
        %1715 = vmatprep.subr.bf16.mxu0 0
        %1716 = vmatpush1.bf16.msra.mxu0 0
        %1717 = vmatprep.subr.bf16.mxu0 0
        %1718 = vmatpush1.bf16.msra.mxu0 0
        %1719 = vmatprep.subr.bf16.mxu0 0
        %1720 = vmatpush1.bf16.msra.mxu0 0
        %1721 = vmatprep.subr.bf16.mxu0 0
        %1722 = vmatpush1.bf16.msra.mxu0 0
        %1723 = vmatprep.subr.bf16.mxu0 0
        %1724 = vmatpush1.bf16.msra.mxu0 0
        %1725 = vmatprep.subr.bf16.mxu0 0
        %1726 = vmatpush1.bf16.msra.mxu0 0
        %1727 = vmatprep.subr.bf16.mxu0 0
        %1728 = vmatpush1.bf16.msra.mxu0 0
        %1729 = vmatprep.subr.bf16.mxu0 0
        %1730 = vmatpush1.bf16.msra.mxu0 0
        %1731 = vmatprep.subr.bf16.mxu0 0
        %1732 = vmatpush1.bf16.msra.mxu0 0
        %1733 = vmatprep.subr.bf16.mxu0 0
        %1734 = vmatpush1.bf16.msra.mxu0 0
        %1735 = vmatprep.subr.bf16.mxu0 0
        %1736 = vmatpush1.bf16.msra.mxu0 0
        %1737 = vmatprep.subr.bf16.mxu0 0
        %1738 = vmatpush1.bf16.msra.mxu0 0
        %1739 = vmatprep.subr.bf16.mxu0 0
        %1740 = vmatpush1.bf16.msra.mxu0 0
        %1741 = vmatprep.subr.bf16.mxu0 0
        %1742 = vmatpush1.bf16.msra.mxu0 0
        %1743 = vmatprep.subr.bf16.mxu0 0
        %1744 = vmatpush1.bf16.msra.mxu0 0
        %1745 = vmatprep.mubr.bf16.mxu0 0
        %1746 = vmatmul.mubr.bf16.gmra.mrb[0].mxu0 %v1708
        %v1747 = vpop.f32.mrb[0].mxu0
        %v1748 = vadd.f32 0.0, %v1747
        %v1749 = vpop.f32.mrb[0].mxu0
        %v1750 = vpop.f32.mrb[0].mxu0
        %v1751 = vpop.f32.mrb[0].mxu0
        %1752 = vdwg.mxu0
        %1753 = vrot.lane.b32.xlu0 %v1584, 64
        %v1754 = vpop.permute.xlu0 %1753
        %v1756 = vsel %vm1099, %v1704, 0
        %v1759 = vsel %vm1129, %v1754, 0
        %1761 = vmatprep.subr.bf16.mxu0 0
        %1762 = vmatpush1.bf16.msra.mxu0 %v1759
        %1763 = vmatprep.subr.bf16.mxu0 0
        %1764 = vmatpush1.bf16.msra.mxu0 0
        %1765 = vmatprep.subr.bf16.mxu0 0
        %1766 = vmatpush1.bf16.msra.mxu0 0
        %1767 = vmatprep.subr.bf16.mxu0 0
        %1768 = vmatpush1.bf16.msra.mxu0 0
        %1769 = vmatprep.subr.bf16.mxu0 0
        %1770 = vmatpush1.bf16.msra.mxu0 0
        %1771 = vmatprep.subr.bf16.mxu0 0
        %1772 = vmatpush1.bf16.msra.mxu0 0
        %1773 = vmatprep.subr.bf16.mxu0 0
        %1774 = vmatpush1.bf16.msra.mxu0 0
        %1775 = vmatprep.subr.bf16.mxu0 0
        %1776 = vmatpush1.bf16.msra.mxu0 0
        %1777 = vmatprep.subr.bf16.mxu0 0
        %1778 = vmatpush1.bf16.msra.mxu0 0
        %1779 = vmatprep.subr.bf16.mxu0 0
        %1780 = vmatpush1.bf16.msra.mxu0 0
        %1781 = vmatprep.subr.bf16.mxu0 0
        %1782 = vmatpush1.bf16.msra.mxu0 0
        %1783 = vmatprep.subr.bf16.mxu0 0
        %1784 = vmatpush1.bf16.msra.mxu0 0
        %1785 = vmatprep.subr.bf16.mxu0 0
        %1786 = vmatpush1.bf16.msra.mxu0 0
        %1787 = vmatprep.subr.bf16.mxu0 0
        %1788 = vmatpush1.bf16.msra.mxu0 0
        %1789 = vmatprep.subr.bf16.mxu0 0
        %1790 = vmatpush1.bf16.msra.mxu0 0
        %1791 = vmatprep.subr.bf16.mxu0 0
        %1792 = vmatpush1.bf16.msra.mxu0 0
        %1793 = vmatprep.mubr.bf16.mxu0 0
        %1794 = vmatmul.mubr.bf16.gmra.mrb[0].mxu0 %v1756
        %v1795 = vpop.f32.mrb[0].mxu0
        %v1796 = vadd.f32 0.0, %v1795
        %v1797 = vpop.f32.mrb[0].mxu0
        %v1798 = vpop.f32.mrb[0].mxu0
        %v1799 = vpop.f32.mrb[0].mxu0
        %1800 = vdwg.mxu0
        %1802 = vrot.lane.b32.xlu0 %v1796, 16
        %v1803 = vpop.permute.xlu0 %1802
        %v1805 = vsel %vm1004, %v1748, %v1803
        %v1806 = vpack.c.bf16 %v1805, %v1805
        %s1807 = scalar_lea.vmem %s9, 16
        %v1808 = vld [vmem:[%s1807] sm:$0xf]
        %v1809 = vld [vmem:[%s1807 + $0x4] sm:$0xf]
        %v1810 = vld [vmem:[%s1807 + $0x8] sm:$0xf]
        %v1811 = vld [vmem:[%s1807 + $0xc] sm:$0xf]
        %s1812 = scalar_lea.vmem %s10, 1
        %v1813 = vld [vmem:[%s1812] sm:$0x1]
        %v1815 = vlaneseq
        %v1816 = vshrl.u32 %v1815, 7
        %v1817 = vsub.s32 0, %v1816
        %v1818 = vrot.slane %v1813, %v1817
        %v1824 = vunpack.c.l.b16 %v1808
        %v1825 = vunpack.c.l.b16 %v1809
        %v1826 = vunpack.c.l.b16 %v1810
        %v1827 = vunpack.c.l.b16 %v1811
        %v1828 = vpack.c.b16 %v1825, %v1824
        %v1829 = vpack.c.b16 %v1827, %v1826
        %v1833 = vsel %vm893, %v1806, 0
        %1835 = vmatprep.subr.bf16.mxu0 0
        %1836 = vmatpush1.bf16.msra.mxu0 %v1828
        %1837 = vmatprep.subr.bf16.mxu0 0
        %1838 = vmatpush1.bf16.msra.mxu0 %v1829
        %1839 = vmatprep.subr.bf16.mxu0 0
        %1840 = vmatpush1.bf16.msra.mxu0 0
        %1841 = vmatprep.subr.bf16.mxu0 0
        %1842 = vmatpush1.bf16.msra.mxu0 0
        %1843 = vmatprep.subr.bf16.mxu0 0
        %1844 = vmatpush1.bf16.msra.mxu0 0
        %1845 = vmatprep.subr.bf16.mxu0 0
        %1846 = vmatpush1.bf16.msra.mxu0 0
        %1847 = vmatprep.subr.bf16.mxu0 0
        %1848 = vmatpush1.bf16.msra.mxu0 0
        %1849 = vmatprep.subr.bf16.mxu0 0
        %1850 = vmatpush1.bf16.msra.mxu0 0
        %1851 = vmatprep.subr.bf16.mxu0 0
        %1852 = vmatpush1.bf16.msra.mxu0 0
        %1853 = vmatprep.subr.bf16.mxu0 0
        %1854 = vmatpush1.bf16.msra.mxu0 0
        %1855 = vmatprep.subr.bf16.mxu0 0
        %1856 = vmatpush1.bf16.msra.mxu0 0
        %1857 = vmatprep.subr.bf16.mxu0 0
        %1858 = vmatpush1.bf16.msra.mxu0 0
        %1859 = vmatprep.subr.bf16.mxu0 0
        %1860 = vmatpush1.bf16.msra.mxu0 0
        %1861 = vmatprep.subr.bf16.mxu0 0
        %1862 = vmatpush1.bf16.msra.mxu0 0
        %1863 = vmatprep.subr.bf16.mxu0 0
        %1864 = vmatpush1.bf16.msra.mxu0 0
        %1865 = vmatprep.subr.bf16.mxu0 0
        %1866 = vmatpush1.bf16.msra.mxu0 0
        %1867 = vmatprep.mubr.bf16.mxu0 0
        %1868 = vmatmul.mubr.bf16.gmra.mrb[0].mxu0 %v1833
        %v1869 = vpop.f32.mrb[0].mxu0
        %v1870 = vadd.f32 %v1818, %v1869
        %v1871 = vpop.f32.mrb[0].mxu0
        %v1872 = vpop.f32.mrb[0].mxu0
        %v1873 = vpop.f32.mrb[0].mxu0
        %1874 = vdwg.mxu0
        %v1875 = vadd.f32 %v1511, %v1870
        %s1876 = scalar_lea.vmem %s11, 1
        %v1877 = vld [vmem:[%s1876] sm:$0x1]
        %s1878 = scalar_lea.vmem %s12, 1
        %v1879 = vld [vmem:[%s1878] sm:$0x1]
        %v1880 = vsel %vm893, %v1875, 0.0
        %1881 = vadd.xlane.f32.xlu0 %v1880
        %v1882 = vpop.xlane.xlu0 %1881
        %v1883 = vmul.f32 %v1882, %v897
        %v1884 = vsub.f32 %v1875, %v1883
        %v1885 = vmul.f32 %v1884, %v1884
        %v1886 = vsel %vm893, %v1885, 0.0
        %1887 = vadd.xlane.f32.xlu0 %v1886
        %v1888 = vpop.xlane.xlu0 %1887
        %v1889 = vmul.f32 %v1888, %v897
        %v1890 = vadd.f32 %v1889, 1e-12
        %v1891 = vrsqrt.pop %v1890
        %v1892 = vmul.f32 %v1884, %v1891
        %v1894 = vlaneseq
        %v1895 = vshrl.u32 %v1894, 7
        %v1896 = vsub.s32 0, %v1895
        %v1897 = vrot.slane %v1877, %v1896
        %v1899 = vmul.f32 %v1892, %v1897
        %v1901 = vlaneseq
        %v1902 = vshrl.u32 %v1901, 7
        %v1903 = vsub.s32 0, %v1902
        %v1904 = vrot.slane %v1879, %v1903
        %v1906 = vadd.f32 %v1899, %v1904
        %v1907 = vpack.c.bf16 %v1906, %v1906
        %s1908 = scalar_lea.vmem %s13, 16
        %v1909 = vld [vmem:[%s1908] sm:$0xf]
        %v1910 = vld [vmem:[%s1908 + $0x4] sm:$0xf]
        %v1911 = vld [vmem:[%s1908 + $0x8] sm:$0xf]
        %v1912 = vld [vmem:[%s1908 + $0xc] sm:$0xf]
        %s1913 = scalar_lea.vmem %s14, 1
        %v1914 = vld [vmem:[%s1913] sm:$0x1]
        %v1916 = vlaneseq
        %v1917 = vshrl.u32 %v1916, 7
        %v1918 = vsub.s32 0, %v1917
        %v1919 = vrot.slane %v1914, %v1918
        %v1925 = vunpack.c.l.b16 %v1909
        %v1926 = vunpack.c.l.b16 %v1910
        %v1927 = vunpack.c.l.b16 %v1911
        %v1928 = vunpack.c.l.b16 %v1912
        %v1929 = vpack.c.b16 %v1926, %v1925
        %v1930 = vpack.c.b16 %v1928, %v1927
        %v1934 = vsel %vm893, %v1907, 0
        %1936 = vmatprep.subr.bf16.mxu0 0
        %1937 = vmatpush1.bf16.msra.mxu0 %v1929
        %1938 = vmatprep.subr.bf16.mxu0 0
        %1939 = vmatpush1.bf16.msra.mxu0 %v1930
        %1940 = vmatprep.subr.bf16.mxu0 0
        %1941 = vmatpush1.bf16.msra.mxu0 0
        %1942 = vmatprep.subr.bf16.mxu0 0
        %1943 = vmatpush1.bf16.msra.mxu0 0
        %1944 = vmatprep.subr.bf16.mxu0 0
        %1945 = vmatpush1.bf16.msra.mxu0 0
        %1946 = vmatprep.subr.bf16.mxu0 0
        %1947 = vmatpush1.bf16.msra.mxu0 0
        %1948 = vmatprep.subr.bf16.mxu0 0
        %1949 = vmatpush1.bf16.msra.mxu0 0
        %1950 = vmatprep.subr.bf16.mxu0 0
        %1951 = vmatpush1.bf16.msra.mxu0 0
        %1952 = vmatprep.subr.bf16.mxu0 0
        %1953 = vmatpush1.bf16.msra.mxu0 0
        %1954 = vmatprep.subr.bf16.mxu0 0
        %1955 = vmatpush1.bf16.msra.mxu0 0
        %1956 = vmatprep.subr.bf16.mxu0 0
        %1957 = vmatpush1.bf16.msra.mxu0 0
        %1958 = vmatprep.subr.bf16.mxu0 0
        %1959 = vmatpush1.bf16.msra.mxu0 0
        %1960 = vmatprep.subr.bf16.mxu0 0
        %1961 = vmatpush1.bf16.msra.mxu0 0
        %1962 = vmatprep.subr.bf16.mxu0 0
        %1963 = vmatpush1.bf16.msra.mxu0 0
        %1964 = vmatprep.subr.bf16.mxu0 0
        %1965 = vmatpush1.bf16.msra.mxu0 0
        %1966 = vmatprep.subr.bf16.mxu0 0
        %1967 = vmatpush1.bf16.msra.mxu0 0
        %1968 = vmatprep.mubr.bf16.mxu0 0
        %1969 = vmatmul.mubr.bf16.gmra.mrb[0].mxu0 %v1934
        %v1970 = vpop.f32.mrb[0].mxu0
        %v1971 = vadd.f32 %v1919, %v1970
        %v1972 = vpop.f32.mrb[0].mxu0
        %v1973 = vpop.f32.mrb[0].mxu0
        %v1974 = vpop.f32.mrb[0].mxu0
        %1975 = vdwg.mxu0
        %v1976 = vmul.f32 %v1971, %v1971
        %v1977 = vmul.f32 %v1971, %v1976
        %v1978 = vmul.f32 %v1977, 0.044715
        %v1979 = vadd.f32 %v1971, %v1978
        %v1980 = vmul.f32 %v1979, 0.7978846
        %v1981 = vtanh.pop %v1980
        %v1982 = vadd.f32 %v1981, 1.0
        %v1983 = vmul.f32 %v1982, 0.5
        %v1984 = vmul.f32 %v1971, %v1983
        %v1985 = vpack.c.bf16 %v1984, %v1984
        %s1986 = scalar_lea.vmem %s15, 32
        %v1987 = vld [vmem:[%s1986] sm:$0xf]
        %v1988 = vld [vmem:[%s1986 + $0x4] sm:$0xf]
        %v1989 = vld [vmem:[%s1986 + $0x8] sm:$0xf]
        %v1990 = vld [vmem:[%s1986 + $0xc] sm:$0xf]
        %v1991 = vld [vmem:[%s1986 + $0x10] sm:$0xf]
        %v1992 = vld [vmem:[%s1986 + $0x14] sm:$0xf]
        %v1993 = vld [vmem:[%s1986 + $0x18] sm:$0xf]
        %v1994 = vld [vmem:[%s1986 + $0x1c] sm:$0xf]
        %s1995 = scalar_lea.vmem %s16, 1
        %v1996 = vld [vmem:[%s1995] sm:$0x1]
        %v1998 = vlaneseq
        %v1999 = vshrl.u32 %v1998, 7
        %v2000 = vsub.s32 0, %v1999
        %v2001 = vrot.slane %v1996, %v2000
        %v2011 = vunpack.c.l.b16 %v1987
        %v2012 = vunpack.c.l.b16 %v1988
        %v2013 = vunpack.c.l.b16 %v1989
        %v2014 = vunpack.c.l.b16 %v1990
        %v2015 = vunpack.c.l.b16 %v1991
        %v2016 = vunpack.c.l.b16 %v1992
        %v2017 = vunpack.c.l.b16 %v1993
        %v2018 = vunpack.c.l.b16 %v1994
        %v2019 = vpack.c.b16 %v2012, %v2011
        %v2020 = vpack.c.b16 %v2014, %v2013
        %v2021 = vpack.c.b16 %v2016, %v2015
        %v2022 = vpack.c.b16 %v2018, %v2017
        %v2028 = vsel %vm839, %v1985, 0
        %2030 = vmatprep.subr.bf16.mxu0 0
        %2031 = vmatpush1.bf16.msra.mxu0 %v2019
        %2032 = vmatprep.subr.bf16.mxu0 0
        %2033 = vmatpush1.bf16.msra.mxu0 %v2020
        %2034 = vmatprep.subr.bf16.mxu0 0
        %2035 = vmatpush1.bf16.msra.mxu0 %v2021
        %2036 = vmatprep.subr.bf16.mxu0 0
        %2037 = vmatpush1.bf16.msra.mxu0 %v2022
        %2038 = vmatprep.subr.bf16.mxu0 0
        %2039 = vmatpush1.bf16.msra.mxu0 0
        %2040 = vmatprep.subr.bf16.mxu0 0
        %2041 = vmatpush1.bf16.msra.mxu0 0
        %2042 = vmatprep.subr.bf16.mxu0 0
        %2043 = vmatpush1.bf16.msra.mxu0 0
        %2044 = vmatprep.subr.bf16.mxu0 0
        %2045 = vmatpush1.bf16.msra.mxu0 0
        %2046 = vmatprep.subr.bf16.mxu0 0
        %2047 = vmatpush1.bf16.msra.mxu0 0
        %2048 = vmatprep.subr.bf16.mxu0 0
        %2049 = vmatpush1.bf16.msra.mxu0 0
        %2050 = vmatprep.subr.bf16.mxu0 0
        %2051 = vmatpush1.bf16.msra.mxu0 0
        %2052 = vmatprep.subr.bf16.mxu0 0
        %2053 = vmatpush1.bf16.msra.mxu0 0
        %2054 = vmatprep.subr.bf16.mxu0 0
        %2055 = vmatpush1.bf16.msra.mxu0 0
        %2056 = vmatprep.subr.bf16.mxu0 0
        %2057 = vmatpush1.bf16.msra.mxu0 0
        %2058 = vmatprep.subr.bf16.mxu0 0
        %2059 = vmatpush1.bf16.msra.mxu0 0
        %2060 = vmatprep.subr.bf16.mxu0 0
        %2061 = vmatpush1.bf16.msra.mxu0 0
        %2062 = vmatprep.mubr.bf16.mxu0 0
        %2063 = vmatmul.mubr.bf16.gmra.mrb[0].mxu0 %v2028
        %v2064 = vpop.f32.mrb[0].mxu0
        %v2065 = vadd.f32 %v2001, %v2064
        %v2066 = vpop.f32.mrb[0].mxu0
        %v2067 = vpop.f32.mrb[0].mxu0
        %v2068 = vpop.f32.mrb[0].mxu0
        %2069 = vdwg.mxu0
        %v2070 = vadd.f32 %v1906, %v2065
        %s2071 = scalar_lea.vmem %s17, 1
        %v2072 = vld [vmem:[%s2071] sm:$0x1]
        %s2073 = scalar_lea.vmem %s18, 1
        %v2074 = vld [vmem:[%s2073] sm:$0x1]
        %v2075 = vsel %vm893, %v2070, 0.0
        %2076 = vadd.xlane.f32.xlu0 %v2075
        %v2077 = vpop.xlane.xlu0 %2076
        %v2078 = vmul.f32 %v2077, %v897
        %v2079 = vsub.f32 %v2070, %v2078
        %v2080 = vmul.f32 %v2079, %v2079
        %v2081 = vsel %vm893, %v2080, 0.0
        %2082 = vadd.xlane.f32.xlu0 %v2081
        %v2083 = vpop.xlane.xlu0 %2082
        %v2084 = vmul.f32 %v2083, %v897
        %v2085 = vadd.f32 %v2084, 1e-12
        %v2086 = vrsqrt.pop %v2085
        %v2087 = vmul.f32 %v2079, %v2086
        %v2089 = vlaneseq
        %v2090 = vshrl.u32 %v2089, 7
        %v2091 = vsub.s32 0, %v2090
        %v2092 = vrot.slane %v2072, %v2091
        %v2094 = vmul.f32 %v2087, %v2092
        %v2096 = vlaneseq
        %v2097 = vshrl.u32 %v2096, 7
        %v2098 = vsub.s32 0, %v2097
        %v2099 = vrot.slane %v2074, %v2098
        %v2101 = vadd.f32 %v2094, %v2099
        %v2102 = vpack.c.bf16 %v2101, %v2101
        %v2103 = vld [vmem:[%s19] sm:$0xf]
        %v2104 = vld [vmem:[%s19 + $0x4] sm:$0xf]
        %v2105 = vld [vmem:[%s19 + $0x8] sm:$0xf]
        %v2106 = vld [vmem:[%s19 + $0xc] sm:$0xf]
        %v2107 = vld [vmem:[%s20] sm:$0x1]
        %v2112 = vunpack.c.l.b16 %v2103
        %v2113 = vunpack.c.l.b16 %v2104
        %v2114 = vunpack.c.l.b16 %v2105
        %v2115 = vunpack.c.l.b16 %v2106
        %v2116 = vpack.c.b16 %v2113, %v2112
        %v2117 = vpack.c.b16 %v2115, %v2114
        %v2121 = vsel %vm893, %v2102, 0
        %2123 = vmatprep.subr.bf16.mxu0 0
        %2124 = vmatpush1.bf16.msra.mxu0 %v2116
        %2125 = vmatprep.subr.bf16.mxu0 0
        %2126 = vmatpush1.bf16.msra.mxu0 %v2117
        %2127 = vmatprep.subr.bf16.mxu0 0
        %2128 = vmatpush1.bf16.msra.mxu0 0
        %2129 = vmatprep.subr.bf16.mxu0 0
        %2130 = vmatpush1.bf16.msra.mxu0 0
        %2131 = vmatprep.subr.bf16.mxu0 0
        %2132 = vmatpush1.bf16.msra.mxu0 0
        %2133 = vmatprep.subr.bf16.mxu0 0
        %2134 = vmatpush1.bf16.msra.mxu0 0
        %2135 = vmatprep.subr.bf16.mxu0 0
        %2136 = vmatpush1.bf16.msra.mxu0 0
        %2137 = vmatprep.subr.bf16.mxu0 0
        %2138 = vmatpush1.bf16.msra.mxu0 0
        %2139 = vmatprep.subr.bf16.mxu0 0
        %2140 = vmatpush1.bf16.msra.mxu0 0
        %2141 = vmatprep.subr.bf16.mxu0 0
        %2142 = vmatpush1.bf16.msra.mxu0 0
        %2143 = vmatprep.subr.bf16.mxu0 0
        %2144 = vmatpush1.bf16.msra.mxu0 0
        %2145 = vmatprep.subr.bf16.mxu0 0
        %2146 = vmatpush1.bf16.msra.mxu0 0
        %2147 = vmatprep.subr.bf16.mxu0 0
        %2148 = vmatpush1.bf16.msra.mxu0 0
        %2149 = vmatprep.subr.bf16.mxu0 0
        %2150 = vmatpush1.bf16.msra.mxu0 0
        %2151 = vmatprep.subr.bf16.mxu0 0
        %2152 = vmatpush1.bf16.msra.mxu0 0
        %2153 = vmatprep.subr.bf16.mxu0 0
        %2154 = vmatpush1.bf16.msra.mxu0 0
        %2155 = vmatprep.mubr.bf16.mxu0 0
        %2156 = vmatmul.mubr.bf16.gmra.mrb[0].mxu0 %v2121
        %v2157 = vpop.f32.mrb[0].mxu0
        %v2158 = vadd.f32 %v2107, %v2157
        %v2159 = vpop.f32.mrb[0].mxu0
        %v2160 = vpop.f32.mrb[0].mxu0
        %v2161 = vpop.f32.mrb[0].mxu0
        %2162 = vdwg.mxu0
        %v2163 = vtanh.pop %v2158
        %v2164 = vpack.c.bf16 %v2163, %v2163
        %v2165 = vld [vmem:[%s21] sm:$0xf]
        %v2166 = vld [vmem:[%s21 + $0x4] sm:$0xf]
        %v2167 = vld [vmem:[%s21 + $0x8] sm:$0xf]
        %v2168 = vld [vmem:[%s21 + $0xc] sm:$0xf]
        %v2169 = vld [vmem:[%s22] sm:$0x1]
        %v2174 = vunpack.c.l.b16 %v2165
        %v2175 = vunpack.c.l.b16 %v2166
        %v2176 = vunpack.c.l.b16 %v2167
        %v2177 = vunpack.c.l.b16 %v2168
        %v2178 = vpack.c.b16 %v2175, %v2174
        %v2179 = vpack.c.b16 %v2177, %v2176
        %v2183 = vsel %vm893, %v2164, 0
        %2185 = vmatprep.subr.bf16.mxu0 0
        %2186 = vmatpush1.bf16.msra.mxu0 %v2178
        %2187 = vmatprep.subr.bf16.mxu0 0
        %2188 = vmatpush1.bf16.msra.mxu0 %v2179
        %2189 = vmatprep.subr.bf16.mxu0 0
        %2190 = vmatpush1.bf16.msra.mxu0 0
        %2191 = vmatprep.subr.bf16.mxu0 0
        %2192 = vmatpush1.bf16.msra.mxu0 0
        %2193 = vmatprep.subr.bf16.mxu0 0
        %2194 = vmatpush1.bf16.msra.mxu0 0
        %2195 = vmatprep.subr.bf16.mxu0 0
        %2196 = vmatpush1.bf16.msra.mxu0 0
        %2197 = vmatprep.subr.bf16.mxu0 0
        %2198 = vmatpush1.bf16.msra.mxu0 0
        %2199 = vmatprep.subr.bf16.mxu0 0
        %2200 = vmatpush1.bf16.msra.mxu0 0
        %2201 = vmatprep.subr.bf16.mxu0 0
        %2202 = vmatpush1.bf16.msra.mxu0 0
        %2203 = vmatprep.subr.bf16.mxu0 0
        %2204 = vmatpush1.bf16.msra.mxu0 0
        %2205 = vmatprep.subr.bf16.mxu0 0
        %2206 = vmatpush1.bf16.msra.mxu0 0
        %2207 = vmatprep.subr.bf16.mxu0 0
        %2208 = vmatpush1.bf16.msra.mxu0 0
        %2209 = vmatprep.subr.bf16.mxu0 0
        %2210 = vmatpush1.bf16.msra.mxu0 0
        %2211 = vmatprep.subr.bf16.mxu0 0
        %2212 = vmatpush1.bf16.msra.mxu0 0
        %2213 = vmatprep.subr.bf16.mxu0 0
        %2214 = vmatpush1.bf16.msra.mxu0 0
        %2215 = vmatprep.subr.bf16.mxu0 0
        %2216 = vmatpush1.bf16.msra.mxu0 0
        %2217 = vmatprep.mubr.bf16.mxu0 0
        %2218 = vmatmul.mubr.bf16.gmra.mrb[0].mxu0 %v2183
        %v2219 = vpop.f32.mrb[0].mxu0
        %v2220 = vadd.f32 %v2169, %v2219
        %v2221 = vpop.f32.mrb[0].mxu0
        %v2222 = vpop.f32.mrb[0].mxu0
        %v2223 = vpop.f32.mrb[0].mxu0
        %2224 = vdwg.mxu0
        %v2225 = vxor.u32 %v2220, 2147483648
        %v2226 = vmul.f32 %v2225, 1.442695
        %v2227 = vpow.pop %v2226
        %v2228 = vadd.f32 %v2227, 1.0
        %v2229 = vrcp.pop %v2228
        %v2230 = vmul.f32 1.0, %v2229
        %vm2231 = vcmask 8192
        %2232 = vst.msk [vmem:[%s777] sm:$0x1] %vm2231, %v2230
        %v2233 = vld [vmem:[%s792] sm:$0x1]
        %v2234 = vadd.f32 %v2230, 1e-10
        %v2235 = vlog2.pop %v2234
        %v2236 = vmul.f32 %v2235, 0.6931472
        %v2237 = vmul.f32 %v2236, %v2233
        %v2238 = vsub.f32 1.0, %v2230
        %v2239 = vadd.f32 %v2238, 1e-10
        %v2240 = vlog2.pop %v2239
        %v2241 = vmul.f32 %v2240, 0.6931472
        %v2242 = vsub.f32 1.0, %v2233
        %v2243 = vmul.f32 %v2241, %v2242
        %v2244 = vadd.f32 %v2237, %v2243
        %vm2245 = vcmask 0
        %2246 = vst.msk [vmem:[%s795] sm:$0x1] %vm2245, %v2244
        %s2247 = sand.u32 %s567, 1
        %s2248 = scalar_lea.sflag [#allocation3], %s2247
        %s2249 = sand.u32 %s567, 1
        %s2250 = scalar_lea.vmem [#allocation2], %s2249
        %p2251 = scmp.lt.s32.totalorder %s40, 1
        %s2252 = scalar_select %p2251, %s40, 1
        %s2253 = scalar_lea.vmem %s25, %s2252
        // Predicated region
        $region117: #{_lambda_.1} parent=115 // pred_check
          %p2254 = pneg %p577
        $region118: #{_lambda_.1} parent=115 // pred_check_branch
          %2256 = sbr.rel (%p2254) target = $region120
        $region119: #{_lambda_.1} parent=115 // pred_region
          %s2258 = ssub.s32 16, 16
          %2259 = vsyncadd %s2248, %s2258
          %s2260 = smul.addr %s40, 16
          %s2261 = scalar_lea.hbm %s24, %s2260
          %s2263 = sshll.u32 %s2250, 4
          %s2264 = int_to_ptr.vmem [resolvable:$true] %s2263
          %2266 = dma.vmem_to_hbm [thread:$0]  %s2264, 16, %s2261, %s2248
        $region120: #{_lambda_.1} parent=115 // pred_fallthru
          _
        // Predicated region
        $region121: #{_lambda_.1} parent=115 // pred_check
          %p2267 = pneg %p603
        $region122: #{_lambda_.1} parent=115 // pred_check_branch
          %2269 = sbr.rel (%p2267) target = $region124
        $region123: #{_lambda_.1} parent=115 // pred_region
          _
        $region124: #{_lambda_.1} parent=115 // pred_fallthru
          _
      $region116: #{_lambda_.1} parent=5 // pred_fallthru
        _
      %p2270 = scmp.le.s32.totalorder 2, %s35
      // Predicated region
      $region125: #{_lambda_.1} parent=5 // pred_check
        %p2271 = pneg %p2270
      $region126: #{_lambda_.1} parent=5 // pred_check_branch
        %2273 = sbr.rel (%p2271) target = $region128
      $region127: #{_lambda_.1} parent=5 // pred_region
        %s2274 = ssub.s32 %s35, 2
        // Predicated region
        $region129: #{_lambda_.1} parent=127 // pred_check
          %p2275 = pneg %p583
        $region130: #{_lambda_.1} parent=127 // pred_check_branch
          %2277 = sbr.rel (%p2275) target = $region132
        $region131: #{_lambda_.1} parent=127 // pred_region
          %s2278 = sand.u32 %s568, 1
          %s2279 = scalar_lea.sflag [#allocation3], %s2278
          %s2280 = sand.u32 %s568, 1
          %s2281 = scalar_lea.vmem [#allocation2], %s2280
          %2282 = dma.done %s2279, 16
        $region132: #{_lambda_.1} parent=127 // pred_fallthru
          _
        // Predicated region
        $region133: #{_lambda_.1} parent=127 // pred_check
          %p2283 = pneg %p609
        $region134: #{_lambda_.1} parent=127 // pred_check_branch
          %2285 = sbr.rel (%p2283) target = $region136
        $region135: #{_lambda_.1} parent=127 // pred_region
          %p2286 = scmp.lt.s32.totalorder %s41, 1
          %s2287 = scalar_select %p2286, %s41, 1
          %s2288 = scalar_lea.vmem %s25, %s2287
        $region136: #{_lambda_.1} parent=127 // pred_fallthru
          _
      $region128: #{_lambda_.1} parent=5 // pred_fallthru
        _
    $region6: #{_lambda_.1} parent=1 // loop_footer
      %s39 = sadd.s32 1, %s35
    $region7: #{_lambda_.1} parent=1 // loop_footer_branch
      %34 = sbr.rel target = $region3
    $region8: #{_lambda_.1} parent=1 // loop_exit
      _
    %2289 = vsyncpa [#allocation3], 1
    %s2290 = scalar_lea.sflag [#allocation3], 1
    %2291 = vsyncpa %s2290, 1

</llo_original>
